<compile_context>
chip_gen: v6e
topology: v6e:2x2x1
jax: 0.10.0
libtpu: 0.0.40
codegen_flags: <defaults>
</compile_context>

<pallas_src>
import functools
import math

import jax
import jax.numpy as jnp
from jax.experimental import pallas as pl
from jax.experimental.pallas import tpu as pltpu

PATCH = 16
_ROW_TILE = 512                       # 512-row tiles ~85% HBM roofline on v6e
_VMEM_LIMIT = 48 * 1024 * 1024        # <= ~48 MiB: fits v7x (64 MiB/TC), raises v5e/v6e default


def _compiler_params(n_axes=1):
    return pltpu.CompilerParams(
        dimension_semantics=("parallel",) * n_axes,
        vmem_limit_bytes=_VMEM_LIMIT)


def _pick_row_tile(m, target=_ROW_TILE):
    """Row tile <= target, multiple of 8 (or the exact extent).  Where the row
    count allows it, force >=2 grid steps so both v7x TensorCores get work and
    the DMA pipeline has an iteration to overlap with."""
    if m > target:
        return target
    if m >= 16 and m % 8 == 0:
        return max(8, ((m // 2) // 8) * 8)
    # Small / odd row counts (e.g. B*(1+gh*gw) with a cls token): a single exact
    # full-extent block keeps the (8,128) rule satisfied without padded rows.
    return m


# ---------------------------------------------------------------------------
# Elementwise helpers (usable inside kernels)
# ---------------------------------------------------------------------------
def _erf(x):
    # Abramowitz & Stegun 7.1.26 rational approximation, |err| < 1.5e-7 of exact
    # erf (matches torch.nn.GELU()).  exp() and the approx reciprocal run on EUP.
    # TODO(synk): switch to jax.lax.erf if/when Mosaic guarantees an erf lowering.
    a1, a2, a3, a4, a5 = 0.254829592, -0.284496736, 1.421413741, -1.453152027, 1.061405429
    p = 0.3275911
    ax = jnp.abs(x)
    t = pl.reciprocal(1.0 + p * ax, approx=True)
    poly = ((((a5 * t + a4) * t + a3) * t + a2) * t + a1) * t
    y = 1.0 - poly * jnp.exp(-ax * ax)
    return jnp.where(x >= 0, y, -y)


def _gelu_exact(x):
    return 0.5 * x * (1.0 + _erf(x * (1.0 / math.sqrt(2.0))))


def _ln_rows(x, g, b, eps):
    # x: (TM, D) f32, g/b: (1, D) f32 -> f32
    mean = jnp.mean(x, axis=-1, keepdims=True)
    xc = x - mean
    var = jnp.mean(xc * xc, axis=-1, keepdims=True)
    return xc * jax.lax.rsqrt(var + eps) * g + b


# ---------------------------------------------------------------------------
# Pallas kernels
# ---------------------------------------------------------------------------
def _linear_kernel(x_ref, w_ref, b_ref, o_ref, *, activation):
    x = x_ref[...].astype(jnp.bfloat16)
    w = w_ref[...].astype(jnp.bfloat16)
    y = jnp.dot(x, w, preferred_element_type=jnp.float32) + b_ref[...]
    if activation == "gelu":
        y = _gelu_exact(y)
    o_ref[...] = y.astype(o_ref.dtype)


def linear(x, w, b, activation=None, out_dtype=jnp.float32):
    """y = act(x @ w + b).  x: (M, K), w: (K, N) (bf16 ok), b: (N,).  Row-tiled."""
    M, K = x.shape
    N = w.shape[1]
    tm = _pick_row_tile(M)
    return pl.pallas_call(
        functools.partial(_linear_kernel, activation=activation),
        out_shape=jax.ShapeDtypeStruct((M, N), out_dtype),
        grid=(pl.cdiv(M, tm),),
        in_specs=[
            pl.BlockSpec((tm, K), lambda i: (i, 0)),
            pl.BlockSpec((K, N), lambda i: (0, 0)),   # weight stays VMEM-resident
            pl.BlockSpec((1, N), lambda i: (0, 0)),
        ],
        out_specs=pl.BlockSpec((tm, N), lambda i: (i, 0)),
        compiler_params=_compiler_params(1),
    )(x, w, b.reshape(1, N))


def _layernorm_kernel(x_ref, g_ref, b_ref, o_ref, *, eps):
    x = x_ref[...].astype(jnp.float32)
    o_ref[...] = _ln_rows(x, g_ref[...], b_ref[...], eps).astype(o_ref.dtype)


def layernorm(x, g, b, eps=1e-6):
    """Row-wise LayerNorm over the last dim.  x: (M, D).  Row-tiled."""
    M, D = x.shape
    tm = _pick_row_tile(M)
    return pl.pallas_call(
        functools.partial(_layernorm_kernel, eps=eps),
        out_shape=jax.ShapeDtypeStruct((M, D), jnp.float32),
        grid=(pl.cdiv(M, tm),),
        in_specs=[
            pl.BlockSpec((tm, D), lambda i: (i, 0)),
            pl.BlockSpec((1, D), lambda i: (0, 0)),
            pl.BlockSpec((1, D), lambda i: (0, 0)),
        ],
        out_specs=pl.BlockSpec((tm, D), lambda i: (i, 0)),
        compiler_params=_compiler_params(1),
    )(x, g.reshape(1, D), b.reshape(1, D))


def _ln_linear_kernel(x_ref, g_ref, b_ref, w_ref, bias_ref, o_ref, *, eps):
    x = x_ref[...].astype(jnp.float32)
    h = _ln_rows(x, g_ref[...], b_ref[...], eps)
    y = jnp.dot(h.astype(jnp.bfloat16), w_ref[...].astype(jnp.bfloat16),
                preferred_element_type=jnp.float32) + bias_ref[...]
    o_ref[...] = y.astype(o_ref.dtype)


def ln_linear(x, g, b, w, bias, eps=1e-6, out_dtype=jnp.float32):
    """y = LayerNorm(x) @ w + bias, fused.  x: (M, D), w: (D, N)."""
    M, D = x.shape
    N = w.shape[1]
    tm = _pick_row_tile(M)
    return pl.pallas_call(
        functools.partial(_ln_linear_kernel, eps=eps),
        out_shape=jax.ShapeDtypeStruct((M, N), out_dtype),
        grid=(pl.cdiv(M, tm),),
        in_specs=[
            pl.BlockSpec((tm, D), lambda i: (i, 0)),
            pl.BlockSpec((1, D), lambda i: (0, 0)),
            pl.BlockSpec((1, D), lambda i: (0, 0)),
            pl.BlockSpec((D, N), lambda i: (0, 0)),
            pl.BlockSpec((1, N), lambda i: (0, 0)),
        ],
        out_specs=pl.BlockSpec((tm, N), lambda i: (i, 0)),
        compiler_params=_compiler_params(1),
    )(x, g.reshape(1, D), b.reshape(1, D), w, bias.reshape(1, N))


def _mlp_kernel(x_ref, g_ref, b_ref, w1_ref, b1_ref, w2_ref, b2_ref, o_ref, *, eps):
    x = x_ref[...].astype(jnp.float32)
    h = _ln_rows(x, g_ref[...], b_ref[...], eps)
    h1 = jnp.dot(h.astype(jnp.bfloat16), w1_ref[...].astype(jnp.bfloat16),
                 preferred_element_type=jnp.float32) + b1_ref[...]
    h1 = _gelu_exact(h1)                                   # f32 elementwise (v5e-safe)
    y = jnp.dot(h1.astype(jnp.bfloat16), w2_ref[...].astype(jnp.bfloat16),
                preferred_element_type=jnp.float32) + b2_ref[...]
    o_ref[...] = (x + y).astype(o_ref.dtype)


def mlp_block(x, g, b, w1, b1, w2, b2, eps=1e-6):
    """x + fc2(gelu(fc1(LayerNorm(x)))), fully fused.  x: (M, D)."""
    M, D = x.shape
    Hd = w1.shape[1]
    tm = _pick_row_tile(M)
    return pl.pallas_call(
        functools.partial(_mlp_kernel, eps=eps),
        out_shape=jax.ShapeDtypeStruct((M, D), jnp.float32),
        grid=(pl.cdiv(M, tm),),
        in_specs=[
            pl.BlockSpec((tm, D), lambda i: (i, 0)),
            pl.BlockSpec((1, D), lambda i: (0, 0)),
            pl.BlockSpec((1, D), lambda i: (0, 0)),
            pl.BlockSpec((D, Hd), lambda i: (0, 0)),
            pl.BlockSpec((1, Hd), lambda i: (0, 0)),
            pl.BlockSpec((Hd, D), lambda i: (0, 0)),
            pl.BlockSpec((1, D), lambda i: (0, 0)),
        ],
        out_specs=pl.BlockSpec((tm, D), lambda i: (i, 0)),
        compiler_params=_compiler_params(1),
    )(x, g.reshape(1, D), b.reshape(1, D),
      w1, b1.reshape(1, Hd), w2, b2.reshape(1, D))


def _attn_block_kernel(qkv_ref, x_ref, pw_ref, pb_ref, o_ref, attn_ref,
                       *, num_heads, scale):
    qkv = qkv_ref[0]                        # (N, 3D) bf16
    x = x_ref[0].astype(jnp.float32)        # (N, D)  residual (f32)
    D = qkv.shape[-1] // 3
    hd = D // num_heads
    q_all = qkv[:, :D]                      # lane-aligned base slices (D % 128 == 0)
    k_all = qkv[:, D:2 * D]
    v_all = qkv[:, 2 * D:]
    # TODO(synk): head_dim < 128 makes the per-head sub-slices/stores masked;
    # padding head_dim to 128 (or a head-batched dot_general) would remove them.
    for h in range(num_heads):              # static loop; one head live at a time
        lo, hi = h * hd, (h + 1) * hd
        q = q_all[:, lo:hi]
        k = k_all[:, lo:hi]
        v = v_all[:, lo:hi]
        s = jax.lax.dot_general(q, k, (((1,), (1,)), ((), ())),
                                preferred_element_type=jnp.float32) * scale
        s = s - jnp.max(s, axis=-1, keepdims=True)   # stable softmax, f32 stats
        p = jnp.exp(s)
        p = p * pl.reciprocal(jnp.sum(p, axis=-1, keepdims=True), approx=True)
        # Write this head's output straight into the VMEM slab: no concat, no
        # O(num_heads) live f32 vregs -> no spill traffic.
        attn_ref[:, lo:hi] = jnp.dot(p.astype(jnp.bfloat16), v,
                                     preferred_element_type=jnp.float32
                                     ).astype(attn_ref.dtype)
    y = jnp.dot(attn_ref[...], pw_ref[...].astype(jnp.bfloat16),
                preferred_element_type=jnp.float32) + pb_ref[...]
    o_ref[0, :, :] = (x + y).astype(o_ref.dtype)


def attention_block(qkv, x, proj_w, proj_b, num_heads):
    """Fused MHSA + output projection + residual.

    qkv: (B, N, 3D) bf16, laid out [q(all heads) | k | v];  x: (B, N, D) residual.
    One grid step per batch, all heads processed inside the kernel via a bf16
    VMEM scratch slab (lane-dense (N, D) output of the head loop).
    """
    B, N, D = x.shape
    scale = 1.0 / math.sqrt(D // num_heads)
    return pl.pallas_call(
        functools.partial(_attn_block_kernel, num_heads=num_heads, scale=scale),
        out_shape=jax.ShapeDtypeStruct((B, N, D), jnp.float32),
        grid=(B,),
        in_specs=[
            pl.BlockSpec((1, N, 3 * D), lambda b: (b, 0, 0)),
            pl.BlockSpec((1, N, D), lambda b: (b, 0, 0)),
            pl.BlockSpec((D, D), lambda b: (0, 0)),
            pl.BlockSpec((1, D), lambda b: (0, 0)),
        ],
        out_specs=pl.BlockSpec((1, N, D), lambda b: (b, 0, 0)),
        scratch_shapes=[pltpu.VMEM((N, D), jnp.bfloat16)],
        compiler_params=_compiler_params(1),
    )(qkv, x, proj_w, proj_b.reshape(1, D))


# ---------------------------------------------------------------------------
# Model glue (plain JAX)
# ---------------------------------------------------------------------------
def interpolate_pos_embed(pos_embed, dim, h, w, patch_size=PATCH):
    """Mirror of ViTFeatureExtractor.interpolate_pos_embed (DINO axis ordering)."""
    N = pos_embed.shape[1] - 1
    gs = int(math.sqrt(N))
    w0 = w // patch_size
    h0 = h // patch_size
    class_pe = pos_embed[:, :1]
    patch_pe = pos_embed[:, 1:].reshape(1, gs, gs, dim)
    if (w0, h0) != (gs, gs):
        # TODO(synk): torch uses bicubic (a=-0.75); jax.image.resize 'cubic' uses a
        # slightly different kernel.  Identity when grids match (as here).
        patch_pe = jax.image.resize(patch_pe, (1, w0, h0, dim), method="cubic")
    patch_pe = patch_pe.reshape(1, w0 * h0, dim)
    return jnp.concatenate([class_pe, patch_pe], axis=1)


def transformer_block(x, blk, num_heads):
    B, N, D = x.shape
    x2d = x.reshape(B * N, D)
    # (a) LN1 + qkv projection (fused), emitted directly in bf16: the attention
    #     kernel casts q/k/v to bf16 anyway, so this is numerically identical and
    #     halves HBM traffic of the largest intermediate.
    qkv = ln_linear(x2d, blk["ln1_g"], blk["ln1_b"], blk["qkv_w"], blk["qkv_b"],
                    out_dtype=jnp.bfloat16)
    qkv = qkv.reshape(B, N, 3 * D)
    # (b) attention (all heads) + out-proj + residual (fused)
    x = attention_block(qkv, x, blk["proj_w"], blk["proj_b"], num_heads)
    # (c) LN2 + fc1 + GELU + fc2 + residual (fused)
    x2d = mlp_block(x.reshape(B * N, D), blk["ln2_g"], blk["ln2_b"],
                    blk["fc1_w"], blk["fc1_b"], blk["fc2_w"], blk["fc2_b"])
    return x2d.reshape(B, N, D)


def vit_feature_extractor(x, params, num_heads):
    """Forward pass matching ViTFeatureExtractor.forward (eval mode, dropout = identity)."""
    B, C, H, W = x.shape
    gh, gw = H // PATCH, W // PATCH
    dim = params["patch_w"].shape[1]

    # patch_embed: Conv2d(C, dim, 16, stride 16) == unfold + matmul.
    # Unfold buffer kept in bf16 to halve the materialized copy; output stays f32
    # because it seeds the residual stream / LayerNorm statistics.
    # TODO(synk): the unfold (strided transpose) could be folded into the kernel's
    # BlockSpec DMA to avoid this extra image-sized HBM pass entirely.
    xb = x.astype(jnp.bfloat16)
    patches = xb.reshape(B, C, gh, PATCH, gw, PATCH).transpose(0, 2, 4, 1, 3, 5)
    patches = patches.reshape(B * gh * gw, C * PATCH * PATCH)
    tok = linear(patches, params["patch_w"], params["patch_b"]).reshape(B, gh * gw, dim)

    # prepend cls token, add (interpolated) positional embedding
    cls = jnp.broadcast_to(params["cls_token"], (B, 1, dim)).astype(jnp.float32)
    tok = jnp.concatenate([cls, tok], axis=1)                      # (B, 1+N, dim)
    tok = tok + interpolate_pos_embed(params["pos_embed"], dim, H, W)
    # pos_drop: dropout -> identity at inference

    for blk in params["blocks"]:
        tok = transformer_block(tok, blk, num_heads)

    Ntok = tok.shape[1]
    tok = layernorm(tok.reshape(B * Ntok, dim),
                    params["norm_g"], params["norm_b"]).reshape(B, Ntok, dim)

    # exact reproduction of `x[:, 1:].reshape(B, -1, h//16, w//16)` (row-major reshape)
    out = tok[:, 1:].reshape(B, -1, gh, gw)
    return out


# ---------------------------------------------------------------------------
# Deterministic synthetic parameters (shapes mirror DINO ViT-S/16, scaled down)
# ---------------------------------------------------------------------------
def init_params(key, *, dim, depth, mlp_ratio=4, in_chans=3, pos_grid=4):
    std = 0.02
    ks = jax.random.split(key, 3 + depth)

    def nrm(k, shape):
        return std * jax.random.normal(k, shape, jnp.float32)

    params = {
        "patch_w": nrm(ks[0], (in_chans * PATCH * PATCH, dim)),
        "patch_b": jnp.zeros((dim,), jnp.float32),
        "cls_token": nrm(ks[1], (1, 1, dim)),
        "pos_embed": nrm(ks[2], (1, 1 + pos_grid * pos_grid, dim)),
        "norm_g": jnp.ones((dim,), jnp.float32),
        "norm_b": jnp.zeros((dim,), jnp.float32),
        "blocks": [],
    }
    hidden = mlp_ratio * dim
    for i in range(depth):
        bks = jax.random.split(ks[3 + i], 4)
        params["blocks"].append({
            "ln1_g": jnp.ones((dim,), jnp.float32),
            "ln1_b": jnp.zeros((dim,), jnp.float32),
            "qkv_w": nrm(bks[0], (dim, 3 * dim)),
            "qkv_b": jnp.zeros((3 * dim,), jnp.float32),
            "proj_w": nrm(bks[1], (dim, dim)),
            "proj_b": jnp.zeros((dim,), jnp.float32),
            "ln2_g": jnp.ones((dim,), jnp.float32),
            "ln2_b": jnp.zeros((dim,), jnp.float32),
            "fc1_w": nrm(bks[2], (dim, hidden)),
            "fc1_b": jnp.zeros((hidden,), jnp.float32),
            "fc2_w": nrm(bks[3], (hidden, dim)),
            "fc2_b": jnp.zeros((dim,), jnp.float32),
        })
    return params


def prepare_params(params):
    """Cast matmul weight matrices to bf16 once (half the HBM->VMEM traffic);
    biases / LayerNorm params / cls token / pos-embed stay f32."""
    p = dict(params)
    p["patch_w"] = params["patch_w"].astype(jnp.bfloat16)
    blocks = []
    for blk in params["blocks"]:
        nb = dict(blk)
        for k in ("qkv_w", "proj_w", "fc1_w", "fc2_w"):
            nb[k] = blk[k].astype(jnp.bfloat16)
        blocks.append(nb)
    p["blocks"] = blocks
    return p


if __name__ == "__main__":
    # TODO(synk): original module loads pretrained DINO weights via torch.hub;
    # here parameters are synthetic (deterministic PRNGKey init), architecture scaled down.
    DIM, DEPTH, HEADS = 128, 2, 4
    B, C, H, W = 2, 3, 64, 64

    key = jax.random.PRNGKey(0)
    kparam, kx = jax.random.split(key)
    params = init_params(kparam, dim=DIM, depth=DEPTH, pos_grid=H // PATCH)
    params = prepare_params(params)
    x = jax.random.normal(kx, (B, C, H, W), jnp.float32)

    fwd = jax.jit(functools.partial(vit_feature_extractor, num_heads=HEADS))
    out = fwd(x, params)
    jax.block_until_ready(out)

    assert out.shape == (B, DIM, H // PATCH, W // PATCH), out.shape
    assert bool(jnp.all(jnp.isfinite(out)))
    print("KERNEL_OK")
</pallas_src>

<mosaic_0001>
module attributes {stable_mosaic.version = 11 : i64} {
  func.func @_linear_kernel(%arg0: i32, %arg1: memref<16x768xbf16, #tpu.memory_space<vmem>>, %arg2: memref<768x128xbf16, #tpu.memory_space<vmem>>, %arg3: memref<1x128xf32, #tpu.memory_space<vmem>>, %arg4: memref<16x128xf32, #tpu.memory_space<vmem>>) attributes {dimension_semantics = [#tpu.dimension_semantics<parallel>], iteration_bounds = array<i64: 2>, scalar_prefetch = 0 : i64, scratch_operands = 0 : i64, tpu.core_type = #tpu.core_type<tc>, window_params = [{transform_indices = @transform_0, window_bounds = array<i64: 16, 768>}, {pipeline_mode = #tpu.pipeline_mode<synchronous>, transform_indices = @transform_1, window_bounds = array<i64: 768, 128>}, {pipeline_mode = #tpu.pipeline_mode<synchronous>, transform_indices = @transform_2, window_bounds = array<i64: 1, 128>}, {transform_indices = @transform_3, window_bounds = array<i64: 16, 128>}]} {
    %c0 = arith.constant 0 : index
    %c0_0 = arith.constant 0 : index
    %0 = vector.load %arg1[%c0, %c0_0] : memref<16x768xbf16, #tpu.memory_space<vmem>>, vector<16x768xbf16>
    %c0_1 = arith.constant 0 : index
    %c0_2 = arith.constant 0 : index
    %1 = vector.load %arg2[%c0_1, %c0_2] : memref<768x128xbf16, #tpu.memory_space<vmem>>, vector<768x128xbf16>
    %cst = arith.constant dense<0.000000e+00> : vector<16x128xf32>
    %2 = tpu.matmul %0, %1, %cst {dimension_numbers = #tpu.dot_dimension_numbers<[1], [0], [0], [1], [0, 0, 1, 1], [], []>} : vector<16x768xbf16>, vector<768x128xbf16>, vector<16x128xf32> -> vector<16x128xf32>
    %c0_3 = arith.constant 0 : index
    %c0_4 = arith.constant 0 : index
    %3 = vector.load %arg3[%c0_3, %c0_4] : memref<1x128xf32, #tpu.memory_space<vmem>>, vector<1x128xf32>
    %4 = vector.broadcast %3 : vector<1x128xf32> to vector<16x128xf32>
    %5 = arith.addf %2, %4 : vector<16x128xf32>
    %c0_5 = arith.constant 0 : index
    %c0_6 = arith.constant 0 : index
    %6 = vector.load %arg4[%c0_5, %c0_6] : memref<16x128xf32, #tpu.memory_space<vmem>>, vector<16x128xf32>
    tpu.vector_store %arg4[%c0_5, %c0_6], %5 {strides = array<i32>} : memref<16x128xf32, #tpu.memory_space<vmem>>, vector<16x128xf32>,
    return
  }
  func.func @transform_0(%arg0: i32) -> (i32, i32) {
    %c0_i32 = arith.constant 0 : i32
    %c0_i32_0 = arith.constant 0 : i32
    return %arg0, %c0_i32 : i32, i32
  }
  func.func @transform_1(%arg0: i32) -> (i32, i32) {
    %c0_i32 = arith.constant 0 : i32
    %c0_i32_0 = arith.constant 0 : i32
    %c0_i32_1 = arith.constant 0 : i32
    return %c0_i32, %c0_i32_0 : i32, i32
  }
  func.func @transform_2(%arg0: i32) -> (i32, i32) {
    %c0_i32 = arith.constant 0 : i32
    %c0_i32_0 = arith.constant 0 : i32
    %c0_i32_1 = arith.constant 0 : i32
    return %c0_i32, %c0_i32_0 : i32, i32
  }
  func.func @transform_3(%arg0: i32) -> (i32, i32) {
    %c0_i32 = arith.constant 0 : i32
    %c0_i32_0 = arith.constant 0 : i32
    return %arg0, %c0_i32 : i32, i32
  }
}

module attributes {stable_mosaic.version = 11 : i64} {
  func.func @_ln_linear_kernel(%arg0: i32, %arg1: memref<34x128xf32, #tpu.memory_space<vmem>>, %arg2: memref<1x128xf32, #tpu.memory_space<vmem>>, %arg3: memref<1x128xf32, #tpu.memory_space<vmem>>, %arg4: memref<128x384xbf16, #tpu.memory_space<vmem>>, %arg5: memref<1x384xf32, #tpu.memory_space<vmem>>, %arg6: memref<34x384xbf16, #tpu.memory_space<vmem>>) attributes {dimension_semantics = [#tpu.dimension_semantics<parallel>], iteration_bounds = array<i64: 1>, scalar_prefetch = 0 : i64, scratch_operands = 0 : i64, tpu.core_type = #tpu.core_type<tc>, window_params = [{transform_indices = @transform_0, window_bounds = array<i64: 34, 128>}, {pipeline_mode = #tpu.pipeline_mode<synchronous>, transform_indices = @transform_1, window_bounds = array<i64: 1, 128>}, {pipeline_mode = #tpu.pipeline_mode<synchronous>, transform_indices = @transform_2, window_bounds = array<i64: 1, 128>}, {pipeline_mode = #tpu.pipeline_mode<synchronous>, transform_indices = @transform_3, window_bounds = array<i64: 128, 384>}, {pipeline_mode = #tpu.pipeline_mode<synchronous>, transform_indices = @transform_4, window_bounds = array<i64: 1, 384>}, {transform_indices = @transform_5, window_bounds = array<i64: 34, 384>}]} {
    %c0 = arith.constant 0 : index
    %c0_0 = arith.constant 0 : index
    %0 = vector.load %arg1[%c0, %c0_0] : memref<34x128xf32, #tpu.memory_space<vmem>>, vector<34x128xf32>
    %c0_1 = arith.constant 0 : index
    %c0_2 = arith.constant 0 : index
    %1 = vector.load %arg2[%c0_1, %c0_2] : memref<1x128xf32, #tpu.memory_space<vmem>>, vector<1x128xf32>
    %c0_3 = arith.constant 0 : index
    %c0_4 = arith.constant 0 : index
    %2 = vector.load %arg3[%c0_3, %c0_4] : memref<1x128xf32, #tpu.memory_space<vmem>>, vector<1x128xf32>
    %cst = arith.constant dense<0.000000e+00> : vector<34xf32>
    %3 = vector.multi_reduction <add>, %0, %cst [1] : vector<34x128xf32> to vector<34xf32>
    %4 = vector.shape_cast %3 : vector<34xf32> to vector<34x1xf32>
    %cst_5 = arith.constant 1.280000e+02 : f32
    %5 = vector.broadcast %cst_5 : f32 to vector<34x1xf32>
    %6 = arith.divf %4, %5 : vector<34x1xf32>
    %7 = vector.broadcast %6 : vector<34x1xf32> to vector<34x128xf32>
    %8 = arith.subf %0, %7 : vector<34x128xf32>
    %9 = arith.mulf %8, %8 : vector<34x128xf32>
    %cst_6 = arith.constant dense<0.000000e+00> : vector<34xf32>
    %10 = vector.multi_reduction <add>, %9, %cst_6 [1] : vector<34x128xf32> to vector<34xf32>
    %11 = vector.shape_cast %10 : vector<34xf32> to vector<34x1xf32>
    %cst_7 = arith.constant 1.280000e+02 : f32
    %12 = vector.broadcast %cst_7 : f32 to vector<34x1xf32>
    %13 = arith.divf %11, %12 : vector<34x1xf32>
    %cst_8 = arith.constant 9.99999997E-7 : f32
    %14 = vector.broadcast %cst_8 : f32 to vector<34x1xf32>
    %15 = arith.addf %13, %14 : vector<34x1xf32>
    %16 = math.rsqrt %15 : vector<34x1xf32>
    %17 = vector.broadcast %16 : vector<34x1xf32> to vector<34x128xf32>
    %18 = arith.mulf %8, %17 : vector<34x128xf32>
    %19 = vector.broadcast %1 : vector<1x128xf32> to vector<34x128xf32>
    %20 = arith.mulf %18, %19 : vector<34x128xf32>
    %21 = vector.broadcast %2 : vector<1x128xf32> to vector<34x128xf32>
    %22 = arith.addf %20, %21 : vector<34x128xf32>
    %23 = arith.truncf %22 : vector<34x128xf32> to vector<34x128xbf16>
    %c0_9 = arith.constant 0 : index
    %c0_10 = arith.constant 0 : index
    %24 = vector.load %arg4[%c0_9, %c0_10] : memref<128x384xbf16, #tpu.memory_space<vmem>>, vector<128x384xbf16>
    %cst_11 = arith.constant dense<0.000000e+00> : vector<34x384xf32>
    %25 = tpu.matmul %23, %24, %cst_11 {dimension_numbers = #tpu.dot_dimension_numbers<[1], [0], [0], [1], [0, 0, 1, 1], [], []>} : vector<34x128xbf16>, vector<128x384xbf16>, vector<34x384xf32> -> vector<34x384xf32>
    %c0_12 = arith.constant 0 : index
    %c0_13 = arith.constant 0 : index
    %26 = vector.load %arg5[%c0_12, %c0_13] : memref<1x384xf32, #tpu.memory_space<vmem>>, vector<1x384xf32>
    %27 = vector.broadcast %26 : vector<1x384xf32> to vector<34x384xf32>
    %28 = arith.addf %25, %27 : vector<34x384xf32>
    %29 = arith.truncf %28 : vector<34x384xf32> to vector<34x384xbf16>
    %c0_14 = arith.constant 0 : index
    %c0_15 = arith.constant 0 : index
    %30 = vector.load %arg6[%c0_14, %c0_15] : memref<34x384xbf16, #tpu.memory_space<vmem>>, vector<34x384xbf16>
    tpu.vector_store %arg6[%c0_14, %c0_15], %29 {strides = array<i32>} : memref<34x384xbf16, #tpu.memory_space<vmem>>, vector<34x384xbf16>,
    return
  }
  func.func @transform_0(%arg0: i32) -> (i32, i32) {
    %c0_i32 = arith.constant 0 : i32
    %c0_i32_0 = arith.constant 0 : i32
    return %arg0, %c0_i32 : i32, i32
  }
  func.func @transform_1(%arg0: i32) -> (i32, i32) {
    %c0_i32 = arith.constant 0 : i32
    %c0_i32_0 = arith.constant 0 : i32
    %c0_i32_1 = arith.constant 0 : i32
    return %c0_i32, %c0_i32_0 : i32, i32
  }
  func.func @transform_2(%arg0: i32) -> (i32, i32) {
    %c0_i32 = arith.constant 0 : i32
    %c0_i32_0 = arith.constant 0 : i32
    %c0_i32_1 = arith.constant 0 : i32
    return %c0_i32, %c0_i32_0 : i32, i32
  }
  func.func @transform_3(%arg0: i32) -> (i32, i32) {
    %c0_i32 = arith.constant 0 : i32
    %c0_i32_0 = arith.constant 0 : i32
    %c0_i32_1 = arith.constant 0 : i32
    return %c0_i32, %c0_i32_0 : i32, i32
  }
  func.func @transform_4(%arg0: i32) -> (i32, i32) {
    %c0_i32 = arith.constant 0 : i32
    %c0_i32_0 = arith.constant 0 : i32
    %c0_i32_1 = arith.constant 0 : i32
    return %c0_i32, %c0_i32_0 : i32, i32
  }
  func.func @transform_5(%arg0: i32) -> (i32, i32) {
    %c0_i32 = arith.constant 0 : i32
    %c0_i32_0 = arith.constant 0 : i32
    return %arg0, %c0_i32 : i32, i32
  }
}

module attributes {stable_mosaic.version = 11 : i64} {
  func.func @_attn_block_kernel(%arg0: i32, %arg1: memref<1x17x384xbf16, #tpu.memory_space<vmem>>, %arg2: memref<1x17x128xf32, #tpu.memory_space<vmem>>, %arg3: memref<128x128xbf16, #tpu.memory_space<vmem>>, %arg4: memref<1x128xf32, #tpu.memory_space<vmem>>, %arg5: memref<1x17x128xf32, #tpu.memory_space<vmem>>, %arg6: memref<17x128xbf16, #tpu.memory_space<vmem>>) attributes {dimension_semantics = [#tpu.dimension_semantics<parallel>], iteration_bounds = array<i64: 2>, scalar_prefetch = 0 : i64, scratch_operands = 1 : i64, tpu.core_type = #tpu.core_type<tc>, window_params = [{transform_indices = @transform_0, window_bounds = array<i64: 1, 17, 384>}, {transform_indices = @transform_1, window_bounds = array<i64: 1, 17, 128>}, {pipeline_mode = #tpu.pipeline_mode<synchronous>, transform_indices = @transform_2, window_bounds = array<i64: 128, 128>}, {pipeline_mode = #tpu.pipeline_mode<synchronous>, transform_indices = @transform_3, window_bounds = array<i64: 1, 128>}, {transform_indices = @transform_4, window_bounds = array<i64: 1, 17, 128>}]} {
    %c0 = arith.constant 0 : index
    %c0_0 = arith.constant 0 : index
    %c0_1 = arith.constant 0 : index
    %0 = vector.load %arg1[%c0, %c0_0, %c0_1] : memref<1x17x384xbf16, #tpu.memory_space<vmem>>, vector<1x17x384xbf16>
    %1 = vector.shape_cast %0 : vector<1x17x384xbf16> to vector<17x384xbf16>
    %c0_2 = arith.constant 0 : index
    %c0_3 = arith.constant 0 : index
    %c0_4 = arith.constant 0 : index
    %2 = vector.load %arg2[%c0_2, %c0_3, %c0_4] : memref<1x17x128xf32, #tpu.memory_space<vmem>>, vector<1x17x128xf32>
    %3 = vector.shape_cast %2 : vector<1x17x128xf32> to vector<17x128xf32>
    %4 = vector.extract_strided_slice %1 {offsets = [0, 0], sizes = [17, 128], strides = [1, 1]} : vector<17x384xbf16> to vector<17x128xbf16>
    %5 = vector.extract_strided_slice %1 {offsets = [0, 128], sizes = [17, 128], strides = [1, 1]} : vector<17x384xbf16> to vector<17x128xbf16>
    %6 = vector.extract_strided_slice %1 {offsets = [0, 256], sizes = [17, 128], strides = [1, 1]} : vector<17x384xbf16> to vector<17x128xbf16>
    %7 = vector.extract_strided_slice %4 {offsets = [0, 0], sizes = [17, 32], strides = [1, 1]} : vector<17x128xbf16> to vector<17x32xbf16>
    %8 = vector.extract_strided_slice %5 {offsets = [0, 0], sizes = [17, 32], strides = [1, 1]} : vector<17x128xbf16> to vector<17x32xbf16>
    %9 = vector.extract_strided_slice %6 {offsets = [0, 0], sizes = [17, 32], strides = [1, 1]} : vector<17x128xbf16> to vector<17x32xbf16>
    %cst = arith.constant dense<0.000000e+00> : vector<17x17xf32>
    %10 = tpu.matmul %7, %8, %cst {dimension_numbers = #tpu.dot_dimension_numbers<[1], [1], [0], [0], [0, 0, 1, 0], [], []>} : vector<17x32xbf16>, vector<17x32xbf16>, vector<17x17xf32> -> vector<17x17xf32>
    %cst_5 = arith.constant 0.176776692 : f32
    %11 = vector.broadcast %cst_5 : f32 to vector<17x17xf32>
    %12 = arith.mulf %10, %11 : vector<17x17xf32>
    %cst_6 = arith.constant dense<0xFF800000> : vector<17xf32>
    %13 = vector.multi_reduction <maximumf>, %12, %cst_6 [1] : vector<17x17xf32> to vector<17xf32>
    %14 = vector.shape_cast %13 : vector<17xf32> to vector<17x1xf32>
    %15 = vector.broadcast %14 : vector<17x1xf32> to vector<17x17xf32>
    %16 = arith.subf %12, %15 : vector<17x17xf32>
    %17 = math.exp %16 : vector<17x17xf32>
    %cst_7 = arith.constant dense<0.000000e+00> : vector<17xf32>
    %18 = vector.multi_reduction <add>, %17, %cst_7 [1] : vector<17x17xf32> to vector<17xf32>
    %19 = vector.shape_cast %18 : vector<17xf32> to vector<17x1xf32>
    %20 = tpu.reciprocal %19 {approx = true} : vector<17x1xf32> -> vector<17x1xf32>
    %21 = vector.broadcast %20 : vector<17x1xf32> to vector<17x17xf32>
    %22 = arith.mulf %17, %21 : vector<17x17xf32>
    %23 = arith.truncf %22 : vector<17x17xf32> to vector<17x17xbf16>
    %cst_8 = arith.constant dense<0.000000e+00> : vector<17x32xf32>
    %24 = tpu.matmul %23, %9, %cst_8 {dimension_numbers = #tpu.dot_dimension_numbers<[1], [0], [0], [1], [0, 0, 1, 1], [], []>} : vector<17x17xbf16>, vector<17x32xbf16>, vector<17x32xf32> -> vector<17x32xf32>
    %25 = arith.truncf %24 : vector<17x32xf32> to vector<17x32xbf16>
    %c0_9 = arith.constant 0 : index
    %c0_10 = arith.constant 0 : index
    %26 = vector.load %arg6[%c0_9, %c0_10] : memref<17x128xbf16, #tpu.memory_space<vmem>>, vector<17x32xbf16>
    tpu.vector_store %arg6[%c0_9, %c0_10], %25 {strides = array<i32>} : memref<17x128xbf16, #tpu.memory_space<vmem>>, vector<17x32xbf16>,
    %27 = vector.extract_strided_slice %4 {offsets = [0, 32], sizes = [17, 32], strides = [1, 1]} : vector<17x128xbf16> to vector<17x32xbf16>
    %28 = vector.extract_strided_slice %5 {offsets = [0, 32], sizes = [17, 32], strides = [1, 1]} : vector<17x128xbf16> to vector<17x32xbf16>
    %29 = vector.extract_strided_slice %6 {offsets = [0, 32], sizes = [17, 32], strides = [1, 1]} : vector<17x128xbf16> to vector<17x32xbf16>
    %cst_11 = arith.constant dense<0.000000e+00> : vector<17x17xf32>
    %30 = tpu.matmul %27, %28, %cst_11 {dimension_numbers = #tpu.dot_dimension_numbers<[1], [1], [0], [0], [0, 0, 1, 0], [], []>} : vector<17x32xbf16>, vector<17x32xbf16>, vector<17x17xf32> -> vector<17x17xf32>
    %cst_12 = arith.constant 0.176776692 : f32
    %31 = vector.broadcast %cst_12 : f32 to vector<17x17xf32>
    %32 = arith.mulf %30, %31 : vector<17x17xf32>
    %cst_13 = arith.constant dense<0xFF800000> : vector<17xf32>
    %33 = vector.multi_reduction <maximumf>, %32, %cst_13 [1] : vector<17x17xf32> to vector<17xf32>
    %34 = vector.shape_cast %33 : vector<17xf32> to vector<17x1xf32>
    %35 = vector.broadcast %34 : vector<17x1xf32> to vector<17x17xf32>
    %36 = arith.subf %32, %35 : vector<17x17xf32>
    %37 = math.exp %36 : vector<17x17xf32>
    %cst_14 = arith.constant dense<0.000000e+00> : vector<17xf32>
    %38 = vector.multi_reduction <add>, %37, %cst_14 [1] : vector<17x17xf32> to vector<17xf32>
    %39 = vector.shape_cast %38 : vector<17xf32> to vector<17x1xf32>
    %40 = tpu.reciprocal %39 {approx = true} : vector<17x1xf32> -> vector<17x1xf32>
    %41 = vector.broadcast %40 : vector<17x1xf32> to vector<17x17xf32>
    %42 = arith.mulf %37, %41 : vector<17x17xf32>
    %43 = arith.truncf %42 : vector<17x17xf32> to vector<17x17xbf16>
    %cst_15 = arith.constant dense<0.000000e+00> : vector<17x32xf32>
    %44 = tpu.matmul %43, %29, %cst_15 {dimension_numbers = #tpu.dot_dimension_numbers<[1], [0], [0], [1], [0, 0, 1, 1], [], []>} : vector<17x17xbf16>, vector<17x32xbf16>, vector<17x32xf32> -> vector<17x32xf32>
    %45 = arith.truncf %44 : vector<17x32xf32> to vector<17x32xbf16>
    %c0_16 = arith.constant 0 : index
    %c32 = arith.constant 32 : index
    %46 = vector.load %arg6[%c0_16, %c32] : memref<17x128xbf16, #tpu.memory_space<vmem>>, vector<17x32xbf16>
    tpu.vector_store %arg6[%c0_16, %c32], %45 {strides = array<i32>} : memref<17x128xbf16, #tpu.memory_space<vmem>>, vector<17x32xbf16>,
    %47 = vector.extract_strided_slice %4 {offsets = [0, 64], sizes = [17, 32], strides = [1, 1]} : vector<17x128xbf16> to vector<17x32xbf16>
    %48 = vector.extract_strided_slice %5 {offsets = [0, 64], sizes = [17, 32], strides = [1, 1]} : vector<17x128xbf16> to vector<17x32xbf16>
    %49 = vector.extract_strided_slice %6 {offsets = [0, 64], sizes = [17, 32], strides = [1, 1]} : vector<17x128xbf16> to vector<17x32xbf16>
    %cst_17 = arith.constant dense<0.000000e+00> : vector<17x17xf32>
    %50 = tpu.matmul %47, %48, %cst_17 {dimension_numbers = #tpu.dot_dimension_numbers<[1], [1], [0], [0], [0, 0, 1, 0], [], []>} : vector<17x32xbf16>, vector<17x32xbf16>, vector<17x17xf32> -> vector<17x17xf32>
    %cst_18 = arith.constant 0.176776692 : f32
    %51 = vector.broadcast %cst_18 : f32 to vector<17x17xf32>
    %52 = arith.mulf %50, %51 : vector<17x17xf32>
    %cst_19 = arith.constant dense<0xFF800000> : vector<17xf32>
    %53 = vector.multi_reduction <maximumf>, %52, %cst_19 [1] : vector<17x17xf32> to vector<17xf32>
    %54 = vector.shape_cast %53 : vector<17xf32> to vector<17x1xf32>
    %55 = vector.broadcast %54 : vector<17x1xf32> to vector<17x17xf32>
    %56 = arith.subf %52, %55 : vector<17x17xf32>
    %57 = math.exp %56 : vector<17x17xf32>
    %cst_20 = arith.constant dense<0.000000e+00> : vector<17xf32>
    %58 = vector.multi_reduction <add>, %57, %cst_20 [1] : vector<17x17xf32> to vector<17xf32>
    %59 = vector.shape_cast %58 : vector<17xf32> to vector<17x1xf32>
    %60 = tpu.reciprocal %59 {approx = true} : vector<17x1xf32> -> vector<17x1xf32>
    %61 = vector.broadcast %60 : vector<17x1xf32> to vector<17x17xf32>
    %62 = arith.mulf %57, %61 : vector<17x17xf32>
    %63 = arith.truncf %62 : vector<17x17xf32> to vector<17x17xbf16>
    %cst_21 = arith.constant dense<0.000000e+00> : vector<17x32xf32>
    %64 = tpu.matmul %63, %49, %cst_21 {dimension_numbers = #tpu.dot_dimension_numbers<[1], [0], [0], [1], [0, 0, 1, 1], [], []>} : vector<17x17xbf16>, vector<17x32xbf16>, vector<17x32xf32> -> vector<17x32xf32>
    %65 = arith.truncf %64 : vector<17x32xf32> to vector<17x32xbf16>
    %c0_22 = arith.constant 0 : index
    %c64 = arith.constant 64 : index
    %66 = vector.load %arg6[%c0_22, %c64] : memref<17x128xbf16, #tpu.memory_space<vmem>>, vector<17x32xbf16>
    tpu.vector_store %arg6[%c0_22, %c64], %65 {strides = array<i32>} : memref<17x128xbf16, #tpu.memory_space<vmem>>, vector<17x32xbf16>,
    %67 = vector.extract_strided_slice %4 {offsets = [0, 96], sizes = [17, 32], strides = [1, 1]} : vector<17x128xbf16> to vector<17x32xbf16>
    %68 = vector.extract_strided_slice %5 {offsets = [0, 96], sizes = [17, 32], strides = [1, 1]} : vector<17x128xbf16> to vector<17x32xbf16>
    %69 = vector.extract_strided_slice %6 {offsets = [0, 96], sizes = [17, 32], strides = [1, 1]} : vector<17x128xbf16> to vector<17x32xbf16>
    %cst_23 = arith.constant dense<0.000000e+00> : vector<17x17xf32>
    %70 = tpu.matmul %67, %68, %cst_23 {dimension_numbers = #tpu.dot_dimension_numbers<[1], [1], [0], [0], [0, 0, 1, 0], [], []>} : vector<17x32xbf16>, vector<17x32xbf16>, vector<17x17xf32> -> vector<17x17xf32>
    %cst_24 = arith.constant 0.176776692 : f32
    %71 = vector.broadcast %cst_24 : f32 to vector<17x17xf32>
    %72 = arith.mulf %70, %71 : vector<17x17xf32>
    %cst_25 = arith.constant dense<0xFF800000> : vector<17xf32>
    %73 = vector.multi_reduction <maximumf>, %72, %cst_25 [1] : vector<17x17xf32> to vector<17xf32>
    %74 = vector.shape_cast %73 : vector<17xf32> to vector<17x1xf32>
    %75 = vector.broadcast %74 : vector<17x1xf32> to vector<17x17xf32>
    %76 = arith.subf %72, %75 : vector<17x17xf32>
    %77 = math.exp %76 : vector<17x17xf32>
    %cst_26 = arith.constant dense<0.000000e+00> : vector<17xf32>
    %78 = vector.multi_reduction <add>, %77, %cst_26 [1] : vector<17x17xf32> to vector<17xf32>
    %79 = vector.shape_cast %78 : vector<17xf32> to vector<17x1xf32>
    %80 = tpu.reciprocal %79 {approx = true} : vector<17x1xf32> -> vector<17x1xf32>
    %81 = vector.broadcast %80 : vector<17x1xf32> to vector<17x17xf32>
    %82 = arith.mulf %77, %81 : vector<17x17xf32>
    %83 = arith.truncf %82 : vector<17x17xf32> to vector<17x17xbf16>
    %cst_27 = arith.constant dense<0.000000e+00> : vector<17x32xf32>
    %84 = tpu.matmul %83, %69, %cst_27 {dimension_numbers = #tpu.dot_dimension_numbers<[1], [0], [0], [1], [0, 0, 1, 1], [], []>} : vector<17x17xbf16>, vector<17x32xbf16>, vector<17x32xf32> -> vector<17x32xf32>
    %85 = arith.truncf %84 : vector<17x32xf32> to vector<17x32xbf16>
    %c0_28 = arith.constant 0 : index
    %c96 = arith.constant 96 : index
    %86 = vector.load %arg6[%c0_28, %c96] : memref<17x128xbf16, #tpu.memory_space<vmem>>, vector<17x32xbf16>
    tpu.vector_store %arg6[%c0_28, %c96], %85 {strides = array<i32>} : memref<17x128xbf16, #tpu.memory_space<vmem>>, vector<17x32xbf16>,
    %c0_29 = arith.constant 0 : index
    %c0_30 = arith.constant 0 : index
    %87 = vector.load %arg6[%c0_29, %c0_30] : memref<17x128xbf16, #tpu.memory_space<vmem>>, vector<17x128xbf16>
    %c0_31 = arith.constant 0 : index
    %c0_32 = arith.constant 0 : index
    %88 = vector.load %arg3[%c0_31, %c0_32] : memref<128x128xbf16, #tpu.memory_space<vmem>>, vector<128x128xbf16>
    %cst_33 = arith.constant dense<0.000000e+00> : vector<17x128xf32>
    %89 = tpu.matmul %87, %88, %cst_33 {dimension_numbers = #tpu.dot_dimension_numbers<[1], [0], [0], [1], [0, 0, 1, 1], [], []>} : vector<17x128xbf16>, vector<128x128xbf16>, vector<17x128xf32> -> vector<17x128xf32>
    %c0_34 = arith.constant 0 : index
    %c0_35 = arith.constant 0 : index
    %90 = vector.load %arg4[%c0_34, %c0_35] : memref<1x128xf32, #tpu.memory_space<vmem>>, vector<1x128xf32>
    %91 = vector.broadcast %90 : vector<1x128xf32> to vector<17x128xf32>
    %92 = arith.addf %89, %91 : vector<17x128xf32>
    %93 = arith.addf %3, %92 : vector<17x128xf32>
    %c0_36 = arith.constant 0 : index
    %c0_37 = arith.constant 0 : index
    %c0_38 = arith.constant 0 : index
    %94 = vector.load %arg5[%c0_36, %c0_37, %c0_38] : memref<1x17x128xf32, #tpu.memory_space<vmem>>, vector<1x17x128xf32>
    %95 = vector.shape_cast %94 : vector<1x17x128xf32> to vector<17x128xf32>
    %96 = vector.shape_cast %93 : vector<17x128xf32> to vector<1x17x128xf32>
    tpu.vector_store %arg5[%c0_36, %c0_37, %c0_38], %96 {strides = array<i32>} : memref<1x17x128xf32, #tpu.memory_space<vmem>>, vector<1x17x128xf32>,
    return
  }
  func.func @transform_0(%arg0: i32) -> (i32, i32, i32) {
    %c0_i32 = arith.constant 0 : i32
    %c0_i32_0 = arith.constant 0 : i32
    %c0_i32_1 = arith.constant 0 : i32
    return %arg0, %c0_i32, %c0_i32_0 : i32, i32, i32
  }
  func.func @transform_1(%arg0: i32) -> (i32, i32, i32) {
    %c0_i32 = arith.constant 0 : i32
    %c0_i32_0 = arith.constant 0 : i32
    %c0_i32_1 = arith.constant 0 : i32
    return %arg0, %c0_i32, %c0_i32_0 : i32, i32, i32
  }
  func.func @transform_2(%arg0: i32) -> (i32, i32) {
    %c0_i32 = arith.constant 0 : i32
    %c0_i32_0 = arith.constant 0 : i32
    %c0_i32_1 = arith.constant 0 : i32
    return %c0_i32, %c0_i32_0 : i32, i32
  }
  func.func @transform_3(%arg0: i32) -> (i32, i32) {
    %c0_i32 = arith.constant 0 : i32
    %c0_i32_0 = arith.constant 0 : i32
    %c0_i32_1 = arith.constant 0 : i32
    return %c0_i32, %c0_i32_0 : i32, i32
  }
  func.func @transform_4(%arg0: i32) -> (i32, i32, i32) {
    %c0_i32 = arith.constant 0 : i32
    %c0_i32_0 = arith.constant 0 : i32
    %c0_i32_1 = arith.constant 0 : i32
    return %arg0, %c0_i32, %c0_i32_0 : i32, i32, i32
  }
}

module attributes {stable_mosaic.version = 11 : i64} {
  func.func @_mlp_kernel(%arg0: i32, %arg1: memref<34x128xf32, #tpu.memory_space<vmem>>, %arg2: memref<1x128xf32, #tpu.memory_space<vmem>>, %arg3: memref<1x128xf32, #tpu.memory_space<vmem>>, %arg4: memref<128x512xbf16, #tpu.memory_space<vmem>>, %arg5: memref<1x512xf32, #tpu.memory_space<vmem>>, %arg6: memref<512x128xbf16, #tpu.memory_space<vmem>>, %arg7: memref<1x128xf32, #tpu.memory_space<vmem>>, %arg8: memref<34x128xf32, #tpu.memory_space<vmem>>) attributes {dimension_semantics = [#tpu.dimension_semantics<parallel>], iteration_bounds = array<i64: 1>, scalar_prefetch = 0 : i64, scratch_operands = 0 : i64, tpu.core_type = #tpu.core_type<tc>, window_params = [{transform_indices = @transform_0, window_bounds = array<i64: 34, 128>}, {pipeline_mode = #tpu.pipeline_mode<synchronous>, transform_indices = @transform_1, window_bounds = array<i64: 1, 128>}, {pipeline_mode = #tpu.pipeline_mode<synchronous>, transform_indices = @transform_2, window_bounds = array<i64: 1, 128>}, {pipeline_mode = #tpu.pipeline_mode<synchronous>, transform_indices = @transform_3, window_bounds = array<i64: 128, 512>}, {pipeline_mode = #tpu.pipeline_mode<synchronous>, transform_indices = @transform_4, window_bounds = array<i64: 1, 512>}, {pipeline_mode = #tpu.pipeline_mode<synchronous>, transform_indices = @transform_5, window_bounds = array<i64: 512, 128>}, {pipeline_mode = #tpu.pipeline_mode<synchronous>, transform_indices = @transform_6, window_bounds = array<i64: 1, 128>}, {transform_indices = @transform_7, window_bounds = array<i64: 34, 128>}]} {
    %c0 = arith.constant 0 : index
    %c0_0 = arith.constant 0 : index
    %0 = vector.load %arg1[%c0, %c0_0] : memref<34x128xf32, #tpu.memory_space<vmem>>, vector<34x128xf32>
    %c0_1 = arith.constant 0 : index
    %c0_2 = arith.constant 0 : index
    %1 = vector.load %arg2[%c0_1, %c0_2] : memref<1x128xf32, #tpu.memory_space<vmem>>, vector<1x128xf32>
    %c0_3 = arith.constant 0 : index
    %c0_4 = arith.constant 0 : index
    %2 = vector.load %arg3[%c0_3, %c0_4] : memref<1x128xf32, #tpu.memory_space<vmem>>, vector<1x128xf32>
    %cst = arith.constant dense<0.000000e+00> : vector<34xf32>
    %3 = vector.multi_reduction <add>, %0, %cst [1] : vector<34x128xf32> to vector<34xf32>
    %4 = vector.shape_cast %3 : vector<34xf32> to vector<34x1xf32>
    %cst_5 = arith.constant 1.280000e+02 : f32
    %5 = vector.broadcast %cst_5 : f32 to vector<34x1xf32>
    %6 = arith.divf %4, %5 : vector<34x1xf32>
    %7 = vector.broadcast %6 : vector<34x1xf32> to vector<34x128xf32>
    %8 = arith.subf %0, %7 : vector<34x128xf32>
    %9 = arith.mulf %8, %8 : vector<34x128xf32>
    %cst_6 = arith.constant dense<0.000000e+00> : vector<34xf32>
    %10 = vector.multi_reduction <add>, %9, %cst_6 [1] : vector<34x128xf32> to vector<34xf32>
    %11 = vector.shape_cast %10 : vector<34xf32> to vector<34x1xf32>
    %cst_7 = arith.constant 1.280000e+02 : f32
    %12 = vector.broadcast %cst_7 : f32 to vector<34x1xf32>
    %13 = arith.divf %11, %12 : vector<34x1xf32>
    %cst_8 = arith.constant 9.99999997E-7 : f32
    %14 = vector.broadcast %cst_8 : f32 to vector<34x1xf32>
    %15 = arith.addf %13, %14 : vector<34x1xf32>
    %16 = math.rsqrt %15 : vector<34x1xf32>
    %17 = vector.broadcast %16 : vector<34x1xf32> to vector<34x128xf32>
    %18 = arith.mulf %8, %17 : vector<34x128xf32>
    %19 = vector.broadcast %1 : vector<1x128xf32> to vector<34x128xf32>
    %20 = arith.mulf %18, %19 : vector<34x128xf32>
    %21 = vector.broadcast %2 : vector<1x128xf32> to vector<34x128xf32>
    %22 = arith.addf %20, %21 : vector<34x128xf32>
    %23 = arith.truncf %22 : vector<34x128xf32> to vector<34x128xbf16>
    %c0_9 = arith.constant 0 : index
    %c0_10 = arith.constant 0 : index
    %24 = vector.load %arg4[%c0_9, %c0_10] : memref<128x512xbf16, #tpu.memory_space<vmem>>, vector<128x512xbf16>
    %cst_11 = arith.constant dense<0.000000e+00> : vector<34x512xf32>
    %25 = tpu.matmul %23, %24, %cst_11 {dimension_numbers = #tpu.dot_dimension_numbers<[1], [0], [0], [1], [0, 0, 1, 1], [], []>} : vector<34x128xbf16>, vector<128x512xbf16>, vector<34x512xf32> -> vector<34x512xf32>
    %c0_12 = arith.constant 0 : index
    %c0_13 = arith.constant 0 : index
    %26 = vector.load %arg5[%c0_12, %c0_13] : memref<1x512xf32, #tpu.memory_space<vmem>>, vector<1x512xf32>
    %27 = vector.broadcast %26 : vector<1x512xf32> to vector<34x512xf32>
    %28 = arith.addf %25, %27 : vector<34x512xf32>
    %cst_14 = arith.constant 5.000000e-01 : f32
    %29 = vector.broadcast %cst_14 : f32 to vector<34x512xf32>
    %30 = arith.mulf %29, %28 : vector<34x512xf32>
    %cst_15 = arith.constant 0.707106769 : f32
    %31 = vector.broadcast %cst_15 : f32 to vector<34x512xf32>
    %32 = arith.mulf %28, %31 : vector<34x512xf32>
    %33 = math.absf %32 : vector<34x512xf32>
    %cst_16 = arith.constant 0.327591091 : f32
    %34 = vector.broadcast %cst_16 : f32 to vector<34x512xf32>
    %35 = arith.mulf %34, %33 : vector<34x512xf32>
    %cst_17 = arith.constant 1.000000e+00 : f32
    %36 = vector.broadcast %cst_17 : f32 to vector<34x512xf32>
    %37 = arith.addf %36, %35 : vector<34x512xf32>
    %38 = tpu.reciprocal %37 {approx = true} : vector<34x512xf32> -> vector<34x512xf32>
    %cst_18 = arith.constant 1.06140542 : f32
    %39 = vector.broadcast %cst_18 : f32 to vector<34x512xf32>
    %40 = arith.mulf %39, %38 : vector<34x512xf32>
    %cst_19 = arith.constant -1.45315206 : f32
    %41 = vector.broadcast %cst_19 : f32 to vector<34x512xf32>
    %42 = arith.addf %40, %41 : vector<34x512xf32>
    %43 = arith.mulf %42, %38 : vector<34x512xf32>
    %cst_20 = arith.constant 1.42141378 : f32
    %44 = vector.broadcast %cst_20 : f32 to vector<34x512xf32>
    %45 = arith.addf %43, %44 : vector<34x512xf32>
    %46 = arith.mulf %45, %38 : vector<34x512xf32>
    %cst_21 = arith.constant -0.284496725 : f32
    %47 = vector.broadcast %cst_21 : f32 to vector<34x512xf32>
    %48 = arith.addf %46, %47 : vector<34x512xf32>
    %49 = arith.mulf %48, %38 : vector<34x512xf32>
    %cst_22 = arith.constant 0.254829586 : f32
    %50 = vector.broadcast %cst_22 : f32 to vector<34x512xf32>
    %51 = arith.addf %49, %50 : vector<34x512xf32>
    %52 = arith.mulf %51, %38 : vector<34x512xf32>
    %cst_23 = arith.constant 0.000000e+00 : f32
    %53 = vector.broadcast %cst_23 : f32 to vector<34x512xf32>
    %54 = arith.subf %53, %33 : vector<34x512xf32>
    %55 = arith.mulf %54, %33 : vector<34x512xf32>
    %56 = math.exp %55 : vector<34x512xf32>
    %57 = arith.mulf %52, %56 : vector<34x512xf32>
    %cst_24 = arith.constant 1.000000e+00 : f32
    %58 = vector.broadcast %cst_24 : f32 to vector<34x512xf32>
    %59 = arith.subf %58, %57 : vector<34x512xf32>
    %cst_25 = arith.constant 0.000000e+00 : f32
    %60 = vector.broadcast %cst_25 : f32 to vector<34x512xf32>
    %61 = arith.cmpf oge, %32, %60 : vector<34x512xf32>
    %cst_26 = arith.constant 0.000000e+00 : f32
    %62 = vector.broadcast %cst_26 : f32 to vector<34x512xf32>
    %63 = arith.subf %62, %59 : vector<34x512xf32>
    %64 = arith.select %61, %59, %63 : vector<34x512xi1>, vector<34x512xf32>
    %cst_27 = arith.constant 1.000000e+00 : f32
    %65 = vector.broadcast %cst_27 : f32 to vector<34x512xf32>
    %66 = arith.addf %65, %64 : vector<34x512xf32>
    %67 = arith.mulf %30, %66 : vector<34x512xf32>
    %68 = arith.truncf %67 : vector<34x512xf32> to vector<34x512xbf16>
    %c0_28 = arith.constant 0 : index
    %c0_29 = arith.constant 0 : index
    %69 = vector.load %arg6[%c0_28, %c0_29] : memref<512x128xbf16, #tpu.memory_space<vmem>>, vector<512x128xbf16>
    %cst_30 = arith.constant dense<0.000000e+00> : vector<34x128xf32>
    %70 = tpu.matmul %68, %69, %cst_30 {dimension_numbers = #tpu.dot_dimension_numbers<[1], [0], [0], [1], [0, 0, 1, 1], [], []>} : vector<34x512xbf16>, vector<512x128xbf16>, vector<34x128xf32> -> vector<34x128xf32>
    %c0_31 = arith.constant 0 : index
    %c0_32 = arith.constant 0 : index
    %71 = vector.load %arg7[%c0_31, %c0_32] : memref<1x128xf32, #tpu.memory_space<vmem>>, vector<1x128xf32>
    %72 = vector.broadcast %71 : vector<1x128xf32> to vector<34x128xf32>
    %73 = arith.addf %70, %72 : vector<34x128xf32>
    %74 = arith.addf %0, %73 : vector<34x128xf32>
    %c0_33 = arith.constant 0 : index
    %c0_34 = arith.constant 0 : index
    %75 = vector.load %arg8[%c0_33, %c0_34] : memref<34x128xf32, #tpu.memory_space<vmem>>, vector<34x128xf32>
    tpu.vector_store %arg8[%c0_33, %c0_34], %74 {strides = array<i32>} : memref<34x128xf32, #tpu.memory_space<vmem>>, vector<34x128xf32>,
    return
  }
  func.func @transform_0(%arg0: i32) -> (i32, i32) {
    %c0_i32 = arith.constant 0 : i32
    %c0_i32_0 = arith.constant 0 : i32
    return %arg0, %c0_i32 : i32, i32
  }
  func.func @transform_1(%arg0: i32) -> (i32, i32) {
    %c0_i32 = arith.constant 0 : i32
    %c0_i32_0 = arith.constant 0 : i32
    %c0_i32_1 = arith.constant 0 : i32
    return %c0_i32, %c0_i32_0 : i32, i32
  }
  func.func @transform_2(%arg0: i32) -> (i32, i32) {
    %c0_i32 = arith.constant 0 : i32
    %c0_i32_0 = arith.constant 0 : i32
    %c0_i32_1 = arith.constant 0 : i32
    return %c0_i32, %c0_i32_0 : i32, i32
  }
  func.func @transform_3(%arg0: i32) -> (i32, i32) {
    %c0_i32 = arith.constant 0 : i32
    %c0_i32_0 = arith.constant 0 : i32
    %c0_i32_1 = arith.constant 0 : i32
    return %c0_i32, %c0_i32_0 : i32, i32
  }
  func.func @transform_4(%arg0: i32) -> (i32, i32) {
    %c0_i32 = arith.constant 0 : i32
    %c0_i32_0 = arith.constant 0 : i32
    %c0_i32_1 = arith.constant 0 : i32
    return %c0_i32, %c0_i32_0 : i32, i32
  }
  func.func @transform_5(%arg0: i32) -> (i32, i32) {
    %c0_i32 = arith.constant 0 : i32
    %c0_i32_0 = arith.constant 0 : i32
    %c0_i32_1 = arith.constant 0 : i32
    return %c0_i32, %c0_i32_0 : i32, i32
  }
  func.func @transform_6(%arg0: i32) -> (i32, i32) {
    %c0_i32 = arith.constant 0 : i32
    %c0_i32_0 = arith.constant 0 : i32
    %c0_i32_1 = arith.constant 0 : i32
    return %c0_i32, %c0_i32_0 : i32, i32
  }
  func.func @transform_7(%arg0: i32) -> (i32, i32) {
    %c0_i32 = arith.constant 0 : i32
    %c0_i32_0 = arith.constant 0 : i32
    return %arg0, %c0_i32 : i32, i32
  }
}

module attributes {stable_mosaic.version = 11 : i64} {
  func.func @_layernorm_kernel(%arg0: i32, %arg1: memref<34x128xf32, #tpu.memory_space<vmem>>, %arg2: memref<1x128xf32, #tpu.memory_space<vmem>>, %arg3: memref<1x128xf32, #tpu.memory_space<vmem>>, %arg4: memref<34x128xf32, #tpu.memory_space<vmem>>) attributes {dimension_semantics = [#tpu.dimension_semantics<parallel>], iteration_bounds = array<i64: 1>, scalar_prefetch = 0 : i64, scratch_operands = 0 : i64, tpu.core_type = #tpu.core_type<tc>, window_params = [{transform_indices = @transform_0, window_bounds = array<i64: 34, 128>}, {pipeline_mode = #tpu.pipeline_mode<synchronous>, transform_indices = @transform_1, window_bounds = array<i64: 1, 128>}, {pipeline_mode = #tpu.pipeline_mode<synchronous>, transform_indices = @transform_2, window_bounds = array<i64: 1, 128>}, {transform_indices = @transform_3, window_bounds = array<i64: 34, 128>}]} {
    %c0 = arith.constant 0 : index
    %c0_0 = arith.constant 0 : index
    %0 = vector.load %arg1[%c0, %c0_0] : memref<34x128xf32, #tpu.memory_space<vmem>>, vector<34x128xf32>
    %c0_1 = arith.constant 0 : index
    %c0_2 = arith.constant 0 : index
    %1 = vector.load %arg2[%c0_1, %c0_2] : memref<1x128xf32, #tpu.memory_space<vmem>>, vector<1x128xf32>
    %c0_3 = arith.constant 0 : index
    %c0_4 = arith.constant 0 : index
    %2 = vector.load %arg3[%c0_3, %c0_4] : memref<1x128xf32, #tpu.memory_space<vmem>>, vector<1x128xf32>
    %cst = arith.constant dense<0.000000e+00> : vector<34xf32>
    %3 = vector.multi_reduction <add>, %0, %cst [1] : vector<34x128xf32> to vector<34xf32>
    %4 = vector.shape_cast %3 : vector<34xf32> to vector<34x1xf32>
    %cst_5 = arith.constant 1.280000e+02 : f32
    %5 = vector.broadcast %cst_5 : f32 to vector<34x1xf32>
    %6 = arith.divf %4, %5 : vector<34x1xf32>
    %7 = vector.broadcast %6 : vector<34x1xf32> to vector<34x128xf32>
    %8 = arith.subf %0, %7 : vector<34x128xf32>
    %9 = arith.mulf %8, %8 : vector<34x128xf32>
    %cst_6 = arith.constant dense<0.000000e+00> : vector<34xf32>
    %10 = vector.multi_reduction <add>, %9, %cst_6 [1] : vector<34x128xf32> to vector<34xf32>
    %11 = vector.shape_cast %10 : vector<34xf32> to vector<34x1xf32>
    %cst_7 = arith.constant 1.280000e+02 : f32
    %12 = vector.broadcast %cst_7 : f32 to vector<34x1xf32>
    %13 = arith.divf %11, %12 : vector<34x1xf32>
    %cst_8 = arith.constant 9.99999997E-7 : f32
    %14 = vector.broadcast %cst_8 : f32 to vector<34x1xf32>
    %15 = arith.addf %13, %14 : vector<34x1xf32>
    %16 = math.rsqrt %15 : vector<34x1xf32>
    %17 = vector.broadcast %16 : vector<34x1xf32> to vector<34x128xf32>
    %18 = arith.mulf %8, %17 : vector<34x128xf32>
    %19 = vector.broadcast %1 : vector<1x128xf32> to vector<34x128xf32>
    %20 = arith.mulf %18, %19 : vector<34x128xf32>
    %21 = vector.broadcast %2 : vector<1x128xf32> to vector<34x128xf32>
    %22 = arith.addf %20, %21 : vector<34x128xf32>
    %c0_9 = arith.constant 0 : index
    %c0_10 = arith.constant 0 : index
    %23 = vector.load %arg4[%c0_9, %c0_10] : memref<34x128xf32, #tpu.memory_space<vmem>>, vector<34x128xf32>
    tpu.vector_store %arg4[%c0_9, %c0_10], %22 {strides = array<i32>} : memref<34x128xf32, #tpu.memory_space<vmem>>, vector<34x128xf32>,
    return
  }
  func.func @transform_0(%arg0: i32) -> (i32, i32) {
    %c0_i32 = arith.constant 0 : i32
    %c0_i32_0 = arith.constant 0 : i32
    return %arg0, %c0_i32 : i32, i32
  }
  func.func @transform_1(%arg0: i32) -> (i32, i32) {
    %c0_i32 = arith.constant 0 : i32
    %c0_i32_0 = arith.constant 0 : i32
    %c0_i32_1 = arith.constant 0 : i32
    return %c0_i32, %c0_i32_0 : i32, i32
  }
  func.func @transform_2(%arg0: i32) -> (i32, i32) {
    %c0_i32 = arith.constant 0 : i32
    %c0_i32_0 = arith.constant 0 : i32
    %c0_i32_1 = arith.constant 0 : i32
    return %c0_i32, %c0_i32_0 : i32, i32
  }
  func.func @transform_3(%arg0: i32) -> (i32, i32) {
    %c0_i32 = arith.constant 0 : i32
    %c0_i32_0 = arith.constant 0 : i32
    return %arg0, %c0_i32 : i32, i32
  }
}

</mosaic_0001>

<llo_original>
// kernel: vit_feature_extractor.8
$region0: #{vit_feature_extractor.8}
  #allocation0 [shape = 'u32[]', space=smem, size = 0x4, offset = 0x4, fixed_abs, tag = 'smem constant byte address 0x4 - core index']
  #allocation1 [shape = 'u32[144,128]{1,0:T(1,128)}', space=vmem, size = 0x12000, scoped, tag = 'internal scratch']
  %s0 = inlined_call_operand.vmem [shape: bf16[32,768], index: 0, kind: input, shape index: {}]
  %s1 = inlined_call_operand.vmem [shape: bf16[768,128], index: 1, kind: input, shape index: {}]
  %s2 = inlined_call_operand.vmem [shape: f32[1,128], index: 2, kind: input, shape index: {}]
  %s3 = inlined_call_operand.vmem [shape: f32[32,128], index: 3, kind: output, shape index: {}]
  %s4 = sld [smem:[#allocation0]]
  $region45: #{vit_feature_extractor.8} parent=0
    _
  %s6 = ssub.s32 1, %s4
  %s7 = scalar_select 0, %s6, %s4
  loop: start=0, step=1, limit=4
  $region2: #{vit_feature_extractor.8} parent=0 // loop_pre_header
    _
  $region3: #{vit_feature_extractor.8} parent=0 // loop_header
    %s9 = sphi 0, %s13
    %p10 = scmp.ge.s32.totalorder %s9, 4
    %s19 = sphi 0, %s21
    %s22 = sphi 0, %s19
    %s23 = sphi 0, %s22
    %s39 = sphi 0, %s23
    %s43 = sphi 0, %s43
    %s45 = sphi 0, %s43
    %s46 = sphi 0, %s45
    %s60 = sphi 0, %s46
    %s64 = sphi 0, %s64
    %s66 = sphi 0, %s64
    %s67 = sphi 0, %s66
    %s81 = sphi 0, %s67
    %s87 = sphi 0, %s89
    %s90 = sphi 0, %s87
    %s91 = sphi 0, %s90
    %s107 = sphi 0, %s91
  $region4: #{vit_feature_extractor.8} parent=0 // loop_header_branch
    %12 = sbr.rel (%p10) target = $region8
  $region5: #{vit_feature_extractor.8} parent=0 // loop_body
    %s14 = ssub.s32 %s9, 1
    %s15 = ssub.s32 %s9, 2
    %s16 = sadd.s32 %s9, 1
    %s17 = ssub.s32 %s9, %s16
    %p18 = scmp.eq.s32.totalorder %s17, 0
    %s20 = sadd.s32 %s19, 1
    %s21 = scalar_select %p18, %s19, %s20
    %p24 = pneg %p18
    %p25 = scmp.eq.s32.totalorder %s9, 1
    %p26 = por %p24, %p25
    %p27 = scmp.ne.s32.totalorder %s19, %s22
    %p28 = scmp.eq.s32.totalorder %s9, 0
    %p29 = por %p27, %p28
    %p30 = scmp.ne.s32.totalorder %s19, %s22
    %p31 = scmp.eq.s32.totalorder %s14, 1
    %p32 = por %p30, %p31
    %p33 = scmp.ne.s32.totalorder %s22, %s23
    %p34 = scmp.eq.s32.totalorder %s14, 0
    %p35 = por %p33, %p34
    %p36 = scmp.ne.s32.totalorder %s22, %s23
    %p37 = scmp.eq.s32.totalorder %s15, 1
    %p38 = por %p36, %p37
    %p40 = scmp.ne.s32.totalorder %s23, %s39
    %p41 = scmp.eq.s32.totalorder %s15, 0
    %p42 = por %p40, %p41
    %s44 = sadd.s32 %s43, 1
    %p47 = scmp.eq.s32.totalorder %s9, 1
    %p48 = scmp.ne.s32.totalorder %s43, %s45
    %p49 = scmp.eq.s32.totalorder %s9, 0
    %p50 = por %p48, %p49
    %p51 = scmp.ne.s32.totalorder %s43, %s45
    %p52 = scmp.eq.s32.totalorder %s14, 1
    %p53 = por %p51, %p52
    %p54 = scmp.ne.s32.totalorder %s45, %s46
    %p55 = scmp.eq.s32.totalorder %s14, 0
    %p56 = por %p54, %p55
    %p57 = scmp.ne.s32.totalorder %s45, %s46
    %p58 = scmp.eq.s32.totalorder %s15, 1
    %p59 = por %p57, %p58
    %p61 = scmp.ne.s32.totalorder %s46, %s60
    %p62 = scmp.eq.s32.totalorder %s15, 0
    %p63 = por %p61, %p62
    %s65 = sadd.s32 %s64, 1
    %p68 = scmp.eq.s32.totalorder %s9, 1
    %p69 = scmp.ne.s32.totalorder %s64, %s66
    %p70 = scmp.eq.s32.totalorder %s9, 0
    %p71 = por %p69, %p70
    %p72 = scmp.ne.s32.totalorder %s64, %s66
    %p73 = scmp.eq.s32.totalorder %s14, 1
    %p74 = por %p72, %p73
    %p75 = scmp.ne.s32.totalorder %s66, %s67
    %p76 = scmp.eq.s32.totalorder %s14, 0
    %p77 = por %p75, %p76
    %p78 = scmp.ne.s32.totalorder %s66, %s67
    %p79 = scmp.eq.s32.totalorder %s15, 1
    %p80 = por %p78, %p79
    %p82 = scmp.ne.s32.totalorder %s67, %s81
    %p83 = scmp.eq.s32.totalorder %s15, 0
    %p84 = por %p82, %p83
    %s85 = ssub.s32 %s9, %s16
    %p86 = scmp.eq.s32.totalorder %s85, 0
    %s88 = sadd.s32 %s87, 1
    %s89 = scalar_select %p86, %s87, %s88
    %p92 = pneg %p86
    %p93 = scmp.eq.s32.totalorder %s9, 1
    %p94 = por %p92, %p93
    %p95 = scmp.ne.s32.totalorder %s87, %s90
    %p96 = scmp.eq.s32.totalorder %s9, 0
    %p97 = por %p95, %p96
    %p98 = scmp.ne.s32.totalorder %s87, %s90
    %p99 = scmp.eq.s32.totalorder %s14, 1
    %p100 = por %p98, %p99
    %p101 = scmp.ne.s32.totalorder %s90, %s91
    %p102 = scmp.eq.s32.totalorder %s14, 0
    %p103 = por %p101, %p102
    %p104 = scmp.ne.s32.totalorder %s90, %s91
    %p105 = scmp.eq.s32.totalorder %s15, 1
    %p106 = por %p104, %p105
    %p108 = scmp.ne.s32.totalorder %s91, %s107
    %p109 = scmp.eq.s32.totalorder %s15, 0
    %p110 = por %p108, %p109
    %p111 = scmp.le.s32.totalorder 1, %s9
    %p112 = scmp.lt.s32.totalorder %s9, 3
    %p113 = pnand %p111, %p112
    %p114 = pneg %p113
    // Predicated region
    $region9: #{vit_feature_extractor.8} parent=5 // pred_check
      _
    $region10: #{vit_feature_extractor.8} parent=5 // pred_check_branch
      %116 = sbr.rel (%p113) target = $region12
    $region11: #{vit_feature_extractor.8} parent=5 // pred_region
      %s117 = ssub.s32 %s9, 1
      // Predicated region
      $region13: #{vit_feature_extractor.8} parent=11 // pred_check
        %p118 = pneg %p56
      $region14: #{vit_feature_extractor.8} parent=11 // pred_check_branch
        %120 = sbr.rel (%p118) target = $region16
      $region15: #{vit_feature_extractor.8} parent=11 // pred_region
        _
      $region16: #{vit_feature_extractor.8} parent=11 // pred_fallthru
        _
      // Predicated region
      $region17: #{vit_feature_extractor.8} parent=11 // pred_check
        %p121 = pneg %p77
      $region18: #{vit_feature_extractor.8} parent=11 // pred_check_branch
        %123 = sbr.rel (%p121) target = $region20
      $region19: #{vit_feature_extractor.8} parent=11 // pred_region
        _
      $region20: #{vit_feature_extractor.8} parent=11 // pred_fallthru
        _
    $region12: #{vit_feature_extractor.8} parent=5 // pred_fallthru
      _
    %p124 = scmp.lt.s32.totalorder %s9, 2
    // Predicated region
    $region21: #{vit_feature_extractor.8} parent=5 // pred_check
      %p125 = pneg %p124
    $region22: #{vit_feature_extractor.8} parent=5 // pred_check_branch
      %127 = sbr.rel (%p125) target = $region24
    $region23: #{vit_feature_extractor.8} parent=5 // pred_region
      // Predicated region
      $region25: #{vit_feature_extractor.8} parent=23 // pred_check
        %p128 = pneg %p29
      $region26: #{vit_feature_extractor.8} parent=23 // pred_check_branch
        %130 = sbr.rel (%p128) target = $region28
      $region27: #{vit_feature_extractor.8} parent=23 // pred_region
        %s131 = smul.u32 2, %s9
        %p132 = scmp.lt.s32.totalorder %s131, 3
        %s133 = scalar_select %p132, %s131, 3
        %s134 = smul.addr %s133, 6
        %s135 = smul.addr %s134, 4
        %s136 = scalar_lea.vmem %s0, %s135
        %s137 = smul.u32 2, %s9
      $region28: #{vit_feature_extractor.8} parent=23 // pred_fallthru
        _
    $region24: #{vit_feature_extractor.8} parent=5 // pred_fallthru
      _
    %p138 = scmp.le.s32.totalorder 1, %s9
    %p139 = scmp.lt.s32.totalorder %s9, 3
    %p140 = pnand %p138, %p139
    %p141 = pneg %p140
    // Predicated region
    $region29: #{vit_feature_extractor.8} parent=5 // pred_check
      _
    $region30: #{vit_feature_extractor.8} parent=5 // pred_check_branch
      %143 = sbr.rel (%p140) target = $region32
    $region31: #{vit_feature_extractor.8} parent=5 // pred_region
      %s144 = ssub.s32 %s9, 1
      %s145 = smul.u32 2, %s14
      %p146 = scmp.lt.s32.totalorder %s145, 3
      %s147 = scalar_select %p146, %s145, 3
      %s148 = smul.addr %s147, 6
      %s149 = smul.addr %s148, 4
      %s150 = scalar_lea.vmem %s0, %s149
      %p151 = pneg %p35
      %p152 = pneg %p32
      %p153 = pneg %p56
      %p154 = pneg %p53
      %p155 = pneg %p77
      %p156 = pneg %p74
      %p157 = pneg %p103
      %p158 = pneg %p100
      %s159 = smul.u32 2, %s14
      %p160 = scmp.lt.s32.totalorder %s159, 3
      %s161 = scalar_select %p160, %s159, 3
      %s162 = smul.addr %s161, 8
      %s163 = scalar_lea.vmem %s3, %s162
      %s164 = smul.u32 2, %s14
      %p165 = scmp.lt.s32.totalorder %s164, 3
      %s166 = scalar_select %p165, %s164, 3
      %s167 = smul.addr %s166, 6
      %s168 = smul.addr %s167, 4
      %s169 = scalar_lea.vmem %s0, %s168
      %s170 = smul.u32 2, %s14
      %s171 = smul.u32 2, %s14
      %p172 = scmp.lt.s32.totalorder %s171, 3
      %s173 = scalar_select %p172, %s171, 3
      %s174 = smul.addr %s173, 8
      %s175 = scalar_lea.vmem %s3, %s174
      %s176 = smul.u32 2, %s14
      %v178 = vld [vmem:[%s169] sm:$0xff]
      %v179 = vld [vmem:[%s169 + $0x8] sm:$0xff]
      %v180 = vld [vmem:[%s169 + $0x10] sm:$0xff]
      %v181 = vld [vmem:[%s169 + $0x18] sm:$0xff]
      %v182 = vld [vmem:[%s169 + $0x20] sm:$0xff]
      %v183 = vld [vmem:[%s169 + $0x28] sm:$0xff]
      %v184 = vld [vmem:[%s1] sm:$0xf]
      %v185 = vld [vmem:[%s1 + $0x4] sm:$0xf]
      %v186 = vld [vmem:[%s1 + $0x8] sm:$0xf]
      %v187 = vld [vmem:[%s1 + $0xc] sm:$0xf]
      %v188 = vld [vmem:[%s1 + $0x10] sm:$0xf]
      %v189 = vld [vmem:[%s1 + $0x14] sm:$0xf]
      %v190 = vld [vmem:[%s1 + $0x18] sm:$0xf]
      %v191 = vld [vmem:[%s1 + $0x1c] sm:$0xf]
      %v192 = vld [vmem:[%s1 + $0x20] sm:$0xf]
      %v193 = vld [vmem:[%s1 + $0x24] sm:$0xf]
      %v194 = vld [vmem:[%s1 + $0x28] sm:$0xf]
      %v195 = vld [vmem:[%s1 + $0x2c] sm:$0xf]
      %v196 = vld [vmem:[%s1 + $0x30] sm:$0xf]
      %v197 = vld [vmem:[%s1 + $0x34] sm:$0xf]
      %v198 = vld [vmem:[%s1 + $0x38] sm:$0xf]
      %v199 = vld [vmem:[%s1 + $0x3c] sm:$0xf]
      %v200 = vld [vmem:[%s1 + $0x40] sm:$0xf]
      %v201 = vld [vmem:[%s1 + $0x44] sm:$0xf]
      %v202 = vld [vmem:[%s1 + $0x48] sm:$0xf]
      %v203 = vld [vmem:[%s1 + $0x4c] sm:$0xf]
      %v204 = vld [vmem:[%s1 + $0x50] sm:$0xf]
      %v205 = vld [vmem:[%s1 + $0x54] sm:$0xf]
      %v206 = vld [vmem:[%s1 + $0x58] sm:$0xf]
      %v207 = vld [vmem:[%s1 + $0x5c] sm:$0xf]
      %v208 = vld [vmem:[%s1 + $0x60] sm:$0xf]
      %v209 = vld [vmem:[%s1 + $0x64] sm:$0xf]
      %v210 = vld [vmem:[%s1 + $0x68] sm:$0xf]
      %v211 = vld [vmem:[%s1 + $0x6c] sm:$0xf]
      %v212 = vld [vmem:[%s1 + $0x70] sm:$0xf]
      %v213 = vld [vmem:[%s1 + $0x74] sm:$0xf]
      %v214 = vld [vmem:[%s1 + $0x78] sm:$0xf]
      %v215 = vld [vmem:[%s1 + $0x7c] sm:$0xf]
      %v216 = vld [vmem:[%s1 + $0x80] sm:$0xf]
      %v217 = vld [vmem:[%s1 + $0x84] sm:$0xf]
      %v218 = vld [vmem:[%s1 + $0x88] sm:$0xf]
      %v219 = vld [vmem:[%s1 + $0x8c] sm:$0xf]
      %v220 = vld [vmem:[%s1 + $0x90] sm:$0xf]
      %v221 = vld [vmem:[%s1 + $0x94] sm:$0xf]
      %v222 = vld [vmem:[%s1 + $0x98] sm:$0xf]
      %v223 = vld [vmem:[%s1 + $0x9c] sm:$0xf]
      %v224 = vld [vmem:[%s1 + $0xa0] sm:$0xf]
      %v225 = vld [vmem:[%s1 + $0xa4] sm:$0xf]
      %v226 = vld [vmem:[%s1 + $0xa8] sm:$0xf]
      %v227 = vld [vmem:[%s1 + $0xac] sm:$0xf]
      %v228 = vld [vmem:[%s1 + $0xb0] sm:$0xf]
      %v229 = vld [vmem:[%s1 + $0xb4] sm:$0xf]
      %v230 = vld [vmem:[%s1 + $0xb8] sm:$0xf]
      %v231 = vld [vmem:[%s1 + $0xbc] sm:$0xf]
      %v232 = vld [vmem:[%s1 + $0xc0] sm:$0xf]
      %v233 = vld [vmem:[%s1 + $0xc4] sm:$0xf]
      %v234 = vld [vmem:[%s1 + $0xc8] sm:$0xf]
      %v235 = vld [vmem:[%s1 + $0xcc] sm:$0xf]
      %v236 = vld [vmem:[%s1 + $0xd0] sm:$0xf]
      %v237 = vld [vmem:[%s1 + $0xd4] sm:$0xf]
      %v238 = vld [vmem:[%s1 + $0xd8] sm:$0xf]
      %v239 = vld [vmem:[%s1 + $0xdc] sm:$0xf]
      %v240 = vld [vmem:[%s1 + $0xe0] sm:$0xf]
      %v241 = vld [vmem:[%s1 + $0xe4] sm:$0xf]
      %v242 = vld [vmem:[%s1 + $0xe8] sm:$0xf]
      %v243 = vld [vmem:[%s1 + $0xec] sm:$0xf]
      %v244 = vld [vmem:[%s1 + $0xf0] sm:$0xf]
      %v245 = vld [vmem:[%s1 + $0xf4] sm:$0xf]
      %v246 = vld [vmem:[%s1 + $0xf8] sm:$0xf]
      %v247 = vld [vmem:[%s1 + $0xfc] sm:$0xf]
      %v248 = vld [vmem:[%s1 + $0x100] sm:$0xf]
      %v249 = vld [vmem:[%s1 + $0x104] sm:$0xf]
      %v250 = vld [vmem:[%s1 + $0x108] sm:$0xf]
      %v251 = vld [vmem:[%s1 + $0x10c] sm:$0xf]
      %v252 = vld [vmem:[%s1 + $0x110] sm:$0xf]
      %v253 = vld [vmem:[%s1 + $0x114] sm:$0xf]
      %v254 = vld [vmem:[%s1 + $0x118] sm:$0xf]
      %v255 = vld [vmem:[%s1 + $0x11c] sm:$0xf]
      %v256 = vld [vmem:[%s1 + $0x120] sm:$0xf]
      %v257 = vld [vmem:[%s1 + $0x124] sm:$0xf]
      %v258 = vld [vmem:[%s1 + $0x128] sm:$0xf]
      %v259 = vld [vmem:[%s1 + $0x12c] sm:$0xf]
      %v260 = vld [vmem:[%s1 + $0x130] sm:$0xf]
      %v261 = vld [vmem:[%s1 + $0x134] sm:$0xf]
      %v262 = vld [vmem:[%s1 + $0x138] sm:$0xf]
      %v263 = vld [vmem:[%s1 + $0x13c] sm:$0xf]
      %v264 = vld [vmem:[%s1 + $0x140] sm:$0xf]
      %v265 = vld [vmem:[%s1 + $0x144] sm:$0xf]
      %v266 = vld [vmem:[%s1 + $0x148] sm:$0xf]
      %v267 = vld [vmem:[%s1 + $0x14c] sm:$0xf]
      %v268 = vld [vmem:[%s1 + $0x150] sm:$0xf]
      %v269 = vld [vmem:[%s1 + $0x154] sm:$0xf]
      %v270 = vld [vmem:[%s1 + $0x158] sm:$0xf]
      %v271 = vld [vmem:[%s1 + $0x15c] sm:$0xf]
      %v272 = vld [vmem:[%s1 + $0x160] sm:$0xf]
      %v273 = vld [vmem:[%s1 + $0x164] sm:$0xf]
      %v274 = vld [vmem:[%s1 + $0x168] sm:$0xf]
      %v275 = vld [vmem:[%s1 + $0x16c] sm:$0xf]
      %v276 = vld [vmem:[%s1 + $0x170] sm:$0xf]
      %v277 = vld [vmem:[%s1 + $0x174] sm:$0xf]
      %v278 = vld [vmem:[%s1 + $0x178] sm:$0xf]
      %v279 = vld [vmem:[%s1 + $0x17c] sm:$0xf]
      %v280 = vld [vmem:[%s2] sm:$0x1]
      %v282 = vlaneseq
      %v283 = vshrl.u32 %v282, 7
      %v284 = vsub.s32 0, %v283
      %v285 = vrot.slane %v280, %v284
      %v293 = vunpack.c.l.b16 %v178
      %v294 = vunpack.c.h.b16 %v178
      %v295 = vunpack.c.l.b16 %v179
      %v296 = vunpack.c.h.b16 %v179
      %v297 = vunpack.c.l.b16 %v180
      %v298 = vunpack.c.h.b16 %v180
      %v299 = vunpack.c.l.b16 %v181
      %v300 = vunpack.c.h.b16 %v181
      %v301 = vunpack.c.l.b16 %v182
      %v302 = vunpack.c.h.b16 %v182
      %v303 = vunpack.c.l.b16 %v183
      %v304 = vunpack.c.h.b16 %v183
      %v305 = vpack.c.b16 %v299, %v293
      %v306 = vpack.c.b16 %v300, %v294
      %v307 = vpack.c.b16 %v301, %v295
      %v308 = vpack.c.b16 %v302, %v296
      %v309 = vpack.c.b16 %v303, %v297
      %v310 = vpack.c.b16 %v304, %v298
      %v413 = vunpack.c.l.b16 %v184
      %v414 = vunpack.c.l.b16 %v185
      %v415 = vunpack.c.l.b16 %v186
      %v416 = vunpack.c.l.b16 %v187
      %v417 = vunpack.c.l.b16 %v188
      %v418 = vunpack.c.l.b16 %v189
      %v419 = vunpack.c.l.b16 %v190
      %v420 = vunpack.c.l.b16 %v191
      %v421 = vunpack.c.l.b16 %v192
      %v422 = vunpack.c.l.b16 %v193
      %v423 = vunpack.c.l.b16 %v194
      %v424 = vunpack.c.l.b16 %v195
      %v425 = vunpack.c.l.b16 %v196
      %v426 = vunpack.c.l.b16 %v197
      %v427 = vunpack.c.l.b16 %v198
      %v428 = vunpack.c.l.b16 %v199
      %v429 = vunpack.c.l.b16 %v200
      %v430 = vunpack.c.l.b16 %v201
      %v431 = vunpack.c.l.b16 %v202
      %v432 = vunpack.c.l.b16 %v203
      %v433 = vunpack.c.l.b16 %v204
      %v434 = vunpack.c.l.b16 %v205
      %v435 = vunpack.c.l.b16 %v206
      %v436 = vunpack.c.l.b16 %v207
      %v437 = vunpack.c.l.b16 %v208
      %v438 = vunpack.c.l.b16 %v209
      %v439 = vunpack.c.l.b16 %v210
      %v440 = vunpack.c.l.b16 %v211
      %v441 = vunpack.c.l.b16 %v212
      %v442 = vunpack.c.l.b16 %v213
      %v443 = vunpack.c.l.b16 %v214
      %v444 = vunpack.c.l.b16 %v215
      %v445 = vunpack.c.l.b16 %v216
      %v446 = vunpack.c.l.b16 %v217
      %v447 = vunpack.c.l.b16 %v218
      %v448 = vunpack.c.l.b16 %v219
      %v449 = vunpack.c.l.b16 %v220
      %v450 = vunpack.c.l.b16 %v221
      %v451 = vunpack.c.l.b16 %v222
      %v452 = vunpack.c.l.b16 %v223
      %v453 = vunpack.c.l.b16 %v224
      %v454 = vunpack.c.l.b16 %v225
      %v455 = vunpack.c.l.b16 %v226
      %v456 = vunpack.c.l.b16 %v227
      %v457 = vunpack.c.l.b16 %v228
      %v458 = vunpack.c.l.b16 %v229
      %v459 = vunpack.c.l.b16 %v230
      %v460 = vunpack.c.l.b16 %v231
      %v461 = vunpack.c.l.b16 %v232
      %v462 = vunpack.c.l.b16 %v233
      %v463 = vunpack.c.l.b16 %v234
      %v464 = vunpack.c.l.b16 %v235
      %v465 = vunpack.c.l.b16 %v236
      %v466 = vunpack.c.l.b16 %v237
      %v467 = vunpack.c.l.b16 %v238
      %v468 = vunpack.c.l.b16 %v239
      %v469 = vunpack.c.l.b16 %v240
      %v470 = vunpack.c.l.b16 %v241
      %v471 = vunpack.c.l.b16 %v242
      %v472 = vunpack.c.l.b16 %v243
      %v473 = vunpack.c.l.b16 %v244
      %v474 = vunpack.c.l.b16 %v245
      %v475 = vunpack.c.l.b16 %v246
      %v476 = vunpack.c.l.b16 %v247
      %v477 = vunpack.c.l.b16 %v248
      %v478 = vunpack.c.l.b16 %v249
      %v479 = vunpack.c.l.b16 %v250
      %v480 = vunpack.c.l.b16 %v251
      %v481 = vunpack.c.l.b16 %v252
      %v482 = vunpack.c.l.b16 %v253
      %v483 = vunpack.c.l.b16 %v254
      %v484 = vunpack.c.l.b16 %v255
      %v485 = vunpack.c.l.b16 %v256
      %v486 = vunpack.c.l.b16 %v257
      %v487 = vunpack.c.l.b16 %v258
      %v488 = vunpack.c.l.b16 %v259
      %v489 = vunpack.c.l.b16 %v260
      %v490 = vunpack.c.l.b16 %v261
      %v491 = vunpack.c.l.b16 %v262
      %v492 = vunpack.c.l.b16 %v263
      %v493 = vunpack.c.l.b16 %v264
      %v494 = vunpack.c.l.b16 %v265
      %v495 = vunpack.c.l.b16 %v266
      %v496 = vunpack.c.l.b16 %v267
      %v497 = vunpack.c.l.b16 %v268
      %v498 = vunpack.c.l.b16 %v269
      %v499 = vunpack.c.l.b16 %v270
      %v500 = vunpack.c.l.b16 %v271
      %v501 = vunpack.c.l.b16 %v272
      %v502 = vunpack.c.l.b16 %v273
      %v503 = vunpack.c.l.b16 %v274
      %v504 = vunpack.c.l.b16 %v275
      %v505 = vunpack.c.l.b16 %v276
      %v506 = vunpack.c.l.b16 %v277
      %v507 = vunpack.c.l.b16 %v278
      %v508 = vunpack.c.l.b16 %v279
      %v509 = vpack.c.b16 %v414, %v413
      %v510 = vpack.c.b16 %v416, %v415
      %v511 = vpack.c.b16 %v418, %v417
      %v512 = vpack.c.b16 %v420, %v419
      %v513 = vpack.c.b16 %v422, %v421
      %v514 = vpack.c.b16 %v424, %v423
      %v515 = vpack.c.b16 %v426, %v425
      %v516 = vpack.c.b16 %v428, %v427
      %v517 = vpack.c.b16 %v430, %v429
      %v518 = vpack.c.b16 %v432, %v431
      %v519 = vpack.c.b16 %v434, %v433
      %v520 = vpack.c.b16 %v436, %v435
      %v521 = vpack.c.b16 %v438, %v437
      %v522 = vpack.c.b16 %v440, %v439
      %v523 = vpack.c.b16 %v442, %v441
      %v524 = vpack.c.b16 %v444, %v443
      %v525 = vpack.c.b16 %v446, %v445
      %v526 = vpack.c.b16 %v448, %v447
      %v527 = vpack.c.b16 %v450, %v449
      %v528 = vpack.c.b16 %v452, %v451
      %v529 = vpack.c.b16 %v454, %v453
      %v530 = vpack.c.b16 %v456, %v455
      %v531 = vpack.c.b16 %v458, %v457
      %v532 = vpack.c.b16 %v460, %v459
      %v533 = vpack.c.b16 %v462, %v461
      %v534 = vpack.c.b16 %v464, %v463
      %v535 = vpack.c.b16 %v466, %v465
      %v536 = vpack.c.b16 %v468, %v467
      %v537 = vpack.c.b16 %v470, %v469
      %v538 = vpack.c.b16 %v472, %v471
      %v539 = vpack.c.b16 %v474, %v473
      %v540 = vpack.c.b16 %v476, %v475
      %v541 = vpack.c.b16 %v478, %v477
      %v542 = vpack.c.b16 %v480, %v479
      %v543 = vpack.c.b16 %v482, %v481
      %v544 = vpack.c.b16 %v484, %v483
      %v545 = vpack.c.b16 %v486, %v485
      %v546 = vpack.c.b16 %v488, %v487
      %v547 = vpack.c.b16 %v490, %v489
      %v548 = vpack.c.b16 %v492, %v491
      %v549 = vpack.c.b16 %v494, %v493
      %v550 = vpack.c.b16 %v496, %v495
      %v551 = vpack.c.b16 %v498, %v497
      %v552 = vpack.c.b16 %v500, %v499
      %v553 = vpack.c.b16 %v502, %v501
      %v554 = vpack.c.b16 %v504, %v503
      %v555 = vpack.c.b16 %v506, %v505
      %v556 = vpack.c.b16 %v508, %v507
      %605 = vmatprep.subr.bf16.mxu0 0
      %606 = vmatpush1.bf16.msra.mxu0 %v516
      %607 = vmatprep.subr.bf16.mxu0 0
      %608 = vmatpush1.bf16.msra.mxu0 %v515
      %609 = vmatprep.subr.bf16.mxu0 0
      %610 = vmatpush1.bf16.msra.mxu0 %v514
      %611 = vmatprep.subr.bf16.mxu0 0
      %612 = vmatpush1.bf16.msra.mxu0 %v513
      %613 = vmatprep.subr.bf16.mxu0 0
      %614 = vmatpush1.bf16.msra.mxu0 %v512
      %615 = vmatprep.subr.bf16.mxu0 0
      %616 = vmatpush1.bf16.msra.mxu0 %v511
      %617 = vmatprep.subr.bf16.mxu0 0
      %618 = vmatpush1.bf16.msra.mxu0 %v510
      %619 = vmatprep.subr.bf16.mxu0 0
      %620 = vmatpush1.bf16.msra.mxu0 %v509
      %621 = vmatprep.subr.bf16.mxu0 0
      %622 = vmatpush2.bf16.msra.mxu0 %v524
      %623 = vmatprep.subr.bf16.mxu0 0
      %624 = vmatpush2.bf16.msra.mxu0 %v523
      %625 = vmatprep.subr.bf16.mxu0 0
      %626 = vmatpush2.bf16.msra.mxu0 %v522
      %627 = vmatprep.subr.bf16.mxu0 0
      %628 = vmatpush2.bf16.msra.mxu0 %v521
      %629 = vmatprep.subr.bf16.mxu0 0
      %630 = vmatpush2.bf16.msra.mxu0 %v520
      %631 = vmatprep.subr.bf16.mxu0 0
      %632 = vmatpush2.bf16.msra.mxu0 %v519
      %633 = vmatprep.subr.bf16.mxu0 0
      %634 = vmatpush2.bf16.msra.mxu0 %v518
      %635 = vmatprep.subr.bf16.mxu0 0
      %636 = vmatpush2.bf16.msra.mxu0 %v517
      %637 = vmatprep.mubr.bf16.mxu0 %v306
      %638 = vmatmul.mubr.bf16.gmra.mxu0 %v305
      %v639 = vpop.f32.mrf.mxu0
      %v640 = vadd.f32 %v285, %v639
      %v641 = vpop.f32.mrf.mxu0
      %v642 = vpop.f32.mrf.mxu0
      %v643 = vadd.f32 %v285, %v642
      %v644 = vpop.f32.mrf.mxu0
      %645 = vdwg.mxu0
      %646 = vmatprep.subr.bf16.mxu0 0
      %647 = vmatpush1.bf16.msra.mxu0 %v532
      %648 = vmatprep.subr.bf16.mxu0 0
      %649 = vmatpush1.bf16.msra.mxu0 %v531
      %650 = vmatprep.subr.bf16.mxu0 0
      %651 = vmatpush1.bf16.msra.mxu0 %v530
      %652 = vmatprep.subr.bf16.mxu0 0
      %653 = vmatpush1.bf16.msra.mxu0 %v529
      %654 = vmatprep.subr.bf16.mxu0 0
      %655 = vmatpush1.bf16.msra.mxu0 %v528
      %656 = vmatprep.subr.bf16.mxu0 0
      %657 = vmatpush1.bf16.msra.mxu0 %v527
      %658 = vmatprep.subr.bf16.mxu0 0
      %659 = vmatpush1.bf16.msra.mxu0 %v526
      %660 = vmatprep.subr.bf16.mxu0 0
      %661 = vmatpush1.bf16.msra.mxu0 %v525
      %662 = vmatprep.subr.bf16.mxu0 0
      %663 = vmatpush2.bf16.msra.mxu0 %v540
      %664 = vmatprep.subr.bf16.mxu0 0
      %665 = vmatpush2.bf16.msra.mxu0 %v539
      %666 = vmatprep.subr.bf16.mxu0 0
      %667 = vmatpush2.bf16.msra.mxu0 %v538
      %668 = vmatprep.subr.bf16.mxu0 0
      %669 = vmatpush2.bf16.msra.mxu0 %v537
      %670 = vmatprep.subr.bf16.mxu0 0
      %671 = vmatpush2.bf16.msra.mxu0 %v536
      %672 = vmatprep.subr.bf16.mxu0 0
      %673 = vmatpush2.bf16.msra.mxu0 %v535
      %674 = vmatprep.subr.bf16.mxu0 0
      %675 = vmatpush2.bf16.msra.mxu0 %v534
      %676 = vmatprep.subr.bf16.mxu0 0
      %677 = vmatpush2.bf16.msra.mxu0 %v533
      %678 = vmatprep.mubr.bf16.mxu0 %v308
      %679 = vmatmul.mubr.bf16.gmra.mxu0 %v307
      %v680 = vpop.f32.mrf.mxu0
      %v681 = vadd.f32 %v640, %v680
      %v682 = vpop.f32.mrf.mxu0
      %v683 = vpop.f32.mrf.mxu0
      %v684 = vadd.f32 %v643, %v683
      %v685 = vpop.f32.mrf.mxu0
      %686 = vdwg.mxu0
      %687 = vmatprep.subr.bf16.mxu0 0
      %688 = vmatpush1.bf16.msra.mxu0 %v548
      %689 = vmatprep.subr.bf16.mxu0 0
      %690 = vmatpush1.bf16.msra.mxu0 %v547
      %691 = vmatprep.subr.bf16.mxu0 0
      %692 = vmatpush1.bf16.msra.mxu0 %v546
      %693 = vmatprep.subr.bf16.mxu0 0
      %694 = vmatpush1.bf16.msra.mxu0 %v545
      %695 = vmatprep.subr.bf16.mxu0 0
      %696 = vmatpush1.bf16.msra.mxu0 %v544
      %697 = vmatprep.subr.bf16.mxu0 0
      %698 = vmatpush1.bf16.msra.mxu0 %v543
      %699 = vmatprep.subr.bf16.mxu0 0
      %700 = vmatpush1.bf16.msra.mxu0 %v542
      %701 = vmatprep.subr.bf16.mxu0 0
      %702 = vmatpush1.bf16.msra.mxu0 %v541
      %703 = vmatprep.subr.bf16.mxu0 0
      %704 = vmatpush2.bf16.msra.mxu0 %v556
      %705 = vmatprep.subr.bf16.mxu0 0
      %706 = vmatpush2.bf16.msra.mxu0 %v555
      %707 = vmatprep.subr.bf16.mxu0 0
      %708 = vmatpush2.bf16.msra.mxu0 %v554
      %709 = vmatprep.subr.bf16.mxu0 0
      %710 = vmatpush2.bf16.msra.mxu0 %v553
      %711 = vmatprep.subr.bf16.mxu0 0
      %712 = vmatpush2.bf16.msra.mxu0 %v552
      %713 = vmatprep.subr.bf16.mxu0 0
      %714 = vmatpush2.bf16.msra.mxu0 %v551
      %715 = vmatprep.subr.bf16.mxu0 0
      %716 = vmatpush2.bf16.msra.mxu0 %v550
      %717 = vmatprep.subr.bf16.mxu0 0
      %718 = vmatpush2.bf16.msra.mxu0 %v549
      %719 = vmatprep.mubr.bf16.mxu0 %v310
      %720 = vmatmul.mubr.bf16.gmra.mxu0 %v309
      %v721 = vpop.f32.mrf.mxu0
      %v722 = vadd.f32 %v681, %v721
      %v723 = vpop.f32.mrf.mxu0
      %v724 = vpop.f32.mrf.mxu0
      %v725 = vadd.f32 %v684, %v724
      %v726 = vpop.f32.mrf.mxu0
      %727 = vdwg.mxu0
      %728 = vst [vmem:[%s175] sm:$0xff] %v722
      %729 = vst [vmem:[%s175 + $0x8] sm:$0xff] %v725
      %s730 = smul.u32 2, %s14
      %p731 = scmp.lt.s32.totalorder %s730, 3
      %s732 = scalar_select %p731, %s730, 3
      %s733 = smul.addr %s732, 8
      %s734 = scalar_lea.vmem %s3, %s733
      // Predicated region
      $region33: #{vit_feature_extractor.8} parent=31 // pred_check
        %p735 = pneg %p100
      $region34: #{vit_feature_extractor.8} parent=31 // pred_check_branch
        %737 = sbr.rel (%p735) target = $region36
      $region35: #{vit_feature_extractor.8} parent=31 // pred_region
        %s738 = smul.u32 2, %s14
      $region36: #{vit_feature_extractor.8} parent=31 // pred_fallthru
        _
    $region32: #{vit_feature_extractor.8} parent=5 // pred_fallthru
      _
    %p739 = scmp.le.s32.totalorder 2, %s9
    // Predicated region
    $region37: #{vit_feature_extractor.8} parent=5 // pred_check
      %p740 = pneg %p739
    $region38: #{vit_feature_extractor.8} parent=5 // pred_check_branch
      %742 = sbr.rel (%p740) target = $region40
    $region39: #{vit_feature_extractor.8} parent=5 // pred_region
      %s743 = ssub.s32 %s9, 2
      // Predicated region
      $region41: #{vit_feature_extractor.8} parent=39 // pred_check
        %p744 = pneg %p106
      $region42: #{vit_feature_extractor.8} parent=39 // pred_check_branch
        %746 = sbr.rel (%p744) target = $region44
      $region43: #{vit_feature_extractor.8} parent=39 // pred_region
        %s747 = smul.u32 2, %s15
        %p748 = scmp.lt.s32.totalorder %s747, 3
        %s749 = scalar_select %p748, %s747, 3
        %s750 = smul.addr %s749, 8
        %s751 = scalar_lea.vmem %s3, %s750
      $region44: #{vit_feature_extractor.8} parent=39 // pred_fallthru
        _
    $region40: #{vit_feature_extractor.8} parent=5 // pred_fallthru
      _
  $region6: #{vit_feature_extractor.8} parent=0 // loop_footer
    %s13 = sadd.s32 1, %s9
  $region7: #{vit_feature_extractor.8} parent=0 // loop_footer_branch
    %8 = sbr.rel target = $region3
  $region8: #{vit_feature_extractor.8} parent=0 // loop_exit
    _

// kernel: vit_feature_extractor.9
$region0: #{vit_feature_extractor.9}
  #allocation0 [shape = 'u32[]', space=smem, size = 0x4, offset = 0x4, fixed_abs, tag = 'smem constant byte address 0x4 - core index']
  #allocation1 [shape = 'u32[144,128]{1,0:T(1,128)}', space=vmem, size = 0x12000, scoped, tag = 'internal scratch']
  %s0 = inlined_call_operand.vmem [shape: f32[34,128], index: 0, kind: input, shape index: {}]
  %s1 = inlined_call_operand.vmem [shape: f32[1,128], index: 1, kind: input, shape index: {}]
  %s2 = inlined_call_operand.vmem [shape: f32[1,128], index: 2, kind: input, shape index: {}]
  %s3 = inlined_call_operand.vmem [shape: bf16[128,384], index: 3, kind: input, shape index: {}]
  %s4 = inlined_call_operand.vmem [shape: f32[1,384], index: 4, kind: input, shape index: {}]
  %s5 = inlined_call_operand.vmem [shape: bf16[34,384], index: 5, kind: output, shape index: {}]
  %s6 = sld [smem:[#allocation0]]
  $region30: #{vit_feature_extractor.9} parent=0
    _
  %s8 = ssub.s32 1, %s6
  %s9 = scalar_select 0, %s8, %s6
  // Predicated region
  $region2: #{vit_feature_extractor.9} parent=0 // pred_check
    _
  $region3: #{vit_feature_extractor.9} parent=0 // pred_check_branch
    %11 = sbr.rel (0) target = $region5
  $region4: #{vit_feature_extractor.9} parent=0 // pred_region
    _
  $region5: #{vit_feature_extractor.9} parent=0 // pred_fallthru
    _
  // Predicated region
  $region6: #{vit_feature_extractor.9} parent=0 // pred_check
    _
  $region7: #{vit_feature_extractor.9} parent=0 // pred_check_branch
    %13 = sbr.rel (0) target = $region9
  $region8: #{vit_feature_extractor.9} parent=0 // pred_region
    _
  $region9: #{vit_feature_extractor.9} parent=0 // pred_fallthru
    _
  // Predicated region
  $region10: #{vit_feature_extractor.9} parent=0 // pred_check
    _
  $region11: #{vit_feature_extractor.9} parent=0 // pred_check_branch
    %15 = sbr.rel (0) target = $region13
  $region12: #{vit_feature_extractor.9} parent=0 // pred_region
    _
  $region13: #{vit_feature_extractor.9} parent=0 // pred_fallthru
    _
  // Predicated region
  $region14: #{vit_feature_extractor.9} parent=0 // pred_check
    _
  $region15: #{vit_feature_extractor.9} parent=0 // pred_check_branch
    %17 = sbr.rel (0) target = $region17
  $region16: #{vit_feature_extractor.9} parent=0 // pred_region
    _
  $region17: #{vit_feature_extractor.9} parent=0 // pred_fallthru
    _
  // Predicated region
  $region18: #{vit_feature_extractor.9} parent=0 // pred_check
    _
  $region19: #{vit_feature_extractor.9} parent=0 // pred_check_branch
    %19 = sbr.rel (0) target = $region21
  $region20: #{vit_feature_extractor.9} parent=0 // pred_region
    _
  $region21: #{vit_feature_extractor.9} parent=0 // pred_fallthru
    _
  %v21 = vld [vmem:[%s0] sm:$0xff]
  %v22 = vld [vmem:[%s0 + $0x8] sm:$0xff]
  %v23 = vld [vmem:[%s0 + $0x10] sm:$0xff]
  %v24 = vld [vmem:[%s0 + $0x18] sm:$0xff]
  %v25 = vld [vmem:[%s0 + $0x20] sm:$0x3]
  %v26 = vld [vmem:[%s1] sm:$0x1]
  %v27 = vld [vmem:[%s2] sm:$0x1]
  %28 = vadd.xlane.f32.xlu0 %v21
  %v29 = vpop.xlane.xlu0 %28
  %30 = vadd.xlane.f32.xlu0 %v22
  %v31 = vpop.xlane.xlu0 %30
  %32 = vadd.xlane.f32.xlu0 %v23
  %v33 = vpop.xlane.xlu0 %32
  %34 = vadd.xlane.f32.xlu0 %v24
  %v35 = vpop.xlane.xlu0 %34
  %vm36 = vcmask 1041408
  %v37 = vsel %vm36, %v25, 0.0
  %38 = vadd.xlane.f32.xlu0 %v37
  %v39 = vpop.xlane.xlu0 %38
  %v40 = vrcp.pop 128.0
  %v41 = vmul.f32 %v29, %v40
  %v42 = vmul.f32 %v31, %v40
  %v43 = vmul.f32 %v33, %v40
  %v44 = vmul.f32 %v35, %v40
  %v45 = vmul.f32 %v39, %v40
  %v46 = vsub.f32 %v21, %v41
  %v47 = vsub.f32 %v22, %v42
  %v48 = vsub.f32 %v23, %v43
  %v49 = vsub.f32 %v24, %v44
  %v50 = vsub.f32 %v25, %v45
  %v51 = vmul.f32 %v46, %v46
  %v52 = vmul.f32 %v47, %v47
  %v53 = vmul.f32 %v48, %v48
  %v54 = vmul.f32 %v49, %v49
  %v55 = vmul.f32 %v50, %v50
  %56 = vadd.xlane.f32.xlu0 %v51
  %v57 = vpop.xlane.xlu0 %56
  %58 = vadd.xlane.f32.xlu0 %v52
  %v59 = vpop.xlane.xlu0 %58
  %60 = vadd.xlane.f32.xlu0 %v53
  %v61 = vpop.xlane.xlu0 %60
  %62 = vadd.xlane.f32.xlu0 %v54
  %v63 = vpop.xlane.xlu0 %62
  %v64 = vsel %vm36, %v55, 0.0
  %65 = vadd.xlane.f32.xlu0 %v64
  %v66 = vpop.xlane.xlu0 %65
  %v67 = vmul.f32 %v57, %v40
  %v68 = vmul.f32 %v59, %v40
  %v69 = vmul.f32 %v61, %v40
  %v70 = vmul.f32 %v63, %v40
  %v71 = vmul.f32 %v66, %v40
  %v72 = vadd.f32 %v67, 1e-06
  %v73 = vadd.f32 %v68, 1e-06
  %v74 = vadd.f32 %v69, 1e-06
  %v75 = vadd.f32 %v70, 1e-06
  %v76 = vadd.f32 %v71, 1e-06
  %v77 = vrsqrt.pop %v72
  %v78 = vrsqrt.pop %v73
  %v79 = vrsqrt.pop %v74
  %v80 = vrsqrt.pop %v75
  %v81 = vrsqrt.pop %v76
  %v82 = vmul.f32 %v46, %v77
  %v83 = vmul.f32 %v47, %v78
  %v84 = vmul.f32 %v48, %v79
  %v85 = vmul.f32 %v49, %v80
  %v86 = vmul.f32 %v50, %v81
  %v88 = vlaneseq
  %v89 = vshrl.u32 %v88, 7
  %v90 = vsub.s32 0, %v89
  %v91 = vrot.slane %v26, %v90
  %v93 = vmul.f32 %v82, %v91
  %v94 = vmul.f32 %v83, %v91
  %v95 = vmul.f32 %v84, %v91
  %v96 = vmul.f32 %v85, %v91
  %v97 = vmul.f32 %v86, %v91
  %v99 = vlaneseq
  %v100 = vshrl.u32 %v99, 7
  %v101 = vsub.s32 0, %v100
  %v102 = vrot.slane %v27, %v101
  %v104 = vadd.f32 %v93, %v102
  %v105 = vadd.f32 %v94, %v102
  %v106 = vadd.f32 %v95, %v102
  %v107 = vadd.f32 %v96, %v102
  %v108 = vadd.f32 %v97, %v102
  %v109 = vpack.c.bf16 %v105, %v104
  %v110 = vpack.c.bf16 %v107, %v106
  %v111 = vpack.c.bf16 %v108, %v108
  %v112 = vld [vmem:[%s3] sm:$0xff]
  %v113 = vld [vmem:[%s3 + $0x8] sm:$0xf]
  %v114 = vld [vmem:[%s3 + $0xc] sm:$0xff]
  %v115 = vld [vmem:[%s3 + $0x14] sm:$0xf]
  %v116 = vld [vmem:[%s3 + $0x18] sm:$0xff]
  %v117 = vld [vmem:[%s3 + $0x20] sm:$0xf]
  %v118 = vld [vmem:[%s3 + $0x24] sm:$0xff]
  %v119 = vld [vmem:[%s3 + $0x2c] sm:$0xf]
  %v120 = vld [vmem:[%s3 + $0x30] sm:$0xff]
  %v121 = vld [vmem:[%s3 + $0x38] sm:$0xf]
  %v122 = vld [vmem:[%s3 + $0x3c] sm:$0xff]
  %v123 = vld [vmem:[%s3 + $0x44] sm:$0xf]
  %v124 = vld [vmem:[%s3 + $0x48] sm:$0xff]
  %v125 = vld [vmem:[%s3 + $0x50] sm:$0xf]
  %v126 = vld [vmem:[%s3 + $0x54] sm:$0xff]
  %v127 = vld [vmem:[%s3 + $0x5c] sm:$0xf]
  %v128 = vld [vmem:[%s3 + $0x60] sm:$0xff]
  %v129 = vld [vmem:[%s3 + $0x68] sm:$0xf]
  %v130 = vld [vmem:[%s3 + $0x6c] sm:$0xff]
  %v131 = vld [vmem:[%s3 + $0x74] sm:$0xf]
  %v132 = vld [vmem:[%s3 + $0x78] sm:$0xff]
  %v133 = vld [vmem:[%s3 + $0x80] sm:$0xf]
  %v134 = vld [vmem:[%s3 + $0x84] sm:$0xff]
  %v135 = vld [vmem:[%s3 + $0x8c] sm:$0xf]
  %v136 = vld [vmem:[%s3 + $0x90] sm:$0xff]
  %v137 = vld [vmem:[%s3 + $0x98] sm:$0xf]
  %v138 = vld [vmem:[%s3 + $0x9c] sm:$0xff]
  %v139 = vld [vmem:[%s3 + $0xa4] sm:$0xf]
  %v140 = vld [vmem:[%s3 + $0xa8] sm:$0xff]
  %v141 = vld [vmem:[%s3 + $0xb0] sm:$0xf]
  %v142 = vld [vmem:[%s3 + $0xb4] sm:$0xff]
  %v143 = vld [vmem:[%s3 + $0xbc] sm:$0xf]
  %v144 = vld [vmem:[%s4] sm:$0x7]
  %v146 = vlaneseq
  %v147 = vshrl.u32 %v146, 7
  %v148 = vsub.s32 0, %v147
  %v149 = vrot.slane %v144, %v148
  %v150 = vlaneseq
  %v151 = vshrl.u32 %v150, 7
  %v152 = vsub.s32 1, %v151
  %v153 = vrot.slane %v144, %v152
  %v154 = vlaneseq
  %v155 = vshrl.u32 %v154, 7
  %v156 = vsub.s32 2, %v155
  %v157 = vrot.slane %v144, %v156
  %v193 = vunpack.c.l.b16 %v112
  %v194 = vunpack.c.h.b16 %v112
  %v195 = vunpack.c.l.b16 %v113
  %v196 = vunpack.c.l.b16 %v114
  %v197 = vunpack.c.h.b16 %v114
  %v198 = vunpack.c.l.b16 %v115
  %v199 = vunpack.c.l.b16 %v116
  %v200 = vunpack.c.h.b16 %v116
  %v201 = vunpack.c.l.b16 %v117
  %v202 = vunpack.c.l.b16 %v118
  %v203 = vunpack.c.h.b16 %v118
  %v204 = vunpack.c.l.b16 %v119
  %v205 = vunpack.c.l.b16 %v120
  %v206 = vunpack.c.h.b16 %v120
  %v207 = vunpack.c.l.b16 %v121
  %v208 = vunpack.c.l.b16 %v122
  %v209 = vunpack.c.h.b16 %v122
  %v210 = vunpack.c.l.b16 %v123
  %v211 = vunpack.c.l.b16 %v124
  %v212 = vunpack.c.h.b16 %v124
  %v213 = vunpack.c.l.b16 %v125
  %v214 = vunpack.c.l.b16 %v126
  %v215 = vunpack.c.h.b16 %v126
  %v216 = vunpack.c.l.b16 %v127
  %v217 = vunpack.c.l.b16 %v128
  %v218 = vunpack.c.h.b16 %v128
  %v219 = vunpack.c.l.b16 %v129
  %v220 = vunpack.c.l.b16 %v130
  %v221 = vunpack.c.h.b16 %v130
  %v222 = vunpack.c.l.b16 %v131
  %v223 = vunpack.c.l.b16 %v132
  %v224 = vunpack.c.h.b16 %v132
  %v225 = vunpack.c.l.b16 %v133
  %v226 = vunpack.c.l.b16 %v134
  %v227 = vunpack.c.h.b16 %v134
  %v228 = vunpack.c.l.b16 %v135
  %v229 = vunpack.c.l.b16 %v136
  %v230 = vunpack.c.h.b16 %v136
  %v231 = vunpack.c.l.b16 %v137
  %v232 = vunpack.c.l.b16 %v138
  %v233 = vunpack.c.h.b16 %v138
  %v234 = vunpack.c.l.b16 %v139
  %v235 = vunpack.c.l.b16 %v140
  %v236 = vunpack.c.h.b16 %v140
  %v237 = vunpack.c.l.b16 %v141
  %v238 = vunpack.c.l.b16 %v142
  %v239 = vunpack.c.h.b16 %v142
  %v240 = vunpack.c.l.b16 %v143
  %v241 = vpack.c.b16 %v196, %v193
  %v242 = vpack.c.b16 %v197, %v194
  %v243 = vpack.c.b16 %v198, %v195
  %v244 = vpack.c.b16 %v202, %v199
  %v245 = vpack.c.b16 %v203, %v200
  %v246 = vpack.c.b16 %v204, %v201
  %v247 = vpack.c.b16 %v208, %v205
  %v248 = vpack.c.b16 %v209, %v206
  %v249 = vpack.c.b16 %v210, %v207
  %v250 = vpack.c.b16 %v214, %v211
  %v251 = vpack.c.b16 %v215, %v212
  %v252 = vpack.c.b16 %v216, %v213
  %v253 = vpack.c.b16 %v220, %v217
  %v254 = vpack.c.b16 %v221, %v218
  %v255 = vpack.c.b16 %v222, %v219
  %v256 = vpack.c.b16 %v226, %v223
  %v257 = vpack.c.b16 %v227, %v224
  %v258 = vpack.c.b16 %v228, %v225
  %v259 = vpack.c.b16 %v232, %v229
  %v260 = vpack.c.b16 %v233, %v230
  %v261 = vpack.c.b16 %v234, %v231
  %v262 = vpack.c.b16 %v238, %v235
  %v263 = vpack.c.b16 %v239, %v236
  %v264 = vpack.c.b16 %v240, %v237
  %289 = vmatprep.subr.bf16.mxu0 %v263
  %290 = vmatpush1.bf16.msra.mxu0 %v262
  %291 = vmatprep.subr.bf16.mxu0 %v260
  %292 = vmatpush1.bf16.msra.mxu0 %v259
  %293 = vmatprep.subr.bf16.mxu0 %v257
  %294 = vmatpush1.bf16.msra.mxu0 %v256
  %295 = vmatprep.subr.bf16.mxu0 %v254
  %296 = vmatpush1.bf16.msra.mxu0 %v253
  %297 = vmatprep.subr.bf16.mxu0 %v251
  %298 = vmatpush1.bf16.msra.mxu0 %v250
  %299 = vmatprep.subr.bf16.mxu0 %v248
  %300 = vmatpush1.bf16.msra.mxu0 %v247
  %301 = vmatprep.subr.bf16.mxu0 %v245
  %302 = vmatpush1.bf16.msra.mxu0 %v244
  %303 = vmatprep.subr.bf16.mxu0 %v242
  %304 = vmatpush1.bf16.msra.mxu0 %v241
  %305 = vmatprep.subr.bf16.mxu0 0
  %306 = vmatpush2.bf16.msra.mxu0 0
  %307 = vmatprep.subr.bf16.mxu0 0
  %308 = vmatpush2.bf16.msra.mxu0 0
  %309 = vmatprep.subr.bf16.mxu0 0
  %310 = vmatpush2.bf16.msra.mxu0 0
  %311 = vmatprep.subr.bf16.mxu0 0
  %312 = vmatpush2.bf16.msra.mxu0 0
  %313 = vmatprep.subr.bf16.mxu0 0
  %314 = vmatpush2.bf16.msra.mxu0 0
  %315 = vmatprep.subr.bf16.mxu0 0
  %316 = vmatpush2.bf16.msra.mxu0 0
  %317 = vmatprep.subr.bf16.mxu0 0
  %318 = vmatpush2.bf16.msra.mxu0 0
  %319 = vmatprep.subr.bf16.mxu0 0
  %320 = vmatpush2.bf16.msra.mxu0 0
  %321 = vmatprep.mubr.bf16.mxu0 0
  %322 = vmatmul.mubr.bf16.gmra.mxu0 %v109
  %v323 = vpop.f32.mrf.mxu0
  %v324 = vadd.f32 %v149, %v323
  %v325 = vpop.f32.mrf.mxu0
  %v326 = vadd.f32 %v153, %v325
  %v327 = vpop.f32.mrf.mxu0
  %v328 = vadd.f32 %v149, %v327
  %v329 = vpop.f32.mrf.mxu0
  %v330 = vadd.f32 %v153, %v329
  %331 = vmatprep.mubr.bf16.mxu0 0
  %332 = vmatmul.mubr.bf16.gmra.mxu0 %v110
  %v333 = vpop.f32.mrf.mxu0
  %v334 = vadd.f32 %v149, %v333
  %v335 = vpop.f32.mrf.mxu0
  %v336 = vadd.f32 %v153, %v335
  %v337 = vpop.f32.mrf.mxu0
  %v338 = vadd.f32 %v149, %v337
  %v339 = vpop.f32.mrf.mxu0
  %v340 = vadd.f32 %v153, %v339
  %341 = vmatprep.mubr.bf16.mxu0 0
  %342 = vmatmul.mubr.bf16.gmra.mxu0 %v111
  %v343 = vpop.f32.mrf.mxu0
  %v344 = vadd.f32 %v149, %v343
  %v345 = vpop.f32.mrf.mxu0
  %v346 = vadd.f32 %v153, %v345
  %v347 = vpop.f32.mrf.mxu0
  %v348 = vpop.f32.mrf.mxu0
  %349 = vdwg.mxu0
  %350 = vmatprep.subr.bf16.mxu0 0
  %351 = vmatpush1.bf16.msra.mxu0 %v264
  %352 = vmatprep.subr.bf16.mxu0 0
  %353 = vmatpush1.bf16.msra.mxu0 %v261
  %354 = vmatprep.subr.bf16.mxu0 0
  %355 = vmatpush1.bf16.msra.mxu0 %v258
  %356 = vmatprep.subr.bf16.mxu0 0
  %357 = vmatpush1.bf16.msra.mxu0 %v255
  %358 = vmatprep.subr.bf16.mxu0 0
  %359 = vmatpush1.bf16.msra.mxu0 %v252
  %360 = vmatprep.subr.bf16.mxu0 0
  %361 = vmatpush1.bf16.msra.mxu0 %v249
  %362 = vmatprep.subr.bf16.mxu0 0
  %363 = vmatpush1.bf16.msra.mxu0 %v246
  %364 = vmatprep.subr.bf16.mxu0 0
  %365 = vmatpush1.bf16.msra.mxu0 %v243
  %366 = vmatprep.subr.bf16.mxu0 0
  %367 = vmatpush2.bf16.msra.mxu0 0
  %368 = vmatprep.subr.bf16.mxu0 0
  %369 = vmatpush2.bf16.msra.mxu0 0
  %370 = vmatprep.subr.bf16.mxu0 0
  %371 = vmatpush2.bf16.msra.mxu0 0
  %372 = vmatprep.subr.bf16.mxu0 0
  %373 = vmatpush2.bf16.msra.mxu0 0
  %374 = vmatprep.subr.bf16.mxu0 0
  %375 = vmatpush2.bf16.msra.mxu0 0
  %376 = vmatprep.subr.bf16.mxu0 0
  %377 = vmatpush2.bf16.msra.mxu0 0
  %378 = vmatprep.subr.bf16.mxu0 0
  %379 = vmatpush2.bf16.msra.mxu0 0
  %380 = vmatprep.subr.bf16.mxu0 0
  %381 = vmatpush2.bf16.msra.mxu0 0
  %382 = vmatprep.mubr.bf16.mxu0 0
  %383 = vmatmul.mubr.bf16.gmra.mxu0 %v109
  %v384 = vpop.f32.mrf.mxu0
  %v385 = vadd.f32 %v157, %v384
  %v386 = vpop.f32.mrf.mxu0
  %v387 = vpop.f32.mrf.mxu0
  %v388 = vadd.f32 %v157, %v387
  %v389 = vpop.f32.mrf.mxu0
  %390 = vmatprep.mubr.bf16.mxu0 0
  %391 = vmatmul.mubr.bf16.gmra.mxu0 %v110
  %v392 = vpop.f32.mrf.mxu0
  %v393 = vadd.f32 %v157, %v392
  %v394 = vpop.f32.mrf.mxu0
  %v395 = vpop.f32.mrf.mxu0
  %v396 = vadd.f32 %v157, %v395
  %v397 = vpop.f32.mrf.mxu0
  %398 = vmatprep.mubr.bf16.mxu0 0
  %399 = vmatmul.mubr.bf16.gmra.mxu0 %v111
  %v400 = vpop.f32.mrf.mxu0
  %v401 = vadd.f32 %v157, %v400
  %v402 = vpop.f32.mrf.mxu0
  %v403 = vpop.f32.mrf.mxu0
  %v404 = vpop.f32.mrf.mxu0
  %405 = vdwg.mxu0
  %v406 = vpack.c.bf16 %v328, %v324
  %v407 = vpack.c.bf16 %v330, %v326
  %v408 = vpack.c.bf16 %v388, %v385
  %v409 = vpack.c.bf16 %v338, %v334
  %v410 = vpack.c.bf16 %v340, %v336
  %v411 = vpack.c.bf16 %v396, %v393
  %v412 = vpack.c.bf16 %v344, %v344
  %v413 = vpack.c.bf16 %v346, %v346
  %v414 = vpack.c.bf16 %v401, %v401
  %v424 = vunpack.c.l.b16 %v406
  %v425 = vunpack.c.l.b16 %v407
  %v426 = vunpack.c.l.b16 %v408
  %v427 = vunpack.c.h.b16 %v406
  %v428 = vunpack.c.h.b16 %v407
  %v429 = vunpack.c.h.b16 %v408
  %v430 = vunpack.c.l.b16 %v409
  %v431 = vunpack.c.l.b16 %v410
  %v432 = vunpack.c.l.b16 %v411
  %v433 = vunpack.c.h.b16 %v409
  %v434 = vunpack.c.h.b16 %v410
  %v435 = vunpack.c.h.b16 %v411
  %v436 = vunpack.c.l.b16 %v412
  %v437 = vunpack.c.l.b16 %v413
  %v438 = vunpack.c.l.b16 %v414
  %v439 = vpack.c.b16 %v425, %v424
  %v440 = vpack.c.b16 %v426, %v426
  %v441 = vpack.c.b16 %v428, %v427
  %v442 = vpack.c.b16 %v429, %v429
  %v443 = vpack.c.b16 %v431, %v430
  %v444 = vpack.c.b16 %v432, %v432
  %v445 = vpack.c.b16 %v434, %v433
  %v446 = vpack.c.b16 %v435, %v435
  %v447 = vpack.c.b16 %v437, %v436
  %v448 = vpack.c.b16 %v438, %v438
  %459 = vst [vmem:[%s5] sm:$0xff] %v439
  %460 = vst [vmem:[%s5 + $0x8] sm:$0xf] %v440
  %461 = vst [vmem:[%s5 + $0xc] sm:$0xff] %v441
  %462 = vst [vmem:[%s5 + $0x14] sm:$0xf] %v442
  %463 = vst [vmem:[%s5 + $0x18] sm:$0xff] %v443
  %464 = vst [vmem:[%s5 + $0x20] sm:$0xf] %v444
  %465 = vst [vmem:[%s5 + $0x24] sm:$0xff] %v445
  %466 = vst [vmem:[%s5 + $0x2c] sm:$0xf] %v446
  %467 = vst [vmem:[%s5 + $0x30] sm:$0x11] %v447
  %468 = vst [vmem:[%s5 + $0x38] sm:$0x1] %v448
  // Predicated region
  $region22: #{vit_feature_extractor.9} parent=0 // pred_check
    _
  $region23: #{vit_feature_extractor.9} parent=0 // pred_check_branch
    %470 = sbr.rel (0) target = $region25
  $region24: #{vit_feature_extractor.9} parent=0 // pred_region
    _
  $region25: #{vit_feature_extractor.9} parent=0 // pred_fallthru
    _
  // Predicated region
  $region26: #{vit_feature_extractor.9} parent=0 // pred_check
    _
  $region27: #{vit_feature_extractor.9} parent=0 // pred_check_branch
    %472 = sbr.rel (0) target = $region29
  $region28: #{vit_feature_extractor.9} parent=0 // pred_region
    _
  $region29: #{vit_feature_extractor.9} parent=0 // pred_fallthru
    _

// kernel: vit_feature_extractor.10
$region0: #{vit_feature_extractor.10}
  #allocation0 [shape = 'u32[]', space=smem, size = 0x4, offset = 0x4, fixed_abs, tag = 'smem constant byte address 0x4 - core index']
  #allocation1 [shape = 'u32[144,128]{1,0:T(1,128)}', space=vmem, size = 0x12000, scoped, tag = 'internal scratch']
  #allocation2 [shape = 'bf16[17,128]{1,0:T(8,128)(2,1)}', space=vmem, size = 0x1800, scoped, tag = 'scratch operand']
  %s0 = inlined_call_operand.vmem [shape: bf16[2,17,384], index: 0, kind: input, shape index: {}]
  %s1 = inlined_call_operand.vmem [shape: f32[2,17,128], index: 1, kind: input, shape index: {}]
  %s2 = inlined_call_operand.vmem [shape: bf16[128,128], index: 2, kind: input, shape index: {}]
  %s3 = inlined_call_operand.vmem [shape: f32[1,128], index: 3, kind: input, shape index: {}]
  %s4 = inlined_call_operand.vmem [shape: f32[2,17,128], index: 4, kind: output, shape index: {}]
  %s5 = sld [smem:[#allocation0]]
  $region49: #{vit_feature_extractor.10} parent=0
    _
  %s7 = ssub.s32 1, %s5
  %s8 = scalar_select 0, %s7, %s5
  loop: start=0, step=1, limit=4
  $region2: #{vit_feature_extractor.10} parent=0 // loop_pre_header
    _
  $region3: #{vit_feature_extractor.10} parent=0 // loop_header
    %s10 = sphi 0, %s14
    %p11 = scmp.ge.s32.totalorder %s10, 4
    %s20 = sphi 0, %s22
    %s23 = sphi 0, %s20
    %s24 = sphi 0, %s23
    %s40 = sphi 0, %s24
    %s46 = sphi 0, %s48
    %s49 = sphi 0, %s46
    %s50 = sphi 0, %s49
    %s66 = sphi 0, %s50
    %s70 = sphi 0, %s70
    %s72 = sphi 0, %s70
    %s73 = sphi 0, %s72
    %s87 = sphi 0, %s73
    %s91 = sphi 0, %s91
    %s93 = sphi 0, %s91
    %s94 = sphi 0, %s93
    %s108 = sphi 0, %s94
    %s114 = sphi 0, %s116
    %s117 = sphi 0, %s114
    %s118 = sphi 0, %s117
    %s134 = sphi 0, %s118
  $region4: #{vit_feature_extractor.10} parent=0 // loop_header_branch
    %13 = sbr.rel (%p11) target = $region8
  $region5: #{vit_feature_extractor.10} parent=0 // loop_body
    %s15 = ssub.s32 %s10, 1
    %s16 = ssub.s32 %s10, 2
    %s17 = sadd.s32 %s10, 1
    %s18 = ssub.s32 %s10, %s17
    %p19 = scmp.eq.s32.totalorder %s18, 0
    %s21 = sadd.s32 %s20, 1
    %s22 = scalar_select %p19, %s20, %s21
    %p25 = pneg %p19
    %p26 = scmp.eq.s32.totalorder %s10, 1
    %p27 = por %p25, %p26
    %p28 = scmp.ne.s32.totalorder %s20, %s23
    %p29 = scmp.eq.s32.totalorder %s10, 0
    %p30 = por %p28, %p29
    %p31 = scmp.ne.s32.totalorder %s20, %s23
    %p32 = scmp.eq.s32.totalorder %s15, 1
    %p33 = por %p31, %p32
    %p34 = scmp.ne.s32.totalorder %s23, %s24
    %p35 = scmp.eq.s32.totalorder %s15, 0
    %p36 = por %p34, %p35
    %p37 = scmp.ne.s32.totalorder %s23, %s24
    %p38 = scmp.eq.s32.totalorder %s16, 1
    %p39 = por %p37, %p38
    %p41 = scmp.ne.s32.totalorder %s24, %s40
    %p42 = scmp.eq.s32.totalorder %s16, 0
    %p43 = por %p41, %p42
    %s44 = ssub.s32 %s10, %s17
    %p45 = scmp.eq.s32.totalorder %s44, 0
    %s47 = sadd.s32 %s46, 1
    %s48 = scalar_select %p45, %s46, %s47
    %p51 = pneg %p45
    %p52 = scmp.eq.s32.totalorder %s10, 1
    %p53 = por %p51, %p52
    %p54 = scmp.ne.s32.totalorder %s46, %s49
    %p55 = scmp.eq.s32.totalorder %s10, 0
    %p56 = por %p54, %p55
    %p57 = scmp.ne.s32.totalorder %s46, %s49
    %p58 = scmp.eq.s32.totalorder %s15, 1
    %p59 = por %p57, %p58
    %p60 = scmp.ne.s32.totalorder %s49, %s50
    %p61 = scmp.eq.s32.totalorder %s15, 0
    %p62 = por %p60, %p61
    %p63 = scmp.ne.s32.totalorder %s49, %s50
    %p64 = scmp.eq.s32.totalorder %s16, 1
    %p65 = por %p63, %p64
    %p67 = scmp.ne.s32.totalorder %s50, %s66
    %p68 = scmp.eq.s32.totalorder %s16, 0
    %p69 = por %p67, %p68
    %s71 = sadd.s32 %s70, 1
    %p74 = scmp.eq.s32.totalorder %s10, 1
    %p75 = scmp.ne.s32.totalorder %s70, %s72
    %p76 = scmp.eq.s32.totalorder %s10, 0
    %p77 = por %p75, %p76
    %p78 = scmp.ne.s32.totalorder %s70, %s72
    %p79 = scmp.eq.s32.totalorder %s15, 1
    %p80 = por %p78, %p79
    %p81 = scmp.ne.s32.totalorder %s72, %s73
    %p82 = scmp.eq.s32.totalorder %s15, 0
    %p83 = por %p81, %p82
    %p84 = scmp.ne.s32.totalorder %s72, %s73
    %p85 = scmp.eq.s32.totalorder %s16, 1
    %p86 = por %p84, %p85
    %p88 = scmp.ne.s32.totalorder %s73, %s87
    %p89 = scmp.eq.s32.totalorder %s16, 0
    %p90 = por %p88, %p89
    %s92 = sadd.s32 %s91, 1
    %p95 = scmp.eq.s32.totalorder %s10, 1
    %p96 = scmp.ne.s32.totalorder %s91, %s93
    %p97 = scmp.eq.s32.totalorder %s10, 0
    %p98 = por %p96, %p97
    %p99 = scmp.ne.s32.totalorder %s91, %s93
    %p100 = scmp.eq.s32.totalorder %s15, 1
    %p101 = por %p99, %p100
    %p102 = scmp.ne.s32.totalorder %s93, %s94
    %p103 = scmp.eq.s32.totalorder %s15, 0
    %p104 = por %p102, %p103
    %p105 = scmp.ne.s32.totalorder %s93, %s94
    %p106 = scmp.eq.s32.totalorder %s16, 1
    %p107 = por %p105, %p106
    %p109 = scmp.ne.s32.totalorder %s94, %s108
    %p110 = scmp.eq.s32.totalorder %s16, 0
    %p111 = por %p109, %p110
    %s112 = ssub.s32 %s10, %s17
    %p113 = scmp.eq.s32.totalorder %s112, 0
    %s115 = sadd.s32 %s114, 1
    %s116 = scalar_select %p113, %s114, %s115
    %p119 = pneg %p113
    %p120 = scmp.eq.s32.totalorder %s10, 1
    %p121 = por %p119, %p120
    %p122 = scmp.ne.s32.totalorder %s114, %s117
    %p123 = scmp.eq.s32.totalorder %s10, 0
    %p124 = por %p122, %p123
    %p125 = scmp.ne.s32.totalorder %s114, %s117
    %p126 = scmp.eq.s32.totalorder %s15, 1
    %p127 = por %p125, %p126
    %p128 = scmp.ne.s32.totalorder %s117, %s118
    %p129 = scmp.eq.s32.totalorder %s15, 0
    %p130 = por %p128, %p129
    %p131 = scmp.ne.s32.totalorder %s117, %s118
    %p132 = scmp.eq.s32.totalorder %s16, 1
    %p133 = por %p131, %p132
    %p135 = scmp.ne.s32.totalorder %s118, %s134
    %p136 = scmp.eq.s32.totalorder %s16, 0
    %p137 = por %p135, %p136
    %p138 = scmp.le.s32.totalorder 1, %s10
    %p139 = scmp.lt.s32.totalorder %s10, 3
    %p140 = pnand %p138, %p139
    %p141 = pneg %p140
    // Predicated region
    $region9: #{vit_feature_extractor.10} parent=5 // pred_check
      _
    $region10: #{vit_feature_extractor.10} parent=5 // pred_check_branch
      %143 = sbr.rel (%p140) target = $region12
    $region11: #{vit_feature_extractor.10} parent=5 // pred_region
      %s144 = ssub.s32 %s10, 1
      // Predicated region
      $region13: #{vit_feature_extractor.10} parent=11 // pred_check
        %p145 = pneg %p83
      $region14: #{vit_feature_extractor.10} parent=11 // pred_check_branch
        %147 = sbr.rel (%p145) target = $region16
      $region15: #{vit_feature_extractor.10} parent=11 // pred_region
        _
      $region16: #{vit_feature_extractor.10} parent=11 // pred_fallthru
        _
      // Predicated region
      $region17: #{vit_feature_extractor.10} parent=11 // pred_check
        %p148 = pneg %p104
      $region18: #{vit_feature_extractor.10} parent=11 // pred_check_branch
        %150 = sbr.rel (%p148) target = $region20
      $region19: #{vit_feature_extractor.10} parent=11 // pred_region
        _
      $region20: #{vit_feature_extractor.10} parent=11 // pred_fallthru
        _
    $region12: #{vit_feature_extractor.10} parent=5 // pred_fallthru
      _
    %p151 = scmp.lt.s32.totalorder %s10, 2
    // Predicated region
    $region21: #{vit_feature_extractor.10} parent=5 // pred_check
      %p152 = pneg %p151
    $region22: #{vit_feature_extractor.10} parent=5 // pred_check_branch
      %154 = sbr.rel (%p152) target = $region24
    $region23: #{vit_feature_extractor.10} parent=5 // pred_region
      // Predicated region
      $region25: #{vit_feature_extractor.10} parent=23 // pred_check
        %p155 = pneg %p30
      $region26: #{vit_feature_extractor.10} parent=23 // pred_check_branch
        %157 = sbr.rel (%p155) target = $region28
      $region27: #{vit_feature_extractor.10} parent=23 // pred_region
        %p158 = scmp.lt.s32.totalorder %s10, 1
        %s159 = scalar_select %p158, %s10, 1
        %s160 = smul.addr %s159, 9
        %s161 = smul.addr %s160, 4
        %s162 = scalar_lea.vmem %s0, %s161
      $region28: #{vit_feature_extractor.10} parent=23 // pred_fallthru
        _
      // Predicated region
      $region29: #{vit_feature_extractor.10} parent=23 // pred_check
        %p163 = pneg %p56
      $region30: #{vit_feature_extractor.10} parent=23 // pred_check_branch
        %165 = sbr.rel (%p163) target = $region32
      $region31: #{vit_feature_extractor.10} parent=23 // pred_region
        %p166 = scmp.lt.s32.totalorder %s10, 1
        %s167 = scalar_select %p166, %s10, 1
        %s168 = smul.addr %s167, 3
        %s169 = smul.addr %s168, 8
        %s170 = scalar_lea.vmem %s1, %s169
      $region32: #{vit_feature_extractor.10} parent=23 // pred_fallthru
        _
    $region24: #{vit_feature_extractor.10} parent=5 // pred_fallthru
      _
    %p171 = scmp.le.s32.totalorder 1, %s10
    %p172 = scmp.lt.s32.totalorder %s10, 3
    %p173 = pnand %p171, %p172
    %p174 = pneg %p173
    // Predicated region
    $region33: #{vit_feature_extractor.10} parent=5 // pred_check
      _
    $region34: #{vit_feature_extractor.10} parent=5 // pred_check_branch
      %176 = sbr.rel (%p173) target = $region36
    $region35: #{vit_feature_extractor.10} parent=5 // pred_region
      %s177 = ssub.s32 %s10, 1
      %p178 = scmp.lt.s32.totalorder %s15, 1
      %s179 = scalar_select %p178, %s15, 1
      %s180 = smul.addr %s179, 9
      %s181 = smul.addr %s180, 4
      %s182 = scalar_lea.vmem %s0, %s181
      %p183 = pneg %p36
      %p184 = pneg %p33
      %p185 = scmp.lt.s32.totalorder %s15, 1
      %s186 = scalar_select %p185, %s15, 1
      %s187 = smul.addr %s186, 3
      %s188 = smul.addr %s187, 8
      %s189 = scalar_lea.vmem %s1, %s188
      %p190 = pneg %p62
      %p191 = pneg %p59
      %p192 = pneg %p83
      %p193 = pneg %p80
      %p194 = pneg %p104
      %p195 = pneg %p101
      %p196 = pneg %p130
      %p197 = pneg %p127
      %p198 = scmp.lt.s32.totalorder %s15, 1
      %s199 = scalar_select %p198, %s15, 1
      %s200 = smul.addr %s199, 3
      %s201 = smul.addr %s200, 8
      %s202 = scalar_lea.vmem %s4, %s201
      %p203 = scmp.lt.s32.totalorder %s15, 1
      %s204 = scalar_select %p203, %s15, 1
      %s205 = smul.addr %s204, 9
      %s206 = smul.addr %s205, 4
      %s207 = scalar_lea.vmem %s0, %s206
      %p208 = scmp.lt.s32.totalorder %s15, 1
      %s209 = scalar_select %p208, %s15, 1
      %s210 = smul.addr %s209, 3
      %s211 = smul.addr %s210, 8
      %s212 = scalar_lea.vmem %s1, %s211
      %p213 = scmp.lt.s32.totalorder %s15, 1
      %s214 = scalar_select %p213, %s15, 1
      %s215 = smul.addr %s214, 3
      %s216 = smul.addr %s215, 8
      %s217 = scalar_lea.vmem %s4, %s216
      %v219 = vld [vmem:[%s207] sm:$0xff]
      %v220 = vld [vmem:[%s207 + $0x8] sm:$0xf]
      %v221 = vld [vmem:[%s207 + $0xc] sm:$0xff]
      %v222 = vld [vmem:[%s207 + $0x14] sm:$0xf]
      %v223 = vld [vmem:[%s207 + $0x18] sm:$0x11]
      %v224 = vld [vmem:[%s207 + $0x20] sm:$0x1]
      %v225 = vld [vmem:[%s212] sm:$0xff]
      %v226 = vld [vmem:[%s212 + $0x8] sm:$0xff]
      %v227 = vld [vmem:[%s212 + $0x10] sm:$0x1]
      %v231 = vunpack.c.l.b16 %v219
      %v232 = vunpack.c.l.b16 %v221
      %v233 = vunpack.c.l.b16 %v223
      %v234 = vpack.c.b16 %v232, %v231
      %v235 = vpack.c.b16 %v233, %v233
      %v236 = vunpack.c.h.b16 %v219
      %v237 = vunpack.c.h.b16 %v221
      %v238 = vunpack.c.h.b16 %v223
      %v239 = vpack.c.b16 %v237, %v236
      %v240 = vpack.c.b16 %v238, %v238
      %vm241 = vcmask 261120
      %v243 = vsel %vm241, %v234, 0
      %v246 = vsel %vm241, %v235, 0
      %v249 = vsel %vm241, %v239, 0
      %v252 = vsel %vm241, %v240, 0
      %254 = vmatprep.subr.bf16.mxu0 0
      %255 = vmatpush1.bf16.xpose.msra.mxu0 0
      %256 = vmatprep.subr.bf16.mxu0 0
      %257 = vmatpush1.bf16.xpose.msra.mxu0 0
      %258 = vmatprep.subr.bf16.mxu0 0
      %259 = vmatpush1.bf16.xpose.msra.mxu0 0
      %260 = vmatprep.subr.bf16.mxu0 0
      %261 = vmatpush1.bf16.xpose.msra.mxu0 0
      %262 = vmatprep.subr.bf16.mxu0 0
      %263 = vmatpush1.bf16.xpose.msra.mxu0 0
      %264 = vmatprep.subr.bf16.mxu0 0
      %265 = vmatpush1.bf16.xpose.msra.mxu0 0
      %266 = vmatprep.subr.bf16.mxu0 0
      %267 = vmatpush1.bf16.xpose.msra.mxu0 %v252
      %268 = vmatprep.subr.bf16.mxu0 0
      %269 = vmatpush1.bf16.xpose.msra.mxu0 %v249
      %270 = vmatprep.subr.bf16.mxu0 0
      %271 = vmatpush2.bf16.xpose.msra.mxu0 0
      %272 = vmatprep.subr.bf16.mxu0 0
      %273 = vmatpush2.bf16.xpose.msra.mxu0 0
      %274 = vmatprep.subr.bf16.mxu0 0
      %275 = vmatpush2.bf16.xpose.msra.mxu0 0
      %276 = vmatprep.subr.bf16.mxu0 0
      %277 = vmatpush2.bf16.xpose.msra.mxu0 0
      %278 = vmatprep.subr.bf16.mxu0 0
      %279 = vmatpush2.bf16.xpose.msra.mxu0 0
      %280 = vmatprep.subr.bf16.mxu0 0
      %281 = vmatpush2.bf16.xpose.msra.mxu0 0
      %282 = vmatprep.subr.bf16.mxu0 0
      %283 = vmatpush2.bf16.xpose.msra.mxu0 0
      %284 = vmatprep.subr.bf16.mxu0 0
      %285 = vmatpush2.bf16.xpose.msra.mxu0 0
      %286 = vmatprep.mubr.bf16.mxu0 0
      %287 = vmatmul.mubr.bf16.gmra.mxu0 %v243
      %v288 = vpop.f32.mrf.mxu0
      %v289 = vadd.f32 0.0, %v288
      %v290 = vpop.f32.mrf.mxu0
      %v291 = vpop.f32.mrf.mxu0
      %v292 = vadd.f32 0.0, %v291
      %v293 = vpop.f32.mrf.mxu0
      %294 = vmatprep.mubr.bf16.mxu0 0
      %295 = vmatmul.mubr.bf16.gmra.mxu0 %v246
      %v296 = vpop.f32.mrf.mxu0
      %v297 = vadd.f32 0.0, %v296
      %v298 = vpop.f32.mrf.mxu0
      %v299 = vpop.f32.mrf.mxu0
      %v300 = vpop.f32.mrf.mxu0
      %301 = vdwg.mxu0
      %v302 = vmul.f32 %v289, 0.17677669
      %v303 = vmul.f32 %v292, 0.17677669
      %v304 = vmul.f32 %v297, 0.17677669
      %vm305 = vcmask 138240
      %v306 = vsel %vm305, %v302, -inf
      %307 = vmax.xlane.f32.xlu0 %v306
      %v308 = vpop.xlane.xlu0 %307
      %v309 = vsel %vm305, %v303, -inf
      %310 = vmax.xlane.f32.xlu0 %v309
      %v311 = vpop.xlane.xlu0 %310
      %vm312 = vcmask 131072
      %v313 = vsel %vm312, %v304, -inf
      %314 = vmax.xlane.f32.xlu0 %v313
      %v315 = vpop.xlane.xlu0 %314
      %v316 = vsub.f32 %v302, %v308
      %v317 = vsub.f32 %v303, %v311
      %v318 = vsub.f32 %v304, %v315
      %v319 = vmul.f32 %v316, 1.442695
      %v320 = vpow.pop %v319
      %v321 = vmul.f32 %v317, 1.442695
      %v322 = vpow.pop %v321
      %v323 = vmul.f32 %v318, 1.442695
      %v324 = vpow.pop %v323
      %v325 = vsel %vm305, %v320, 0.0
      %326 = vadd.xlane.f32.xlu0 %v325
      %v327 = vpop.xlane.xlu0 %326
      %v328 = vsel %vm305, %v322, 0.0
      %329 = vadd.xlane.f32.xlu0 %v328
      %v330 = vpop.xlane.xlu0 %329
      %v331 = vsel %vm312, %v324, 0.0
      %332 = vadd.xlane.f32.xlu0 %v331
      %v333 = vpop.xlane.xlu0 %332
      %v334 = vrcp.pop %v327
      %v335 = vrcp.pop %v330
      %v336 = vrcp.pop %v333
      %v337 = vmul.f32 %v320, %v334
      %v338 = vmul.f32 %v322, %v335
      %v339 = vmul.f32 %v324, %v336
      %v340 = vpack.c.bf16 %v338, %v337
      %v341 = vpack.c.bf16 %v339, %v339
      %v345 = vunpack.c.l.b16 %v220
      %v346 = vunpack.c.l.b16 %v222
      %v347 = vunpack.c.l.b16 %v224
      %v348 = vpack.c.b16 %v346, %v345
      %v349 = vpack.c.b16 %v347, %v347
      %v352 = vsel %vm305, %v340, 0
      %v355 = vsel %vm305, %v341, 0
      %vm357 = vcmask 1040384
      %v358 = vsel 0, 4294967295, 65535
      %v359 = vsel %vm357, %v358, 0
      %v361 = vand.u32 %v349, %v359
      %363 = vmatprep.subr.bf16.mxu0 0
      %364 = vmatpush1.bf16.msra.mxu0 0
      %365 = vmatprep.subr.bf16.mxu0 0
      %366 = vmatpush1.bf16.msra.mxu0 0
      %367 = vmatprep.subr.bf16.mxu0 0
      %368 = vmatpush1.bf16.msra.mxu0 0
      %369 = vmatprep.subr.bf16.mxu0 0
      %370 = vmatpush1.bf16.msra.mxu0 0
      %371 = vmatprep.subr.bf16.mxu0 0
      %372 = vmatpush1.bf16.msra.mxu0 0
      %373 = vmatprep.subr.bf16.mxu0 0
      %374 = vmatpush1.bf16.msra.mxu0 0
      %375 = vmatprep.subr.bf16.mxu0 0
      %376 = vmatpush1.bf16.msra.mxu0 %v361
      %377 = vmatprep.subr.bf16.mxu0 0
      %378 = vmatpush1.bf16.msra.mxu0 %v348
      %379 = vmatprep.subr.bf16.mxu0 0
      %380 = vmatpush2.bf16.msra.mxu0 0
      %381 = vmatprep.subr.bf16.mxu0 0
      %382 = vmatpush2.bf16.msra.mxu0 0
      %383 = vmatprep.subr.bf16.mxu0 0
      %384 = vmatpush2.bf16.msra.mxu0 0
      %385 = vmatprep.subr.bf16.mxu0 0
      %386 = vmatpush2.bf16.msra.mxu0 0
      %387 = vmatprep.subr.bf16.mxu0 0
      %388 = vmatpush2.bf16.msra.mxu0 0
      %389 = vmatprep.subr.bf16.mxu0 0
      %390 = vmatpush2.bf16.msra.mxu0 0
      %391 = vmatprep.subr.bf16.mxu0 0
      %392 = vmatpush2.bf16.msra.mxu0 0
      %393 = vmatprep.subr.bf16.mxu0 0
      %394 = vmatpush2.bf16.msra.mxu0 0
      %395 = vmatprep.mubr.bf16.mxu0 0
      %396 = vmatmul.mubr.bf16.gmra.mxu0 %v352
      %v397 = vpop.f32.mrf.mxu0
      %v398 = vadd.f32 0.0, %v397
      %v399 = vpop.f32.mrf.mxu0
      %v400 = vpop.f32.mrf.mxu0
      %v401 = vadd.f32 0.0, %v400
      %v402 = vpop.f32.mrf.mxu0
      %403 = vmatprep.mubr.bf16.mxu0 0
      %404 = vmatmul.mubr.bf16.gmra.mxu0 %v355
      %v405 = vpop.f32.mrf.mxu0
      %v406 = vadd.f32 0.0, %v405
      %v407 = vpop.f32.mrf.mxu0
      %v408 = vpop.f32.mrf.mxu0
      %v409 = vpop.f32.mrf.mxu0
      %410 = vdwg.mxu0
      %v411 = vpack.c.bf16 %v401, %v398
      %v412 = vpack.c.bf16 %v406, %v406
      %v415 = vunpack.c.l.b16 %v411
      %v416 = vunpack.c.h.b16 %v411
      %v417 = vunpack.c.l.b16 %v412
      %v418 = vpack.c.b16 %v415, %v415
      %v419 = vpack.c.b16 %v416, %v416
      %v420 = vpack.c.b16 %v417, %v417
      %vm424 = vcmask 257024
      %425 = vst.msk [vmem:[#allocation2] sm:$0xf] %vm424, %v418
      %426 = vst.msk [vmem:[#allocation2 + $0x4] sm:$0xf] %vm424, %v419
      %vm427 = vcmask 253952
      %vm428 = vsmask.f32 256
      %vm429 = vmand %vm427, %vm428
      %v430 = vld [vmem:[#allocation2 + $0x8] sm:$0x1]
      %v431 = vsel %vm429, %v420, %v430
      %432 = vst [vmem:[#allocation2 + $0x8] sm:$0x1] %v431
      %433 = vrot.lane.b32.xlu0 %v234, 96
      %v434 = vpop.permute.xlu0 %433
      %435 = vrot.lane.b32.xlu0 %v235, 96
      %v436 = vpop.permute.xlu0 %435
      %437 = vrot.lane.b32.xlu0 %v239, 96
      %v438 = vpop.permute.xlu0 %437
      %439 = vrot.lane.b32.xlu0 %v240, 96
      %v440 = vpop.permute.xlu0 %439
      %v442 = vsel %vm241, %v434, 0
      %v445 = vsel %vm241, %v436, 0
      %v448 = vsel %vm241, %v438, 0
      %v451 = vsel %vm241, %v440, 0
      %453 = vmatprep.subr.bf16.mxu0 0
      %454 = vmatpush1.bf16.xpose.msra.mxu0 0
      %455 = vmatprep.subr.bf16.mxu0 0
      %456 = vmatpush1.bf16.xpose.msra.mxu0 0
      %457 = vmatprep.subr.bf16.mxu0 0
      %458 = vmatpush1.bf16.xpose.msra.mxu0 0
      %459 = vmatprep.subr.bf16.mxu0 0
      %460 = vmatpush1.bf16.xpose.msra.mxu0 0
      %461 = vmatprep.subr.bf16.mxu0 0
      %462 = vmatpush1.bf16.xpose.msra.mxu0 0
      %463 = vmatprep.subr.bf16.mxu0 0
      %464 = vmatpush1.bf16.xpose.msra.mxu0 0
      %465 = vmatprep.subr.bf16.mxu0 0
      %466 = vmatpush1.bf16.xpose.msra.mxu0 %v451
      %467 = vmatprep.subr.bf16.mxu0 0
      %468 = vmatpush1.bf16.xpose.msra.mxu0 %v448
      %469 = vmatprep.subr.bf16.mxu0 0
      %470 = vmatpush2.bf16.xpose.msra.mxu0 0
      %471 = vmatprep.subr.bf16.mxu0 0
      %472 = vmatpush2.bf16.xpose.msra.mxu0 0
      %473 = vmatprep.subr.bf16.mxu0 0
      %474 = vmatpush2.bf16.xpose.msra.mxu0 0
      %475 = vmatprep.subr.bf16.mxu0 0
      %476 = vmatpush2.bf16.xpose.msra.mxu0 0
      %477 = vmatprep.subr.bf16.mxu0 0
      %478 = vmatpush2.bf16.xpose.msra.mxu0 0
      %479 = vmatprep.subr.bf16.mxu0 0
      %480 = vmatpush2.bf16.xpose.msra.mxu0 0
      %481 = vmatprep.subr.bf16.mxu0 0
      %482 = vmatpush2.bf16.xpose.msra.mxu0 0
      %483 = vmatprep.subr.bf16.mxu0 0
      %484 = vmatpush2.bf16.xpose.msra.mxu0 0
      %485 = vmatprep.mubr.bf16.mxu0 0
      %486 = vmatmul.mubr.bf16.gmra.mxu0 %v442
      %v487 = vpop.f32.mrf.mxu0
      %v488 = vadd.f32 0.0, %v487
      %v489 = vpop.f32.mrf.mxu0
      %v490 = vpop.f32.mrf.mxu0
      %v491 = vadd.f32 0.0, %v490
      %v492 = vpop.f32.mrf.mxu0
      %493 = vmatprep.mubr.bf16.mxu0 0
      %494 = vmatmul.mubr.bf16.gmra.mxu0 %v445
      %v495 = vpop.f32.mrf.mxu0
      %v496 = vadd.f32 0.0, %v495
      %v497 = vpop.f32.mrf.mxu0
      %v498 = vpop.f32.mrf.mxu0
      %v499 = vpop.f32.mrf.mxu0
      %500 = vdwg.mxu0
      %v501 = vmul.f32 %v488, 0.17677669
      %v502 = vmul.f32 %v491, 0.17677669
      %v503 = vmul.f32 %v496, 0.17677669
      %v504 = vsel %vm305, %v501, -inf
      %505 = vmax.xlane.f32.xlu0 %v504
      %v506 = vpop.xlane.xlu0 %505
      %v507 = vsel %vm305, %v502, -inf
      %508 = vmax.xlane.f32.xlu0 %v507
      %v509 = vpop.xlane.xlu0 %508
      %v510 = vsel %vm312, %v503, -inf
      %511 = vmax.xlane.f32.xlu0 %v510
      %v512 = vpop.xlane.xlu0 %511
      %v513 = vsub.f32 %v501, %v506
      %v514 = vsub.f32 %v502, %v509
      %v515 = vsub.f32 %v503, %v512
      %v516 = vmul.f32 %v513, 1.442695
      %v517 = vpow.pop %v516
      %v518 = vmul.f32 %v514, 1.442695
      %v519 = vpow.pop %v518
      %v520 = vmul.f32 %v515, 1.442695
      %v521 = vpow.pop %v520
      %v522 = vsel %vm305, %v517, 0.0
      %523 = vadd.xlane.f32.xlu0 %v522
      %v524 = vpop.xlane.xlu0 %523
      %v525 = vsel %vm305, %v519, 0.0
      %526 = vadd.xlane.f32.xlu0 %v525
      %v527 = vpop.xlane.xlu0 %526
      %v528 = vsel %vm312, %v521, 0.0
      %529 = vadd.xlane.f32.xlu0 %v528
      %v530 = vpop.xlane.xlu0 %529
      %v531 = vrcp.pop %v524
      %v532 = vrcp.pop %v527
      %v533 = vrcp.pop %v530
      %v534 = vmul.f32 %v517, %v531
      %v535 = vmul.f32 %v519, %v532
      %v536 = vmul.f32 %v521, %v533
      %v537 = vpack.c.bf16 %v535, %v534
      %v538 = vpack.c.bf16 %v536, %v536
      %539 = vrot.lane.b32.xlu0 %v348, 96
      %v540 = vpop.permute.xlu0 %539
      %541 = vrot.lane.b32.xlu0 %v349, 96
      %v542 = vpop.permute.xlu0 %541
      %v545 = vsel %vm305, %v537, 0
      %v548 = vsel %vm305, %v538, 0
      %v551 = vand.u32 %v542, %v359
      %553 = vmatprep.subr.bf16.mxu0 0
      %554 = vmatpush1.bf16.msra.mxu0 0
      %555 = vmatprep.subr.bf16.mxu0 0
      %556 = vmatpush1.bf16.msra.mxu0 0
      %557 = vmatprep.subr.bf16.mxu0 0
      %558 = vmatpush1.bf16.msra.mxu0 0
      %559 = vmatprep.subr.bf16.mxu0 0
      %560 = vmatpush1.bf16.msra.mxu0 0
      %561 = vmatprep.subr.bf16.mxu0 0
      %562 = vmatpush1.bf16.msra.mxu0 0
      %563 = vmatprep.subr.bf16.mxu0 0
      %564 = vmatpush1.bf16.msra.mxu0 0
      %565 = vmatprep.subr.bf16.mxu0 0
      %566 = vmatpush1.bf16.msra.mxu0 %v551
      %567 = vmatprep.subr.bf16.mxu0 0
      %568 = vmatpush1.bf16.msra.mxu0 %v540
      %569 = vmatprep.subr.bf16.mxu0 0
      %570 = vmatpush2.bf16.msra.mxu0 0
      %571 = vmatprep.subr.bf16.mxu0 0
      %572 = vmatpush2.bf16.msra.mxu0 0
      %573 = vmatprep.subr.bf16.mxu0 0
      %574 = vmatpush2.bf16.msra.mxu0 0
      %575 = vmatprep.subr.bf16.mxu0 0
      %576 = vmatpush2.bf16.msra.mxu0 0
      %577 = vmatprep.subr.bf16.mxu0 0
      %578 = vmatpush2.bf16.msra.mxu0 0
      %579 = vmatprep.subr.bf16.mxu0 0
      %580 = vmatpush2.bf16.msra.mxu0 0
      %581 = vmatprep.subr.bf16.mxu0 0
      %582 = vmatpush2.bf16.msra.mxu0 0
      %583 = vmatprep.subr.bf16.mxu0 0
      %584 = vmatpush2.bf16.msra.mxu0 0
      %585 = vmatprep.mubr.bf16.mxu0 0
      %586 = vmatmul.mubr.bf16.gmra.mxu0 %v545
      %v587 = vpop.f32.mrf.mxu0
      %v588 = vadd.f32 0.0, %v587
      %v589 = vpop.f32.mrf.mxu0
      %v590 = vpop.f32.mrf.mxu0
      %v591 = vadd.f32 0.0, %v590
      %v592 = vpop.f32.mrf.mxu0
      %593 = vmatprep.mubr.bf16.mxu0 0
      %594 = vmatmul.mubr.bf16.gmra.mxu0 %v548
      %v595 = vpop.f32.mrf.mxu0
      %v596 = vadd.f32 0.0, %v595
      %v597 = vpop.f32.mrf.mxu0
      %v598 = vpop.f32.mrf.mxu0
      %v599 = vpop.f32.mrf.mxu0
      %600 = vdwg.mxu0
      %v601 = vpack.c.bf16 %v591, %v588
      %v602 = vpack.c.bf16 %v596, %v596
      %v605 = vunpack.c.l.b16 %v601
      %v606 = vunpack.c.h.b16 %v601
      %v607 = vunpack.c.l.b16 %v602
      %v608 = vpack.c.b16 %v605, %v605
      %v609 = vpack.c.b16 %v606, %v606
      %v610 = vpack.c.b16 %v607, %v607
      %611 = vrot.lane.b32.xlu0 %v608, 32
      %v612 = vpop.permute.xlu0 %611
      %613 = vrot.lane.b32.xlu0 %v609, 32
      %v614 = vpop.permute.xlu0 %613
      %615 = vrot.lane.b32.xlu0 %v610, 32
      %v616 = vpop.permute.xlu0 %615
      %vm620 = vcmask 519424
      %621 = vst.msk [vmem:[#allocation2] sm:$0xf] %vm620, %v612
      %622 = vst.msk [vmem:[#allocation2 + $0x4] sm:$0xf] %vm620, %v614
      %vm623 = vcmask 516352
      %vm624 = vmand %vm623, %vm428
      %v625 = vld [vmem:[#allocation2 + $0x8] sm:$0x1]
      %v626 = vsel %vm624, %v616, %v625
      %627 = vst [vmem:[#allocation2 + $0x8] sm:$0x1] %v626
      %628 = vrot.lane.b32.xlu0 %v234, 64
      %v629 = vpop.permute.xlu0 %628
      %630 = vrot.lane.b32.xlu0 %v235, 64
      %v631 = vpop.permute.xlu0 %630
      %632 = vrot.lane.b32.xlu0 %v239, 64
      %v633 = vpop.permute.xlu0 %632
      %634 = vrot.lane.b32.xlu0 %v240, 64
      %v635 = vpop.permute.xlu0 %634
      %v637 = vsel %vm241, %v629, 0
      %v640 = vsel %vm241, %v631, 0
      %v643 = vsel %vm241, %v633, 0
      %v646 = vsel %vm241, %v635, 0
      %648 = vmatprep.subr.bf16.mxu0 0
      %649 = vmatpush1.bf16.xpose.msra.mxu0 0
      %650 = vmatprep.subr.bf16.mxu0 0
      %651 = vmatpush1.bf16.xpose.msra.mxu0 0
      %652 = vmatprep.subr.bf16.mxu0 0
      %653 = vmatpush1.bf16.xpose.msra.mxu0 0
      %654 = vmatprep.subr.bf16.mxu0 0
      %655 = vmatpush1.bf16.xpose.msra.mxu0 0
      %656 = vmatprep.subr.bf16.mxu0 0
      %657 = vmatpush1.bf16.xpose.msra.mxu0 0
      %658 = vmatprep.subr.bf16.mxu0 0
      %659 = vmatpush1.bf16.xpose.msra.mxu0 0
      %660 = vmatprep.subr.bf16.mxu0 0
      %661 = vmatpush1.bf16.xpose.msra.mxu0 %v646
      %662 = vmatprep.subr.bf16.mxu0 0
      %663 = vmatpush1.bf16.xpose.msra.mxu0 %v643
      %664 = vmatprep.subr.bf16.mxu0 0
      %665 = vmatpush2.bf16.xpose.msra.mxu0 0
      %666 = vmatprep.subr.bf16.mxu0 0
      %667 = vmatpush2.bf16.xpose.msra.mxu0 0
      %668 = vmatprep.subr.bf16.mxu0 0
      %669 = vmatpush2.bf16.xpose.msra.mxu0 0
      %670 = vmatprep.subr.bf16.mxu0 0
      %671 = vmatpush2.bf16.xpose.msra.mxu0 0
      %672 = vmatprep.subr.bf16.mxu0 0
      %673 = vmatpush2.bf16.xpose.msra.mxu0 0
      %674 = vmatprep.subr.bf16.mxu0 0
      %675 = vmatpush2.bf16.xpose.msra.mxu0 0
      %676 = vmatprep.subr.bf16.mxu0 0
      %677 = vmatpush2.bf16.xpose.msra.mxu0 0
      %678 = vmatprep.subr.bf16.mxu0 0
      %679 = vmatpush2.bf16.xpose.msra.mxu0 0
      %680 = vmatprep.mubr.bf16.mxu0 0
      %681 = vmatmul.mubr.bf16.gmra.mxu0 %v637
      %v682 = vpop.f32.mrf.mxu0
      %v683 = vadd.f32 0.0, %v682
      %v684 = vpop.f32.mrf.mxu0
      %v685 = vpop.f32.mrf.mxu0
      %v686 = vadd.f32 0.0, %v685
      %v687 = vpop.f32.mrf.mxu0
      %688 = vmatprep.mubr.bf16.mxu0 0
      %689 = vmatmul.mubr.bf16.gmra.mxu0 %v640
      %v690 = vpop.f32.mrf.mxu0
      %v691 = vadd.f32 0.0, %v690
      %v692 = vpop.f32.mrf.mxu0
      %v693 = vpop.f32.mrf.mxu0
      %v694 = vpop.f32.mrf.mxu0
      %695 = vdwg.mxu0
      %v696 = vmul.f32 %v683, 0.17677669
      %v697 = vmul.f32 %v686, 0.17677669
      %v698 = vmul.f32 %v691, 0.17677669
      %v699 = vsel %vm305, %v696, -inf
      %700 = vmax.xlane.f32.xlu0 %v699
      %v701 = vpop.xlane.xlu0 %700
      %v702 = vsel %vm305, %v697, -inf
      %703 = vmax.xlane.f32.xlu0 %v702
      %v704 = vpop.xlane.xlu0 %703
      %v705 = vsel %vm312, %v698, -inf
      %706 = vmax.xlane.f32.xlu0 %v705
      %v707 = vpop.xlane.xlu0 %706
      %v708 = vsub.f32 %v696, %v701
      %v709 = vsub.f32 %v697, %v704
      %v710 = vsub.f32 %v698, %v707
      %v711 = vmul.f32 %v708, 1.442695
      %v712 = vpow.pop %v711
      %v713 = vmul.f32 %v709, 1.442695
      %v714 = vpow.pop %v713
      %v715 = vmul.f32 %v710, 1.442695
      %v716 = vpow.pop %v715
      %v717 = vsel %vm305, %v712, 0.0
      %718 = vadd.xlane.f32.xlu0 %v717
      %v719 = vpop.xlane.xlu0 %718
      %v720 = vsel %vm305, %v714, 0.0
      %721 = vadd.xlane.f32.xlu0 %v720
      %v722 = vpop.xlane.xlu0 %721
      %v723 = vsel %vm312, %v716, 0.0
      %724 = vadd.xlane.f32.xlu0 %v723
      %v725 = vpop.xlane.xlu0 %724
      %v726 = vrcp.pop %v719
      %v727 = vrcp.pop %v722
      %v728 = vrcp.pop %v725
      %v729 = vmul.f32 %v712, %v726
      %v730 = vmul.f32 %v714, %v727
      %v731 = vmul.f32 %v716, %v728
      %v732 = vpack.c.bf16 %v730, %v729
      %v733 = vpack.c.bf16 %v731, %v731
      %734 = vrot.lane.b32.xlu0 %v348, 64
      %v735 = vpop.permute.xlu0 %734
      %736 = vrot.lane.b32.xlu0 %v349, 64
      %v737 = vpop.permute.xlu0 %736
      %v740 = vsel %vm305, %v732, 0
      %v743 = vsel %vm305, %v733, 0
      %v746 = vand.u32 %v737, %v359
      %748 = vmatprep.subr.bf16.mxu0 0
      %749 = vmatpush1.bf16.msra.mxu0 0
      %750 = vmatprep.subr.bf16.mxu0 0
      %751 = vmatpush1.bf16.msra.mxu0 0
      %752 = vmatprep.subr.bf16.mxu0 0
      %753 = vmatpush1.bf16.msra.mxu0 0
      %754 = vmatprep.subr.bf16.mxu0 0
      %755 = vmatpush1.bf16.msra.mxu0 0
      %756 = vmatprep.subr.bf16.mxu0 0
      %757 = vmatpush1.bf16.msra.mxu0 0
      %758 = vmatprep.subr.bf16.mxu0 0
      %759 = vmatpush1.bf16.msra.mxu0 0
      %760 = vmatprep.subr.bf16.mxu0 0
      %761 = vmatpush1.bf16.msra.mxu0 %v746
      %762 = vmatprep.subr.bf16.mxu0 0
      %763 = vmatpush1.bf16.msra.mxu0 %v735
      %764 = vmatprep.subr.bf16.mxu0 0
      %765 = vmatpush2.bf16.msra.mxu0 0
      %766 = vmatprep.subr.bf16.mxu0 0
      %767 = vmatpush2.bf16.msra.mxu0 0
      %768 = vmatprep.subr.bf16.mxu0 0
      %769 = vmatpush2.bf16.msra.mxu0 0
      %770 = vmatprep.subr.bf16.mxu0 0
      %771 = vmatpush2.bf16.msra.mxu0 0
      %772 = vmatprep.subr.bf16.mxu0 0
      %773 = vmatpush2.bf16.msra.mxu0 0
      %774 = vmatprep.subr.bf16.mxu0 0
      %775 = vmatpush2.bf16.msra.mxu0 0
      %776 = vmatprep.subr.bf16.mxu0 0
      %777 = vmatpush2.bf16.msra.mxu0 0
      %778 = vmatprep.subr.bf16.mxu0 0
      %779 = vmatpush2.bf16.msra.mxu0 0
      %780 = vmatprep.mubr.bf16.mxu0 0
      %781 = vmatmul.mubr.bf16.gmra.mxu0 %v740
      %v782 = vpop.f32.mrf.mxu0
      %v783 = vadd.f32 0.0, %v782
      %v784 = vpop.f32.mrf.mxu0
      %v785 = vpop.f32.mrf.mxu0
      %v786 = vadd.f32 0.0, %v785
      %v787 = vpop.f32.mrf.mxu0
      %788 = vmatprep.mubr.bf16.mxu0 0
      %789 = vmatmul.mubr.bf16.gmra.mxu0 %v743
      %v790 = vpop.f32.mrf.mxu0
      %v791 = vadd.f32 0.0, %v790
      %v792 = vpop.f32.mrf.mxu0
      %v793 = vpop.f32.mrf.mxu0
      %v794 = vpop.f32.mrf.mxu0
      %795 = vdwg.mxu0
      %v796 = vpack.c.bf16 %v786, %v783
      %v797 = vpack.c.bf16 %v791, %v791
      %v800 = vunpack.c.l.b16 %v796
      %v801 = vunpack.c.h.b16 %v796
      %v802 = vunpack.c.l.b16 %v797
      %v803 = vpack.c.b16 %v800, %v800
      %v804 = vpack.c.b16 %v801, %v801
      %v805 = vpack.c.b16 %v802, %v802
      %806 = vrot.lane.b32.xlu0 %v803, 64
      %v807 = vpop.permute.xlu0 %806
      %808 = vrot.lane.b32.xlu0 %v804, 64
      %v809 = vpop.permute.xlu0 %808
      %810 = vrot.lane.b32.xlu0 %v805, 64
      %v811 = vpop.permute.xlu0 %810
      %vm815 = vcmask 781824
      %816 = vst.msk [vmem:[#allocation2] sm:$0xf] %vm815, %v807
      %817 = vst.msk [vmem:[#allocation2 + $0x4] sm:$0xf] %vm815, %v809
      %vm818 = vcmask 778752
      %vm819 = vmand %vm818, %vm428
      %v820 = vld [vmem:[#allocation2 + $0x8] sm:$0x1]
      %v821 = vsel %vm819, %v811, %v820
      %822 = vst [vmem:[#allocation2 + $0x8] sm:$0x1] %v821
      %823 = vrot.lane.b32.xlu0 %v234, 32
      %v824 = vpop.permute.xlu0 %823
      %825 = vrot.lane.b32.xlu0 %v235, 32
      %v826 = vpop.permute.xlu0 %825
      %827 = vrot.lane.b32.xlu0 %v239, 32
      %v828 = vpop.permute.xlu0 %827
      %829 = vrot.lane.b32.xlu0 %v240, 32
      %v830 = vpop.permute.xlu0 %829
      %v832 = vsel %vm241, %v824, 0
      %v835 = vsel %vm241, %v826, 0
      %v838 = vsel %vm241, %v828, 0
      %v841 = vsel %vm241, %v830, 0
      %843 = vmatprep.subr.bf16.mxu0 0
      %844 = vmatpush1.bf16.xpose.msra.mxu0 0
      %845 = vmatprep.subr.bf16.mxu0 0
      %846 = vmatpush1.bf16.xpose.msra.mxu0 0
      %847 = vmatprep.subr.bf16.mxu0 0
      %848 = vmatpush1.bf16.xpose.msra.mxu0 0
      %849 = vmatprep.subr.bf16.mxu0 0
      %850 = vmatpush1.bf16.xpose.msra.mxu0 0
      %851 = vmatprep.subr.bf16.mxu0 0
      %852 = vmatpush1.bf16.xpose.msra.mxu0 0
      %853 = vmatprep.subr.bf16.mxu0 0
      %854 = vmatpush1.bf16.xpose.msra.mxu0 0
      %855 = vmatprep.subr.bf16.mxu0 0
      %856 = vmatpush1.bf16.xpose.msra.mxu0 %v841
      %857 = vmatprep.subr.bf16.mxu0 0
      %858 = vmatpush1.bf16.xpose.msra.mxu0 %v838
      %859 = vmatprep.subr.bf16.mxu0 0
      %860 = vmatpush2.bf16.xpose.msra.mxu0 0
      %861 = vmatprep.subr.bf16.mxu0 0
      %862 = vmatpush2.bf16.xpose.msra.mxu0 0
      %863 = vmatprep.subr.bf16.mxu0 0
      %864 = vmatpush2.bf16.xpose.msra.mxu0 0
      %865 = vmatprep.subr.bf16.mxu0 0
      %866 = vmatpush2.bf16.xpose.msra.mxu0 0
      %867 = vmatprep.subr.bf16.mxu0 0
      %868 = vmatpush2.bf16.xpose.msra.mxu0 0
      %869 = vmatprep.subr.bf16.mxu0 0
      %870 = vmatpush2.bf16.xpose.msra.mxu0 0
      %871 = vmatprep.subr.bf16.mxu0 0
      %872 = vmatpush2.bf16.xpose.msra.mxu0 0
      %873 = vmatprep.subr.bf16.mxu0 0
      %874 = vmatpush2.bf16.xpose.msra.mxu0 0
      %875 = vmatprep.mubr.bf16.mxu0 0
      %876 = vmatmul.mubr.bf16.gmra.mxu0 %v832
      %v877 = vpop.f32.mrf.mxu0
      %v878 = vadd.f32 0.0, %v877
      %v879 = vpop.f32.mrf.mxu0
      %v880 = vpop.f32.mrf.mxu0
      %v881 = vadd.f32 0.0, %v880
      %v882 = vpop.f32.mrf.mxu0
      %883 = vmatprep.mubr.bf16.mxu0 0
      %884 = vmatmul.mubr.bf16.gmra.mxu0 %v835
      %v885 = vpop.f32.mrf.mxu0
      %v886 = vadd.f32 0.0, %v885
      %v887 = vpop.f32.mrf.mxu0
      %v888 = vpop.f32.mrf.mxu0
      %v889 = vpop.f32.mrf.mxu0
      %890 = vdwg.mxu0
      %v891 = vmul.f32 %v878, 0.17677669
      %v892 = vmul.f32 %v881, 0.17677669
      %v893 = vmul.f32 %v886, 0.17677669
      %v894 = vsel %vm305, %v891, -inf
      %895 = vmax.xlane.f32.xlu0 %v894
      %v896 = vpop.xlane.xlu0 %895
      %v897 = vsel %vm305, %v892, -inf
      %898 = vmax.xlane.f32.xlu0 %v897
      %v899 = vpop.xlane.xlu0 %898
      %v900 = vsel %vm312, %v893, -inf
      %901 = vmax.xlane.f32.xlu0 %v900
      %v902 = vpop.xlane.xlu0 %901
      %v903 = vsub.f32 %v891, %v896
      %v904 = vsub.f32 %v892, %v899
      %v905 = vsub.f32 %v893, %v902
      %v906 = vmul.f32 %v903, 1.442695
      %v907 = vpow.pop %v906
      %v908 = vmul.f32 %v904, 1.442695
      %v909 = vpow.pop %v908
      %v910 = vmul.f32 %v905, 1.442695
      %v911 = vpow.pop %v910
      %v912 = vsel %vm305, %v907, 0.0
      %913 = vadd.xlane.f32.xlu0 %v912
      %v914 = vpop.xlane.xlu0 %913
      %v915 = vsel %vm305, %v909, 0.0
      %916 = vadd.xlane.f32.xlu0 %v915
      %v917 = vpop.xlane.xlu0 %916
      %v918 = vsel %vm312, %v911, 0.0
      %919 = vadd.xlane.f32.xlu0 %v918
      %v920 = vpop.xlane.xlu0 %919
      %v921 = vrcp.pop %v914
      %v922 = vrcp.pop %v917
      %v923 = vrcp.pop %v920
      %v924 = vmul.f32 %v907, %v921
      %v925 = vmul.f32 %v909, %v922
      %v926 = vmul.f32 %v911, %v923
      %v927 = vpack.c.bf16 %v925, %v924
      %v928 = vpack.c.bf16 %v926, %v926
      %929 = vrot.lane.b32.xlu0 %v348, 32
      %v930 = vpop.permute.xlu0 %929
      %931 = vrot.lane.b32.xlu0 %v349, 32
      %v932 = vpop.permute.xlu0 %931
      %v935 = vsel %vm305, %v927, 0
      %v938 = vsel %vm305, %v928, 0
      %v941 = vand.u32 %v932, %v359
      %943 = vmatprep.subr.bf16.mxu0 0
      %944 = vmatpush1.bf16.msra.mxu0 0
      %945 = vmatprep.subr.bf16.mxu0 0
      %946 = vmatpush1.bf16.msra.mxu0 0
      %947 = vmatprep.subr.bf16.mxu0 0
      %948 = vmatpush1.bf16.msra.mxu0 0
      %949 = vmatprep.subr.bf16.mxu0 0
      %950 = vmatpush1.bf16.msra.mxu0 0
      %951 = vmatprep.subr.bf16.mxu0 0
      %952 = vmatpush1.bf16.msra.mxu0 0
      %953 = vmatprep.subr.bf16.mxu0 0
      %954 = vmatpush1.bf16.msra.mxu0 0
      %955 = vmatprep.subr.bf16.mxu0 0
      %956 = vmatpush1.bf16.msra.mxu0 %v941
      %957 = vmatprep.subr.bf16.mxu0 0
      %958 = vmatpush1.bf16.msra.mxu0 %v930
      %959 = vmatprep.subr.bf16.mxu0 0
      %960 = vmatpush2.bf16.msra.mxu0 0
      %961 = vmatprep.subr.bf16.mxu0 0
      %962 = vmatpush2.bf16.msra.mxu0 0
      %963 = vmatprep.subr.bf16.mxu0 0
      %964 = vmatpush2.bf16.msra.mxu0 0
      %965 = vmatprep.subr.bf16.mxu0 0
      %966 = vmatpush2.bf16.msra.mxu0 0
      %967 = vmatprep.subr.bf16.mxu0 0
      %968 = vmatpush2.bf16.msra.mxu0 0
      %969 = vmatprep.subr.bf16.mxu0 0
      %970 = vmatpush2.bf16.msra.mxu0 0
      %971 = vmatprep.subr.bf16.mxu0 0
      %972 = vmatpush2.bf16.msra.mxu0 0
      %973 = vmatprep.subr.bf16.mxu0 0
      %974 = vmatpush2.bf16.msra.mxu0 0
      %975 = vmatprep.mubr.bf16.mxu0 0
      %976 = vmatmul.mubr.bf16.gmra.mxu0 %v935
      %v977 = vpop.f32.mrf.mxu0
      %v978 = vadd.f32 0.0, %v977
      %v979 = vpop.f32.mrf.mxu0
      %v980 = vpop.f32.mrf.mxu0
      %v981 = vadd.f32 0.0, %v980
      %v982 = vpop.f32.mrf.mxu0
      %983 = vmatprep.mubr.bf16.mxu0 0
      %984 = vmatmul.mubr.bf16.gmra.mxu0 %v938
      %v985 = vpop.f32.mrf.mxu0
      %v986 = vadd.f32 0.0, %v985
      %v987 = vpop.f32.mrf.mxu0
      %v988 = vpop.f32.mrf.mxu0
      %v989 = vpop.f32.mrf.mxu0
      %990 = vdwg.mxu0
      %v991 = vpack.c.bf16 %v981, %v978
      %v992 = vpack.c.bf16 %v986, %v986
      %v995 = vunpack.c.l.b16 %v991
      %v996 = vunpack.c.h.b16 %v991
      %v997 = vunpack.c.l.b16 %v992
      %v998 = vpack.c.b16 %v995, %v995
      %v999 = vpack.c.b16 %v996, %v996
      %v1000 = vpack.c.b16 %v997, %v997
      %1001 = vrot.lane.b32.xlu0 %v998, 96
      %v1002 = vpop.permute.xlu0 %1001
      %1003 = vrot.lane.b32.xlu0 %v999, 96
      %v1004 = vpop.permute.xlu0 %1003
      %1005 = vrot.lane.b32.xlu0 %v1000, 96
      %v1006 = vpop.permute.xlu0 %1005
      %vm1010 = vcmask 1044224
      %1011 = vst.msk [vmem:[#allocation2] sm:$0xf] %vm1010, %v1002
      %1012 = vst.msk [vmem:[#allocation2 + $0x4] sm:$0xf] %vm1010, %v1004
      %vm1013 = vcmask 1041152
      %vm1014 = vmand %vm1013, %vm428
      %v1015 = vld [vmem:[#allocation2 + $0x8] sm:$0x1]
      %v1016 = vsel %vm1014, %v1006, %v1015
      %1017 = vst [vmem:[#allocation2 + $0x8] sm:$0x1] %v1016
      %v1018 = vld [vmem:[#allocation2] sm:$0xf]
      %v1019 = vld [vmem:[#allocation2 + $0x4] sm:$0xf]
      %v1020 = vld [vmem:[#allocation2 + $0x8] sm:$0x1]
      %v1021 = vld [vmem:[%s2] sm:$0xf]
      %v1022 = vld [vmem:[%s2 + $0x4] sm:$0xf]
      %v1023 = vld [vmem:[%s2 + $0x8] sm:$0xf]
      %v1024 = vld [vmem:[%s2 + $0xc] sm:$0xf]
      %v1025 = vld [vmem:[%s2 + $0x10] sm:$0xf]
      %v1026 = vld [vmem:[%s2 + $0x14] sm:$0xf]
      %v1027 = vld [vmem:[%s2 + $0x18] sm:$0xf]
      %v1028 = vld [vmem:[%s2 + $0x1c] sm:$0xf]
      %v1029 = vld [vmem:[%s2 + $0x20] sm:$0xf]
      %v1030 = vld [vmem:[%s2 + $0x24] sm:$0xf]
      %v1031 = vld [vmem:[%s2 + $0x28] sm:$0xf]
      %v1032 = vld [vmem:[%s2 + $0x2c] sm:$0xf]
      %v1033 = vld [vmem:[%s2 + $0x30] sm:$0xf]
      %v1034 = vld [vmem:[%s2 + $0x34] sm:$0xf]
      %v1035 = vld [vmem:[%s2 + $0x38] sm:$0xf]
      %v1036 = vld [vmem:[%s2 + $0x3c] sm:$0xf]
      %v1037 = vld [vmem:[%s3] sm:$0x1]
      %v1039 = vlaneseq
      %v1040 = vshrl.u32 %v1039, 7
      %v1041 = vsub.s32 0, %v1040
      %v1042 = vrot.slane %v1037, %v1041
      %v1047 = vunpack.c.l.b16 %v1018
      %v1048 = vunpack.c.l.b16 %v1019
      %v1049 = vunpack.c.l.b16 %v1020
      %v1050 = vpack.c.b16 %v1048, %v1047
      %v1051 = vpack.c.b16 %v1049, %v1049
      %v1070 = vunpack.c.l.b16 %v1021
      %v1071 = vunpack.c.l.b16 %v1022
      %v1072 = vunpack.c.l.b16 %v1023
      %v1073 = vunpack.c.l.b16 %v1024
      %v1074 = vunpack.c.l.b16 %v1025
      %v1075 = vunpack.c.l.b16 %v1026
      %v1076 = vunpack.c.l.b16 %v1027
      %v1077 = vunpack.c.l.b16 %v1028
      %v1078 = vunpack.c.l.b16 %v1029
      %v1079 = vunpack.c.l.b16 %v1030
      %v1080 = vunpack.c.l.b16 %v1031
      %v1081 = vunpack.c.l.b16 %v1032
      %v1082 = vunpack.c.l.b16 %v1033
      %v1083 = vunpack.c.l.b16 %v1034
      %v1084 = vunpack.c.l.b16 %v1035
      %v1085 = vunpack.c.l.b16 %v1036
      %v1086 = vpack.c.b16 %v1071, %v1070
      %v1087 = vpack.c.b16 %v1073, %v1072
      %v1088 = vpack.c.b16 %v1075, %v1074
      %v1089 = vpack.c.b16 %v1077, %v1076
      %v1090 = vpack.c.b16 %v1079, %v1078
      %v1091 = vpack.c.b16 %v1081, %v1080
      %v1092 = vpack.c.b16 %v1083, %v1082
      %v1093 = vpack.c.b16 %v1085, %v1084
      %1102 = vmatprep.subr.bf16.mxu0 0
      %1103 = vmatpush1.bf16.msra.mxu0 %v1093
      %1104 = vmatprep.subr.bf16.mxu0 0
      %1105 = vmatpush1.bf16.msra.mxu0 %v1092
      %1106 = vmatprep.subr.bf16.mxu0 0
      %1107 = vmatpush1.bf16.msra.mxu0 %v1091
      %1108 = vmatprep.subr.bf16.mxu0 0
      %1109 = vmatpush1.bf16.msra.mxu0 %v1090
      %1110 = vmatprep.subr.bf16.mxu0 0
      %1111 = vmatpush1.bf16.msra.mxu0 %v1089
      %1112 = vmatprep.subr.bf16.mxu0 0
      %1113 = vmatpush1.bf16.msra.mxu0 %v1088
      %1114 = vmatprep.subr.bf16.mxu0 0
      %1115 = vmatpush1.bf16.msra.mxu0 %v1087
      %1116 = vmatprep.subr.bf16.mxu0 0
      %1117 = vmatpush1.bf16.msra.mxu0 %v1086
      %1118 = vmatprep.subr.bf16.mxu0 0
      %1119 = vmatpush2.bf16.msra.mxu0 0
      %1120 = vmatprep.subr.bf16.mxu0 0
      %1121 = vmatpush2.bf16.msra.mxu0 0
      %1122 = vmatprep.subr.bf16.mxu0 0
      %1123 = vmatpush2.bf16.msra.mxu0 0
      %1124 = vmatprep.subr.bf16.mxu0 0
      %1125 = vmatpush2.bf16.msra.mxu0 0
      %1126 = vmatprep.subr.bf16.mxu0 0
      %1127 = vmatpush2.bf16.msra.mxu0 0
      %1128 = vmatprep.subr.bf16.mxu0 0
      %1129 = vmatpush2.bf16.msra.mxu0 0
      %1130 = vmatprep.subr.bf16.mxu0 0
      %1131 = vmatpush2.bf16.msra.mxu0 0
      %1132 = vmatprep.subr.bf16.mxu0 0
      %1133 = vmatpush2.bf16.msra.mxu0 0
      %1134 = vmatprep.mubr.bf16.mxu0 0
      %1135 = vmatmul.mubr.bf16.gmra.mxu0 %v1050
      %v1136 = vpop.f32.mrf.mxu0
      %v1137 = vadd.f32 %v1042, %v1136
      %v1138 = vpop.f32.mrf.mxu0
      %v1139 = vpop.f32.mrf.mxu0
      %v1140 = vadd.f32 %v1042, %v1139
      %v1141 = vpop.f32.mrf.mxu0
      %1142 = vmatprep.mubr.bf16.mxu0 0
      %1143 = vmatmul.mubr.bf16.gmra.mxu0 %v1051
      %v1144 = vpop.f32.mrf.mxu0
      %v1145 = vadd.f32 %v1042, %v1144
      %v1146 = vpop.f32.mrf.mxu0
      %v1147 = vpop.f32.mrf.mxu0
      %v1148 = vpop.f32.mrf.mxu0
      %1149 = vdwg.mxu0
      %v1150 = vadd.f32 %v225, %v1137
      %v1151 = vadd.f32 %v226, %v1140
      %v1152 = vadd.f32 %v227, %v1145
      %1153 = vst [vmem:[%s217] sm:$0xff] %v1150
      %1154 = vst [vmem:[%s217 + $0x8] sm:$0xff] %v1151
      %1155 = vst [vmem:[%s217 + $0x10] sm:$0x1] %v1152
      %p1156 = scmp.lt.s32.totalorder %s15, 1
      %s1157 = scalar_select %p1156, %s15, 1
      %s1158 = smul.addr %s1157, 3
      %s1159 = smul.addr %s1158, 8
      %s1160 = scalar_lea.vmem %s4, %s1159
      // Predicated region
      $region37: #{vit_feature_extractor.10} parent=35 // pred_check
        %p1161 = pneg %p127
      $region38: #{vit_feature_extractor.10} parent=35 // pred_check_branch
        %1163 = sbr.rel (%p1161) target = $region40
      $region39: #{vit_feature_extractor.10} parent=35 // pred_region
        _
      $region40: #{vit_feature_extractor.10} parent=35 // pred_fallthru
        _
    $region36: #{vit_feature_extractor.10} parent=5 // pred_fallthru
      _
    %p1164 = scmp.le.s32.totalorder 2, %s10
    // Predicated region
    $region41: #{vit_feature_extractor.10} parent=5 // pred_check
      %p1165 = pneg %p1164
    $region42: #{vit_feature_extractor.10} parent=5 // pred_check_branch
      %1167 = sbr.rel (%p1165) target = $region44
    $region43: #{vit_feature_extractor.10} parent=5 // pred_region
      %s1168 = ssub.s32 %s10, 2
      // Predicated region
      $region45: #{vit_feature_extractor.10} parent=43 // pred_check
        %p1169 = pneg %p133
      $region46: #{vit_feature_extractor.10} parent=43 // pred_check_branch
        %1171 = sbr.rel (%p1169) target = $region48
      $region47: #{vit_feature_extractor.10} parent=43 // pred_region
        %p1172 = scmp.lt.s32.totalorder %s16, 1
        %s1173 = scalar_select %p1172, %s16, 1
        %s1174 = smul.addr %s1173, 3
        %s1175 = smul.addr %s1174, 8
        %s1176 = scalar_lea.vmem %s4, %s1175
      $region48: #{vit_feature_extractor.10} parent=43 // pred_fallthru
        _
    $region44: #{vit_feature_extractor.10} parent=5 // pred_fallthru
      _
  $region6: #{vit_feature_extractor.10} parent=0 // loop_footer
    %s14 = sadd.s32 1, %s10
  $region7: #{vit_feature_extractor.10} parent=0 // loop_footer_branch
    %9 = sbr.rel target = $region3
  $region8: #{vit_feature_extractor.10} parent=0 // loop_exit
    _

// kernel: vit_feature_extractor.11
$region0: #{vit_feature_extractor.11}
  #allocation0 [shape = 'u32[]', space=smem, size = 0x4, offset = 0x4, fixed_abs, tag = 'smem constant byte address 0x4 - core index']
  #allocation1 [shape = 'u32[144,128]{1,0:T(1,128)}', space=vmem, size = 0x12000, scoped, tag = 'internal scratch']
  %s0 = inlined_call_operand.vmem [shape: f32[34,128], index: 0, kind: input, shape index: {}]
  %s1 = inlined_call_operand.vmem [shape: f32[1,128], index: 1, kind: input, shape index: {}]
  %s2 = inlined_call_operand.vmem [shape: f32[1,128], index: 2, kind: input, shape index: {}]
  %s3 = inlined_call_operand.vmem [shape: bf16[128,512], index: 3, kind: input, shape index: {}]
  %s4 = inlined_call_operand.vmem [shape: f32[1,512], index: 4, kind: input, shape index: {}]
  %s5 = inlined_call_operand.vmem [shape: bf16[512,128], index: 5, kind: input, shape index: {}]
  %s6 = inlined_call_operand.vmem [shape: f32[1,128], index: 6, kind: input, shape index: {}]
  %s7 = inlined_call_operand.vmem [shape: f32[34,128], index: 7, kind: output, shape index: {}]
  %s8 = sld [smem:[#allocation0]]
  $region38: #{vit_feature_extractor.11} parent=0
    _
  %s10 = ssub.s32 1, %s8
  %s11 = scalar_select 0, %s10, %s8
  // Predicated region
  $region2: #{vit_feature_extractor.11} parent=0 // pred_check
    _
  $region3: #{vit_feature_extractor.11} parent=0 // pred_check_branch
    %13 = sbr.rel (0) target = $region5
  $region4: #{vit_feature_extractor.11} parent=0 // pred_region
    _
  $region5: #{vit_feature_extractor.11} parent=0 // pred_fallthru
    _
  // Predicated region
  $region6: #{vit_feature_extractor.11} parent=0 // pred_check
    _
  $region7: #{vit_feature_extractor.11} parent=0 // pred_check_branch
    %15 = sbr.rel (0) target = $region9
  $region8: #{vit_feature_extractor.11} parent=0 // pred_region
    _
  $region9: #{vit_feature_extractor.11} parent=0 // pred_fallthru
    _
  // Predicated region
  $region10: #{vit_feature_extractor.11} parent=0 // pred_check
    _
  $region11: #{vit_feature_extractor.11} parent=0 // pred_check_branch
    %17 = sbr.rel (0) target = $region13
  $region12: #{vit_feature_extractor.11} parent=0 // pred_region
    _
  $region13: #{vit_feature_extractor.11} parent=0 // pred_fallthru
    _
  // Predicated region
  $region14: #{vit_feature_extractor.11} parent=0 // pred_check
    _
  $region15: #{vit_feature_extractor.11} parent=0 // pred_check_branch
    %19 = sbr.rel (0) target = $region17
  $region16: #{vit_feature_extractor.11} parent=0 // pred_region
    _
  $region17: #{vit_feature_extractor.11} parent=0 // pred_fallthru
    _
  // Predicated region
  $region18: #{vit_feature_extractor.11} parent=0 // pred_check
    _
  $region19: #{vit_feature_extractor.11} parent=0 // pred_check_branch
    %21 = sbr.rel (0) target = $region21
  $region20: #{vit_feature_extractor.11} parent=0 // pred_region
    _
  $region21: #{vit_feature_extractor.11} parent=0 // pred_fallthru
    _
  // Predicated region
  $region22: #{vit_feature_extractor.11} parent=0 // pred_check
    _
  $region23: #{vit_feature_extractor.11} parent=0 // pred_check_branch
    %23 = sbr.rel (0) target = $region25
  $region24: #{vit_feature_extractor.11} parent=0 // pred_region
    _
  $region25: #{vit_feature_extractor.11} parent=0 // pred_fallthru
    _
  // Predicated region
  $region26: #{vit_feature_extractor.11} parent=0 // pred_check
    _
  $region27: #{vit_feature_extractor.11} parent=0 // pred_check_branch
    %25 = sbr.rel (0) target = $region29
  $region28: #{vit_feature_extractor.11} parent=0 // pred_region
    _
  $region29: #{vit_feature_extractor.11} parent=0 // pred_fallthru
    _
  %v27 = vld [vmem:[%s0] sm:$0xff]
  %v28 = vld [vmem:[%s0 + $0x8] sm:$0xff]
  %v29 = vld [vmem:[%s0 + $0x10] sm:$0xff]
  %v30 = vld [vmem:[%s0 + $0x18] sm:$0xff]
  %v31 = vld [vmem:[%s0 + $0x20] sm:$0x3]
  %v32 = vld [vmem:[%s1] sm:$0x1]
  %v33 = vld [vmem:[%s2] sm:$0x1]
  %34 = vadd.xlane.f32.xlu0 %v27
  %v35 = vpop.xlane.xlu0 %34
  %36 = vadd.xlane.f32.xlu0 %v28
  %v37 = vpop.xlane.xlu0 %36
  %38 = vadd.xlane.f32.xlu0 %v29
  %v39 = vpop.xlane.xlu0 %38
  %40 = vadd.xlane.f32.xlu0 %v30
  %v41 = vpop.xlane.xlu0 %40
  %vm42 = vcmask 1041408
  %v43 = vsel %vm42, %v31, 0.0
  %44 = vadd.xlane.f32.xlu0 %v43
  %v45 = vpop.xlane.xlu0 %44
  %v46 = vrcp.pop 128.0
  %v47 = vmul.f32 %v35, %v46
  %v48 = vmul.f32 %v37, %v46
  %v49 = vmul.f32 %v39, %v46
  %v50 = vmul.f32 %v41, %v46
  %v51 = vmul.f32 %v45, %v46
  %v52 = vsub.f32 %v27, %v47
  %v53 = vsub.f32 %v28, %v48
  %v54 = vsub.f32 %v29, %v49
  %v55 = vsub.f32 %v30, %v50
  %v56 = vsub.f32 %v31, %v51
  %v57 = vmul.f32 %v52, %v52
  %v58 = vmul.f32 %v53, %v53
  %v59 = vmul.f32 %v54, %v54
  %v60 = vmul.f32 %v55, %v55
  %v61 = vmul.f32 %v56, %v56
  %62 = vadd.xlane.f32.xlu0 %v57
  %v63 = vpop.xlane.xlu0 %62
  %64 = vadd.xlane.f32.xlu0 %v58
  %v65 = vpop.xlane.xlu0 %64
  %66 = vadd.xlane.f32.xlu0 %v59
  %v67 = vpop.xlane.xlu0 %66
  %68 = vadd.xlane.f32.xlu0 %v60
  %v69 = vpop.xlane.xlu0 %68
  %v70 = vsel %vm42, %v61, 0.0
  %71 = vadd.xlane.f32.xlu0 %v70
  %v72 = vpop.xlane.xlu0 %71
  %v73 = vmul.f32 %v63, %v46
  %v74 = vmul.f32 %v65, %v46
  %v75 = vmul.f32 %v67, %v46
  %v76 = vmul.f32 %v69, %v46
  %v77 = vmul.f32 %v72, %v46
  %v78 = vadd.f32 %v73, 1e-06
  %v79 = vadd.f32 %v74, 1e-06
  %v80 = vadd.f32 %v75, 1e-06
  %v81 = vadd.f32 %v76, 1e-06
  %v82 = vadd.f32 %v77, 1e-06
  %v83 = vrsqrt.pop %v78
  %v84 = vrsqrt.pop %v79
  %v85 = vrsqrt.pop %v80
  %v86 = vrsqrt.pop %v81
  %v87 = vrsqrt.pop %v82
  %v88 = vmul.f32 %v52, %v83
  %v89 = vmul.f32 %v53, %v84
  %v90 = vmul.f32 %v54, %v85
  %v91 = vmul.f32 %v55, %v86
  %v92 = vmul.f32 %v56, %v87
  %v94 = vlaneseq
  %v95 = vshrl.u32 %v94, 7
  %v96 = vsub.s32 0, %v95
  %v97 = vrot.slane %v32, %v96
  %v99 = vmul.f32 %v88, %v97
  %v100 = vmul.f32 %v89, %v97
  %v101 = vmul.f32 %v90, %v97
  %v102 = vmul.f32 %v91, %v97
  %v103 = vmul.f32 %v92, %v97
  %v105 = vlaneseq
  %v106 = vshrl.u32 %v105, 7
  %v107 = vsub.s32 0, %v106
  %v108 = vrot.slane %v33, %v107
  %v110 = vadd.f32 %v99, %v108
  %v111 = vadd.f32 %v100, %v108
  %v112 = vadd.f32 %v101, %v108
  %v113 = vadd.f32 %v102, %v108
  %v114 = vadd.f32 %v103, %v108
  %v115 = vpack.c.bf16 %v111, %v110
  %v116 = vpack.c.bf16 %v113, %v112
  %v117 = vpack.c.bf16 %v114, %v114
  %v118 = vld [vmem:[%s3] sm:$0xff]
  %v119 = vld [vmem:[%s3 + $0x8] sm:$0xff]
  %v120 = vld [vmem:[%s3 + $0x10] sm:$0xff]
  %v121 = vld [vmem:[%s3 + $0x18] sm:$0xff]
  %v122 = vld [vmem:[%s3 + $0x20] sm:$0xff]
  %v123 = vld [vmem:[%s3 + $0x28] sm:$0xff]
  %v124 = vld [vmem:[%s3 + $0x30] sm:$0xff]
  %v125 = vld [vmem:[%s3 + $0x38] sm:$0xff]
  %v126 = vld [vmem:[%s3 + $0x40] sm:$0xff]
  %v127 = vld [vmem:[%s3 + $0x48] sm:$0xff]
  %v128 = vld [vmem:[%s3 + $0x50] sm:$0xff]
  %v129 = vld [vmem:[%s3 + $0x58] sm:$0xff]
  %v130 = vld [vmem:[%s3 + $0x60] sm:$0xff]
  %v131 = vld [vmem:[%s3 + $0x68] sm:$0xff]
  %v132 = vld [vmem:[%s3 + $0x70] sm:$0xff]
  %v133 = vld [vmem:[%s3 + $0x78] sm:$0xff]
  %v134 = vld [vmem:[%s3 + $0x80] sm:$0xff]
  %v135 = vld [vmem:[%s3 + $0x88] sm:$0xff]
  %v136 = vld [vmem:[%s3 + $0x90] sm:$0xff]
  %v137 = vld [vmem:[%s3 + $0x98] sm:$0xff]
  %v138 = vld [vmem:[%s3 + $0xa0] sm:$0xff]
  %v139 = vld [vmem:[%s3 + $0xa8] sm:$0xff]
  %v140 = vld [vmem:[%s3 + $0xb0] sm:$0xff]
  %v141 = vld [vmem:[%s3 + $0xb8] sm:$0xff]
  %v142 = vld [vmem:[%s3 + $0xc0] sm:$0xff]
  %v143 = vld [vmem:[%s3 + $0xc8] sm:$0xff]
  %v144 = vld [vmem:[%s3 + $0xd0] sm:$0xff]
  %v145 = vld [vmem:[%s3 + $0xd8] sm:$0xff]
  %v146 = vld [vmem:[%s3 + $0xe0] sm:$0xff]
  %v147 = vld [vmem:[%s3 + $0xe8] sm:$0xff]
  %v148 = vld [vmem:[%s3 + $0xf0] sm:$0xff]
  %v149 = vld [vmem:[%s3 + $0xf8] sm:$0xff]
  %v150 = vld [vmem:[%s4] sm:$0xf]
  %v152 = vlaneseq
  %v153 = vshrl.u32 %v152, 7
  %v154 = vsub.s32 0, %v153
  %v155 = vrot.slane %v150, %v154
  %v156 = vlaneseq
  %v157 = vshrl.u32 %v156, 7
  %v158 = vsub.s32 1, %v157
  %v159 = vrot.slane %v150, %v158
  %v160 = vlaneseq
  %v161 = vshrl.u32 %v160, 7
  %v162 = vsub.s32 2, %v161
  %v163 = vrot.slane %v150, %v162
  %v164 = vlaneseq
  %v165 = vshrl.u32 %v164, 7
  %v166 = vsub.s32 3, %v165
  %v167 = vrot.slane %v150, %v166
  %v204 = vunpack.c.l.b16 %v118
  %v205 = vunpack.c.h.b16 %v118
  %v206 = vunpack.c.l.b16 %v119
  %v207 = vunpack.c.h.b16 %v119
  %v208 = vunpack.c.l.b16 %v120
  %v209 = vunpack.c.h.b16 %v120
  %v210 = vunpack.c.l.b16 %v121
  %v211 = vunpack.c.h.b16 %v121
  %v212 = vunpack.c.l.b16 %v122
  %v213 = vunpack.c.h.b16 %v122
  %v214 = vunpack.c.l.b16 %v123
  %v215 = vunpack.c.h.b16 %v123
  %v216 = vunpack.c.l.b16 %v124
  %v217 = vunpack.c.h.b16 %v124
  %v218 = vunpack.c.l.b16 %v125
  %v219 = vunpack.c.h.b16 %v125
  %v220 = vunpack.c.l.b16 %v126
  %v221 = vunpack.c.h.b16 %v126
  %v222 = vunpack.c.l.b16 %v127
  %v223 = vunpack.c.h.b16 %v127
  %v224 = vunpack.c.l.b16 %v128
  %v225 = vunpack.c.h.b16 %v128
  %v226 = vunpack.c.l.b16 %v129
  %v227 = vunpack.c.h.b16 %v129
  %v228 = vunpack.c.l.b16 %v130
  %v229 = vunpack.c.h.b16 %v130
  %v230 = vunpack.c.l.b16 %v131
  %v231 = vunpack.c.h.b16 %v131
  %v232 = vunpack.c.l.b16 %v132
  %v233 = vunpack.c.h.b16 %v132
  %v234 = vunpack.c.l.b16 %v133
  %v235 = vunpack.c.h.b16 %v133
  %v236 = vunpack.c.l.b16 %v134
  %v237 = vunpack.c.h.b16 %v134
  %v238 = vunpack.c.l.b16 %v135
  %v239 = vunpack.c.h.b16 %v135
  %v240 = vunpack.c.l.b16 %v136
  %v241 = vunpack.c.h.b16 %v136
  %v242 = vunpack.c.l.b16 %v137
  %v243 = vunpack.c.h.b16 %v137
  %v244 = vunpack.c.l.b16 %v138
  %v245 = vunpack.c.h.b16 %v138
  %v246 = vunpack.c.l.b16 %v139
  %v247 = vunpack.c.h.b16 %v139
  %v248 = vunpack.c.l.b16 %v140
  %v249 = vunpack.c.h.b16 %v140
  %v250 = vunpack.c.l.b16 %v141
  %v251 = vunpack.c.h.b16 %v141
  %v252 = vunpack.c.l.b16 %v142
  %v253 = vunpack.c.h.b16 %v142
  %v254 = vunpack.c.l.b16 %v143
  %v255 = vunpack.c.h.b16 %v143
  %v256 = vunpack.c.l.b16 %v144
  %v257 = vunpack.c.h.b16 %v144
  %v258 = vunpack.c.l.b16 %v145
  %v259 = vunpack.c.h.b16 %v145
  %v260 = vunpack.c.l.b16 %v146
  %v261 = vunpack.c.h.b16 %v146
  %v262 = vunpack.c.l.b16 %v147
  %v263 = vunpack.c.h.b16 %v147
  %v264 = vunpack.c.l.b16 %v148
  %v265 = vunpack.c.h.b16 %v148
  %v266 = vunpack.c.l.b16 %v149
  %v267 = vunpack.c.h.b16 %v149
  %v268 = vpack.c.b16 %v208, %v204
  %v269 = vpack.c.b16 %v209, %v205
  %v270 = vpack.c.b16 %v210, %v206
  %v271 = vpack.c.b16 %v211, %v207
  %v272 = vpack.c.b16 %v216, %v212
  %v273 = vpack.c.b16 %v217, %v213
  %v274 = vpack.c.b16 %v218, %v214
  %v275 = vpack.c.b16 %v219, %v215
  %v276 = vpack.c.b16 %v224, %v220
  %v277 = vpack.c.b16 %v225, %v221
  %v278 = vpack.c.b16 %v226, %v222
  %v279 = vpack.c.b16 %v227, %v223
  %v280 = vpack.c.b16 %v232, %v228
  %v281 = vpack.c.b16 %v233, %v229
  %v282 = vpack.c.b16 %v234, %v230
  %v283 = vpack.c.b16 %v235, %v231
  %v284 = vpack.c.b16 %v240, %v236
  %v285 = vpack.c.b16 %v241, %v237
  %v286 = vpack.c.b16 %v242, %v238
  %v287 = vpack.c.b16 %v243, %v239
  %v288 = vpack.c.b16 %v248, %v244
  %v289 = vpack.c.b16 %v249, %v245
  %v290 = vpack.c.b16 %v250, %v246
  %v291 = vpack.c.b16 %v251, %v247
  %v292 = vpack.c.b16 %v256, %v252
  %v293 = vpack.c.b16 %v257, %v253
  %v294 = vpack.c.b16 %v258, %v254
  %v295 = vpack.c.b16 %v259, %v255
  %v296 = vpack.c.b16 %v264, %v260
  %v297 = vpack.c.b16 %v265, %v261
  %v298 = vpack.c.b16 %v266, %v262
  %v299 = vpack.c.b16 %v267, %v263
  %332 = vmatprep.subr.bf16.mxu0 %v297
  %333 = vmatpush1.bf16.msra.mxu0 %v296
  %334 = vmatprep.subr.bf16.mxu0 %v293
  %335 = vmatpush1.bf16.msra.mxu0 %v292
  %336 = vmatprep.subr.bf16.mxu0 %v289
  %337 = vmatpush1.bf16.msra.mxu0 %v288
  %338 = vmatprep.subr.bf16.mxu0 %v285
  %339 = vmatpush1.bf16.msra.mxu0 %v284
  %340 = vmatprep.subr.bf16.mxu0 %v281
  %341 = vmatpush1.bf16.msra.mxu0 %v280
  %342 = vmatprep.subr.bf16.mxu0 %v277
  %343 = vmatpush1.bf16.msra.mxu0 %v276
  %344 = vmatprep.subr.bf16.mxu0 %v273
  %345 = vmatpush1.bf16.msra.mxu0 %v272
  %346 = vmatprep.subr.bf16.mxu0 %v269
  %347 = vmatpush1.bf16.msra.mxu0 %v268
  %348 = vmatprep.subr.bf16.mxu0 0
  %349 = vmatpush2.bf16.msra.mxu0 0
  %350 = vmatprep.subr.bf16.mxu0 0
  %351 = vmatpush2.bf16.msra.mxu0 0
  %352 = vmatprep.subr.bf16.mxu0 0
  %353 = vmatpush2.bf16.msra.mxu0 0
  %354 = vmatprep.subr.bf16.mxu0 0
  %355 = vmatpush2.bf16.msra.mxu0 0
  %356 = vmatprep.subr.bf16.mxu0 0
  %357 = vmatpush2.bf16.msra.mxu0 0
  %358 = vmatprep.subr.bf16.mxu0 0
  %359 = vmatpush2.bf16.msra.mxu0 0
  %360 = vmatprep.subr.bf16.mxu0 0
  %361 = vmatpush2.bf16.msra.mxu0 0
  %362 = vmatprep.subr.bf16.mxu0 0
  %363 = vmatpush2.bf16.msra.mxu0 0
  %364 = vmatprep.mubr.bf16.mxu0 0
  %365 = vmatmul.mubr.bf16.gmra.mxu0 %v115
  %v366 = vpop.f32.mrf.mxu0
  %v367 = vadd.f32 %v155, %v366
  %v368 = vpop.f32.mrf.mxu0
  %v369 = vadd.f32 %v159, %v368
  %v370 = vpop.f32.mrf.mxu0
  %v371 = vadd.f32 %v155, %v370
  %v372 = vpop.f32.mrf.mxu0
  %v373 = vadd.f32 %v159, %v372
  %374 = vmatprep.mubr.bf16.mxu0 0
  %375 = vmatmul.mubr.bf16.gmra.mxu0 %v116
  %v376 = vpop.f32.mrf.mxu0
  %v377 = vadd.f32 %v155, %v376
  %v378 = vpop.f32.mrf.mxu0
  %v379 = vadd.f32 %v159, %v378
  %v380 = vpop.f32.mrf.mxu0
  %v381 = vadd.f32 %v155, %v380
  %v382 = vpop.f32.mrf.mxu0
  %v383 = vadd.f32 %v159, %v382
  %384 = vmatprep.mubr.bf16.mxu0 0
  %385 = vmatmul.mubr.bf16.gmra.mxu0 %v117
  %v386 = vpop.f32.mrf.mxu0
  %v387 = vadd.f32 %v155, %v386
  %v388 = vpop.f32.mrf.mxu0
  %v389 = vadd.f32 %v159, %v388
  %v390 = vpop.f32.mrf.mxu0
  %v391 = vpop.f32.mrf.mxu0
  %392 = vdwg.mxu0
  %393 = vmatprep.subr.bf16.mxu0 %v299
  %394 = vmatpush1.bf16.msra.mxu0 %v298
  %395 = vmatprep.subr.bf16.mxu0 %v295
  %396 = vmatpush1.bf16.msra.mxu0 %v294
  %397 = vmatprep.subr.bf16.mxu0 %v291
  %398 = vmatpush1.bf16.msra.mxu0 %v290
  %399 = vmatprep.subr.bf16.mxu0 %v287
  %400 = vmatpush1.bf16.msra.mxu0 %v286
  %401 = vmatprep.subr.bf16.mxu0 %v283
  %402 = vmatpush1.bf16.msra.mxu0 %v282
  %403 = vmatprep.subr.bf16.mxu0 %v279
  %404 = vmatpush1.bf16.msra.mxu0 %v278
  %405 = vmatprep.subr.bf16.mxu0 %v275
  %406 = vmatpush1.bf16.msra.mxu0 %v274
  %407 = vmatprep.subr.bf16.mxu0 %v271
  %408 = vmatpush1.bf16.msra.mxu0 %v270
  %409 = vmatprep.subr.bf16.mxu0 0
  %410 = vmatpush2.bf16.msra.mxu0 0
  %411 = vmatprep.subr.bf16.mxu0 0
  %412 = vmatpush2.bf16.msra.mxu0 0
  %413 = vmatprep.subr.bf16.mxu0 0
  %414 = vmatpush2.bf16.msra.mxu0 0
  %415 = vmatprep.subr.bf16.mxu0 0
  %416 = vmatpush2.bf16.msra.mxu0 0
  %417 = vmatprep.subr.bf16.mxu0 0
  %418 = vmatpush2.bf16.msra.mxu0 0
  %419 = vmatprep.subr.bf16.mxu0 0
  %420 = vmatpush2.bf16.msra.mxu0 0
  %421 = vmatprep.subr.bf16.mxu0 0
  %422 = vmatpush2.bf16.msra.mxu0 0
  %423 = vmatprep.subr.bf16.mxu0 0
  %424 = vmatpush2.bf16.msra.mxu0 0
  %425 = vmatprep.mubr.bf16.mxu0 0
  %426 = vmatmul.mubr.bf16.gmra.mxu0 %v115
  %v427 = vpop.f32.mrf.mxu0
  %v428 = vadd.f32 %v163, %v427
  %v429 = vpop.f32.mrf.mxu0
  %v430 = vadd.f32 %v167, %v429
  %v431 = vpop.f32.mrf.mxu0
  %v432 = vadd.f32 %v163, %v431
  %v433 = vpop.f32.mrf.mxu0
  %v434 = vadd.f32 %v167, %v433
  %435 = vmatprep.mubr.bf16.mxu0 0
  %436 = vmatmul.mubr.bf16.gmra.mxu0 %v116
  %v437 = vpop.f32.mrf.mxu0
  %v438 = vadd.f32 %v163, %v437
  %v439 = vpop.f32.mrf.mxu0
  %v440 = vadd.f32 %v167, %v439
  %v441 = vpop.f32.mrf.mxu0
  %v442 = vadd.f32 %v163, %v441
  %v443 = vpop.f32.mrf.mxu0
  %v444 = vadd.f32 %v167, %v443
  %445 = vmatprep.mubr.bf16.mxu0 0
  %446 = vmatmul.mubr.bf16.gmra.mxu0 %v117
  %v447 = vpop.f32.mrf.mxu0
  %v448 = vadd.f32 %v163, %v447
  %v449 = vpop.f32.mrf.mxu0
  %v450 = vadd.f32 %v167, %v449
  %v451 = vpop.f32.mrf.mxu0
  %v452 = vpop.f32.mrf.mxu0
  %453 = vdwg.mxu0
  %v454 = vmul.f32 %v367, 0.5
  %v455 = vmul.f32 %v369, 0.5
  %v456 = vmul.f32 %v428, 0.5
  %v457 = vmul.f32 %v430, 0.5
  %v458 = vmul.f32 %v371, 0.5
  %v459 = vmul.f32 %v373, 0.5
  %v460 = vmul.f32 %v432, 0.5
  %v461 = vmul.f32 %v434, 0.5
  %v462 = vmul.f32 %v377, 0.5
  %v463 = vmul.f32 %v379, 0.5
  %v464 = vmul.f32 %v438, 0.5
  %v465 = vmul.f32 %v440, 0.5
  %v466 = vmul.f32 %v381, 0.5
  %v467 = vmul.f32 %v383, 0.5
  %v468 = vmul.f32 %v442, 0.5
  %v469 = vmul.f32 %v444, 0.5
  %v470 = vmul.f32 %v387, 0.5
  %v471 = vmul.f32 %v389, 0.5
  %v472 = vmul.f32 %v448, 0.5
  %v473 = vmul.f32 %v450, 0.5
  %v474 = vmul.f32 %v367, 0.70710677
  %v475 = vmul.f32 %v369, 0.70710677
  %v476 = vmul.f32 %v428, 0.70710677
  %v477 = vmul.f32 %v430, 0.70710677
  %v478 = vmul.f32 %v371, 0.70710677
  %v479 = vmul.f32 %v373, 0.70710677
  %v480 = vmul.f32 %v432, 0.70710677
  %v481 = vmul.f32 %v434, 0.70710677
  %v482 = vmul.f32 %v377, 0.70710677
  %v483 = vmul.f32 %v379, 0.70710677
  %v484 = vmul.f32 %v438, 0.70710677
  %v485 = vmul.f32 %v440, 0.70710677
  %v486 = vmul.f32 %v381, 0.70710677
  %v487 = vmul.f32 %v383, 0.70710677
  %v488 = vmul.f32 %v442, 0.70710677
  %v489 = vmul.f32 %v444, 0.70710677
  %v490 = vmul.f32 %v387, 0.70710677
  %v491 = vmul.f32 %v389, 0.70710677
  %v492 = vmul.f32 %v448, 0.70710677
  %v493 = vmul.f32 %v450, 0.70710677
  %v494 = vand.u32 2147483647, %v474
  %v495 = vand.u32 2147483647, %v475
  %v496 = vand.u32 2147483647, %v476
  %v497 = vand.u32 2147483647, %v477
  %v498 = vand.u32 2147483647, %v478
  %v499 = vand.u32 2147483647, %v479
  %v500 = vand.u32 2147483647, %v480
  %v501 = vand.u32 2147483647, %v481
  %v502 = vand.u32 2147483647, %v482
  %v503 = vand.u32 2147483647, %v483
  %v504 = vand.u32 2147483647, %v484
  %v505 = vand.u32 2147483647, %v485
  %v506 = vand.u32 2147483647, %v486
  %v507 = vand.u32 2147483647, %v487
  %v508 = vand.u32 2147483647, %v488
  %v509 = vand.u32 2147483647, %v489
  %v510 = vand.u32 2147483647, %v490
  %v511 = vand.u32 2147483647, %v491
  %v512 = vand.u32 2147483647, %v492
  %v513 = vand.u32 2147483647, %v493
  %v514 = vmul.f32 %v494, 0.3275911
  %v515 = vmul.f32 %v495, 0.3275911
  %v516 = vmul.f32 %v496, 0.3275911
  %v517 = vmul.f32 %v497, 0.3275911
  %v518 = vmul.f32 %v498, 0.3275911
  %v519 = vmul.f32 %v499, 0.3275911
  %v520 = vmul.f32 %v500, 0.3275911
  %v521 = vmul.f32 %v501, 0.3275911
  %v522 = vmul.f32 %v502, 0.3275911
  %v523 = vmul.f32 %v503, 0.3275911
  %v524 = vmul.f32 %v504, 0.3275911
  %v525 = vmul.f32 %v505, 0.3275911
  %v526 = vmul.f32 %v506, 0.3275911
  %v527 = vmul.f32 %v507, 0.3275911
  %v528 = vmul.f32 %v508, 0.3275911
  %v529 = vmul.f32 %v509, 0.3275911
  %v530 = vmul.f32 %v510, 0.3275911
  %v531 = vmul.f32 %v511, 0.3275911
  %v532 = vmul.f32 %v512, 0.3275911
  %v533 = vmul.f32 %v513, 0.3275911
  %v534 = vadd.f32 %v514, 1.0
  %v535 = vadd.f32 %v515, 1.0
  %v536 = vadd.f32 %v516, 1.0
  %v537 = vadd.f32 %v517, 1.0
  %v538 = vadd.f32 %v518, 1.0
  %v539 = vadd.f32 %v519, 1.0
  %v540 = vadd.f32 %v520, 1.0
  %v541 = vadd.f32 %v521, 1.0
  %v542 = vadd.f32 %v522, 1.0
  %v543 = vadd.f32 %v523, 1.0
  %v544 = vadd.f32 %v524, 1.0
  %v545 = vadd.f32 %v525, 1.0
  %v546 = vadd.f32 %v526, 1.0
  %v547 = vadd.f32 %v527, 1.0
  %v548 = vadd.f32 %v528, 1.0
  %v549 = vadd.f32 %v529, 1.0
  %v550 = vadd.f32 %v530, 1.0
  %v551 = vadd.f32 %v531, 1.0
  %v552 = vadd.f32 %v532, 1.0
  %v553 = vadd.f32 %v533, 1.0
  %v554 = vrcp.pop %v534
  %v555 = vrcp.pop %v535
  %v556 = vrcp.pop %v536
  %v557 = vrcp.pop %v537
  %v558 = vrcp.pop %v538
  %v559 = vrcp.pop %v539
  %v560 = vrcp.pop %v540
  %v561 = vrcp.pop %v541
  %v562 = vrcp.pop %v542
  %v563 = vrcp.pop %v543
  %v564 = vrcp.pop %v544
  %v565 = vrcp.pop %v545
  %v566 = vrcp.pop %v546
  %v567 = vrcp.pop %v547
  %v568 = vrcp.pop %v548
  %v569 = vrcp.pop %v549
  %v570 = vrcp.pop %v550
  %v571 = vrcp.pop %v551
  %v572 = vrcp.pop %v552
  %v573 = vrcp.pop %v553
  %v574 = vmul.f32 %v554, 1.0614054
  %v575 = vmul.f32 %v555, 1.0614054
  %v576 = vmul.f32 %v556, 1.0614054
  %v577 = vmul.f32 %v557, 1.0614054
  %v578 = vmul.f32 %v558, 1.0614054
  %v579 = vmul.f32 %v559, 1.0614054
  %v580 = vmul.f32 %v560, 1.0614054
  %v581 = vmul.f32 %v561, 1.0614054
  %v582 = vmul.f32 %v562, 1.0614054
  %v583 = vmul.f32 %v563, 1.0614054
  %v584 = vmul.f32 %v564, 1.0614054
  %v585 = vmul.f32 %v565, 1.0614054
  %v586 = vmul.f32 %v566, 1.0614054
  %v587 = vmul.f32 %v567, 1.0614054
  %v588 = vmul.f32 %v568, 1.0614054
  %v589 = vmul.f32 %v569, 1.0614054
  %v590 = vmul.f32 %v570, 1.0614054
  %v591 = vmul.f32 %v571, 1.0614054
  %v592 = vmul.f32 %v572, 1.0614054
  %v593 = vmul.f32 %v573, 1.0614054
  %v594 = vadd.f32 %v574, -1.4531521
  %v595 = vadd.f32 %v575, -1.4531521
  %v596 = vadd.f32 %v576, -1.4531521
  %v597 = vadd.f32 %v577, -1.4531521
  %v598 = vadd.f32 %v578, -1.4531521
  %v599 = vadd.f32 %v579, -1.4531521
  %v600 = vadd.f32 %v580, -1.4531521
  %v601 = vadd.f32 %v581, -1.4531521
  %v602 = vadd.f32 %v582, -1.4531521
  %v603 = vadd.f32 %v583, -1.4531521
  %v604 = vadd.f32 %v584, -1.4531521
  %v605 = vadd.f32 %v585, -1.4531521
  %v606 = vadd.f32 %v586, -1.4531521
  %v607 = vadd.f32 %v587, -1.4531521
  %v608 = vadd.f32 %v588, -1.4531521
  %v609 = vadd.f32 %v589, -1.4531521
  %v610 = vadd.f32 %v590, -1.4531521
  %v611 = vadd.f32 %v591, -1.4531521
  %v612 = vadd.f32 %v592, -1.4531521
  %v613 = vadd.f32 %v593, -1.4531521
  %v614 = vmul.f32 %v594, %v554
  %v615 = vmul.f32 %v595, %v555
  %v616 = vmul.f32 %v596, %v556
  %v617 = vmul.f32 %v597, %v557
  %v618 = vmul.f32 %v598, %v558
  %v619 = vmul.f32 %v599, %v559
  %v620 = vmul.f32 %v600, %v560
  %v621 = vmul.f32 %v601, %v561
  %v622 = vmul.f32 %v602, %v562
  %v623 = vmul.f32 %v603, %v563
  %v624 = vmul.f32 %v604, %v564
  %v625 = vmul.f32 %v605, %v565
  %v626 = vmul.f32 %v606, %v566
  %v627 = vmul.f32 %v607, %v567
  %v628 = vmul.f32 %v608, %v568
  %v629 = vmul.f32 %v609, %v569
  %v630 = vmul.f32 %v610, %v570
  %v631 = vmul.f32 %v611, %v571
  %v632 = vmul.f32 %v612, %v572
  %v633 = vmul.f32 %v613, %v573
  %v634 = vadd.f32 %v614, 1.4214138
  %v635 = vadd.f32 %v615, 1.4214138
  %v636 = vadd.f32 %v616, 1.4214138
  %v637 = vadd.f32 %v617, 1.4214138
  %v638 = vadd.f32 %v618, 1.4214138
  %v639 = vadd.f32 %v619, 1.4214138
  %v640 = vadd.f32 %v620, 1.4214138
  %v641 = vadd.f32 %v621, 1.4214138
  %v642 = vadd.f32 %v622, 1.4214138
  %v643 = vadd.f32 %v623, 1.4214138
  %v644 = vadd.f32 %v624, 1.4214138
  %v645 = vadd.f32 %v625, 1.4214138
  %v646 = vadd.f32 %v626, 1.4214138
  %v647 = vadd.f32 %v627, 1.4214138
  %v648 = vadd.f32 %v628, 1.4214138
  %v649 = vadd.f32 %v629, 1.4214138
  %v650 = vadd.f32 %v630, 1.4214138
  %v651 = vadd.f32 %v631, 1.4214138
  %v652 = vadd.f32 %v632, 1.4214138
  %v653 = vadd.f32 %v633, 1.4214138
  %v654 = vmul.f32 %v634, %v554
  %v655 = vmul.f32 %v635, %v555
  %v656 = vmul.f32 %v636, %v556
  %v657 = vmul.f32 %v637, %v557
  %v658 = vmul.f32 %v638, %v558
  %v659 = vmul.f32 %v639, %v559
  %v660 = vmul.f32 %v640, %v560
  %v661 = vmul.f32 %v641, %v561
  %v662 = vmul.f32 %v642, %v562
  %v663 = vmul.f32 %v643, %v563
  %v664 = vmul.f32 %v644, %v564
  %v665 = vmul.f32 %v645, %v565
  %v666 = vmul.f32 %v646, %v566
  %v667 = vmul.f32 %v647, %v567
  %v668 = vmul.f32 %v648, %v568
  %v669 = vmul.f32 %v649, %v569
  %v670 = vmul.f32 %v650, %v570
  %v671 = vmul.f32 %v651, %v571
  %v672 = vmul.f32 %v652, %v572
  %v673 = vmul.f32 %v653, %v573
  %v674 = vadd.f32 %v654, -0.28449672
  %v675 = vadd.f32 %v655, -0.28449672
  %v676 = vadd.f32 %v656, -0.28449672
  %v677 = vadd.f32 %v657, -0.28449672
  %v678 = vadd.f32 %v658, -0.28449672
  %v679 = vadd.f32 %v659, -0.28449672
  %v680 = vadd.f32 %v660, -0.28449672
  %v681 = vadd.f32 %v661, -0.28449672
  %v682 = vadd.f32 %v662, -0.28449672
  %v683 = vadd.f32 %v663, -0.28449672
  %v684 = vadd.f32 %v664, -0.28449672
  %v685 = vadd.f32 %v665, -0.28449672
  %v686 = vadd.f32 %v666, -0.28449672
  %v687 = vadd.f32 %v667, -0.28449672
  %v688 = vadd.f32 %v668, -0.28449672
  %v689 = vadd.f32 %v669, -0.28449672
  %v690 = vadd.f32 %v670, -0.28449672
  %v691 = vadd.f32 %v671, -0.28449672
  %v692 = vadd.f32 %v672, -0.28449672
  %v693 = vadd.f32 %v673, -0.28449672
  %v694 = vmul.f32 %v674, %v554
  %v695 = vmul.f32 %v675, %v555
  %v696 = vmul.f32 %v676, %v556
  %v697 = vmul.f32 %v677, %v557
  %v698 = vmul.f32 %v678, %v558
  %v699 = vmul.f32 %v679, %v559
  %v700 = vmul.f32 %v680, %v560
  %v701 = vmul.f32 %v681, %v561
  %v702 = vmul.f32 %v682, %v562
  %v703 = vmul.f32 %v683, %v563
  %v704 = vmul.f32 %v684, %v564
  %v705 = vmul.f32 %v685, %v565
  %v706 = vmul.f32 %v686, %v566
  %v707 = vmul.f32 %v687, %v567
  %v708 = vmul.f32 %v688, %v568
  %v709 = vmul.f32 %v689, %v569
  %v710 = vmul.f32 %v690, %v570
  %v711 = vmul.f32 %v691, %v571
  %v712 = vmul.f32 %v692, %v572
  %v713 = vmul.f32 %v693, %v573
  %v714 = vadd.f32 %v694, 0.2548296
  %v715 = vadd.f32 %v695, 0.2548296
  %v716 = vadd.f32 %v696, 0.2548296
  %v717 = vadd.f32 %v697, 0.2548296
  %v718 = vadd.f32 %v698, 0.2548296
  %v719 = vadd.f32 %v699, 0.2548296
  %v720 = vadd.f32 %v700, 0.2548296
  %v721 = vadd.f32 %v701, 0.2548296
  %v722 = vadd.f32 %v702, 0.2548296
  %v723 = vadd.f32 %v703, 0.2548296
  %v724 = vadd.f32 %v704, 0.2548296
  %v725 = vadd.f32 %v705, 0.2548296
  %v726 = vadd.f32 %v706, 0.2548296
  %v727 = vadd.f32 %v707, 0.2548296
  %v728 = vadd.f32 %v708, 0.2548296
  %v729 = vadd.f32 %v709, 0.2548296
  %v730 = vadd.f32 %v710, 0.2548296
  %v731 = vadd.f32 %v711, 0.2548296
  %v732 = vadd.f32 %v712, 0.2548296
  %v733 = vadd.f32 %v713, 0.2548296
  %v734 = vmul.f32 %v714, %v554
  %v735 = vmul.f32 %v715, %v555
  %v736 = vmul.f32 %v716, %v556
  %v737 = vmul.f32 %v717, %v557
  %v738 = vmul.f32 %v718, %v558
  %v739 = vmul.f32 %v719, %v559
  %v740 = vmul.f32 %v720, %v560
  %v741 = vmul.f32 %v721, %v561
  %v742 = vmul.f32 %v722, %v562
  %v743 = vmul.f32 %v723, %v563
  %v744 = vmul.f32 %v724, %v564
  %v745 = vmul.f32 %v725, %v565
  %v746 = vmul.f32 %v726, %v566
  %v747 = vmul.f32 %v727, %v567
  %v748 = vmul.f32 %v728, %v568
  %v749 = vmul.f32 %v729, %v569
  %v750 = vmul.f32 %v730, %v570
  %v751 = vmul.f32 %v731, %v571
  %v752 = vmul.f32 %v732, %v572
  %v753 = vmul.f32 %v733, %v573
  %v754 = vsub.f32 0.0, %v494
  %v755 = vsub.f32 0.0, %v495
  %v756 = vsub.f32 0.0, %v496
  %v757 = vsub.f32 0.0, %v497
  %v758 = vsub.f32 0.0, %v498
  %v759 = vsub.f32 0.0, %v499
  %v760 = vsub.f32 0.0, %v500
  %v761 = vsub.f32 0.0, %v501
  %v762 = vsub.f32 0.0, %v502
  %v763 = vsub.f32 0.0, %v503
  %v764 = vsub.f32 0.0, %v504
  %v765 = vsub.f32 0.0, %v505
  %v766 = vsub.f32 0.0, %v506
  %v767 = vsub.f32 0.0, %v507
  %v768 = vsub.f32 0.0, %v508
  %v769 = vsub.f32 0.0, %v509
  %v770 = vsub.f32 0.0, %v510
  %v771 = vsub.f32 0.0, %v511
  %v772 = vsub.f32 0.0, %v512
  %v773 = vsub.f32 0.0, %v513
  %v774 = vmul.f32 %v754, %v494
  %v775 = vmul.f32 %v755, %v495
  %v776 = vmul.f32 %v756, %v496
  %v777 = vmul.f32 %v757, %v497
  %v778 = vmul.f32 %v758, %v498
  %v779 = vmul.f32 %v759, %v499
  %v780 = vmul.f32 %v760, %v500
  %v781 = vmul.f32 %v761, %v501
  %v782 = vmul.f32 %v762, %v502
  %v783 = vmul.f32 %v763, %v503
  %v784 = vmul.f32 %v764, %v504
  %v785 = vmul.f32 %v765, %v505
  %v786 = vmul.f32 %v766, %v506
  %v787 = vmul.f32 %v767, %v507
  %v788 = vmul.f32 %v768, %v508
  %v789 = vmul.f32 %v769, %v509
  %v790 = vmul.f32 %v770, %v510
  %v791 = vmul.f32 %v771, %v511
  %v792 = vmul.f32 %v772, %v512
  %v793 = vmul.f32 %v773, %v513
  %v794 = vmul.f32 %v774, 1.442695
  %v795 = vpow.pop %v794
  %v796 = vmul.f32 %v775, 1.442695
  %v797 = vpow.pop %v796
  %v798 = vmul.f32 %v776, 1.442695
  %v799 = vpow.pop %v798
  %v800 = vmul.f32 %v777, 1.442695
  %v801 = vpow.pop %v800
  %v802 = vmul.f32 %v778, 1.442695
  %v803 = vpow.pop %v802
  %v804 = vmul.f32 %v779, 1.442695
  %v805 = vpow.pop %v804
  %v806 = vmul.f32 %v780, 1.442695
  %v807 = vpow.pop %v806
  %v808 = vmul.f32 %v781, 1.442695
  %v809 = vpow.pop %v808
  %v810 = vmul.f32 %v782, 1.442695
  %v811 = vpow.pop %v810
  %v812 = vmul.f32 %v783, 1.442695
  %v813 = vpow.pop %v812
  %v814 = vmul.f32 %v784, 1.442695
  %v815 = vpow.pop %v814
  %v816 = vmul.f32 %v785, 1.442695
  %v817 = vpow.pop %v816
  %v818 = vmul.f32 %v786, 1.442695
  %v819 = vpow.pop %v818
  %v820 = vmul.f32 %v787, 1.442695
  %v821 = vpow.pop %v820
  %v822 = vmul.f32 %v788, 1.442695
  %v823 = vpow.pop %v822
  %v824 = vmul.f32 %v789, 1.442695
  %v825 = vpow.pop %v824
  %v826 = vmul.f32 %v790, 1.442695
  %v827 = vpow.pop %v826
  %v828 = vmul.f32 %v791, 1.442695
  %v829 = vpow.pop %v828
  %v830 = vmul.f32 %v792, 1.442695
  %v831 = vpow.pop %v830
  %v832 = vmul.f32 %v793, 1.442695
  %v833 = vpow.pop %v832
  %v834 = vmul.f32 %v734, %v795
  %v835 = vmul.f32 %v735, %v797
  %v836 = vmul.f32 %v736, %v799
  %v837 = vmul.f32 %v737, %v801
  %v838 = vmul.f32 %v738, %v803
  %v839 = vmul.f32 %v739, %v805
  %v840 = vmul.f32 %v740, %v807
  %v841 = vmul.f32 %v741, %v809
  %v842 = vmul.f32 %v742, %v811
  %v843 = vmul.f32 %v743, %v813
  %v844 = vmul.f32 %v744, %v815
  %v845 = vmul.f32 %v745, %v817
  %v846 = vmul.f32 %v746, %v819
  %v847 = vmul.f32 %v747, %v821
  %v848 = vmul.f32 %v748, %v823
  %v849 = vmul.f32 %v749, %v825
  %v850 = vmul.f32 %v750, %v827
  %v851 = vmul.f32 %v751, %v829
  %v852 = vmul.f32 %v752, %v831
  %v853 = vmul.f32 %v753, %v833
  %v854 = vsub.f32 1.0, %v834
  %v855 = vsub.f32 1.0, %v835
  %v856 = vsub.f32 1.0, %v836
  %v857 = vsub.f32 1.0, %v837
  %v858 = vsub.f32 1.0, %v838
  %v859 = vsub.f32 1.0, %v839
  %v860 = vsub.f32 1.0, %v840
  %v861 = vsub.f32 1.0, %v841
  %v862 = vsub.f32 1.0, %v842
  %v863 = vsub.f32 1.0, %v843
  %v864 = vsub.f32 1.0, %v844
  %v865 = vsub.f32 1.0, %v845
  %v866 = vsub.f32 1.0, %v846
  %v867 = vsub.f32 1.0, %v847
  %v868 = vsub.f32 1.0, %v848
  %v869 = vsub.f32 1.0, %v849
  %v870 = vsub.f32 1.0, %v850
  %v871 = vsub.f32 1.0, %v851
  %v872 = vsub.f32 1.0, %v852
  %v873 = vsub.f32 1.0, %v853
  %vm874 = vcmp.ge.f32.partialorder %v474, 0.0
  %vm875 = vcmp.ge.f32.partialorder %v475, 0.0
  %vm876 = vcmp.ge.f32.partialorder %v476, 0.0
  %vm877 = vcmp.ge.f32.partialorder %v477, 0.0
  %vm878 = vcmp.ge.f32.partialorder %v478, 0.0
  %vm879 = vcmp.ge.f32.partialorder %v479, 0.0
  %vm880 = vcmp.ge.f32.partialorder %v480, 0.0
  %vm881 = vcmp.ge.f32.partialorder %v481, 0.0
  %vm882 = vcmp.ge.f32.partialorder %v482, 0.0
  %vm883 = vcmp.ge.f32.partialorder %v483, 0.0
  %vm884 = vcmp.ge.f32.partialorder %v484, 0.0
  %vm885 = vcmp.ge.f32.partialorder %v485, 0.0
  %vm886 = vcmp.ge.f32.partialorder %v486, 0.0
  %vm887 = vcmp.ge.f32.partialorder %v487, 0.0
  %vm888 = vcmp.ge.f32.partialorder %v488, 0.0
  %vm889 = vcmp.ge.f32.partialorder %v489, 0.0
  %vm890 = vcmp.ge.f32.partialorder %v490, 0.0
  %vm891 = vcmp.ge.f32.partialorder %v491, 0.0
  %vm892 = vcmp.ge.f32.partialorder %v492, 0.0
  %vm893 = vcmp.ge.f32.partialorder %v493, 0.0
  %v894 = vsub.f32 0.0, %v854
  %v895 = vsub.f32 0.0, %v855
  %v896 = vsub.f32 0.0, %v856
  %v897 = vsub.f32 0.0, %v857
  %v898 = vsub.f32 0.0, %v858
  %v899 = vsub.f32 0.0, %v859
  %v900 = vsub.f32 0.0, %v860
  %v901 = vsub.f32 0.0, %v861
  %v902 = vsub.f32 0.0, %v862
  %v903 = vsub.f32 0.0, %v863
  %v904 = vsub.f32 0.0, %v864
  %v905 = vsub.f32 0.0, %v865
  %v906 = vsub.f32 0.0, %v866
  %v907 = vsub.f32 0.0, %v867
  %v908 = vsub.f32 0.0, %v868
  %v909 = vsub.f32 0.0, %v869
  %v910 = vsub.f32 0.0, %v870
  %v911 = vsub.f32 0.0, %v871
  %v912 = vsub.f32 0.0, %v872
  %v913 = vsub.f32 0.0, %v873
  %v914 = vsel %vm874, %v854, %v894
  %v915 = vsel %vm875, %v855, %v895
  %v916 = vsel %vm876, %v856, %v896
  %v917 = vsel %vm877, %v857, %v897
  %v918 = vsel %vm878, %v858, %v898
  %v919 = vsel %vm879, %v859, %v899
  %v920 = vsel %vm880, %v860, %v900
  %v921 = vsel %vm881, %v861, %v901
  %v922 = vsel %vm882, %v862, %v902
  %v923 = vsel %vm883, %v863, %v903
  %v924 = vsel %vm884, %v864, %v904
  %v925 = vsel %vm885, %v865, %v905
  %v926 = vsel %vm886, %v866, %v906
  %v927 = vsel %vm887, %v867, %v907
  %v928 = vsel %vm888, %v868, %v908
  %v929 = vsel %vm889, %v869, %v909
  %v930 = vsel %vm890, %v870, %v910
  %v931 = vsel %vm891, %v871, %v911
  %v932 = vsel %vm892, %v872, %v912
  %v933 = vsel %vm893, %v873, %v913
  %v934 = vadd.f32 %v914, 1.0
  %v935 = vadd.f32 %v915, 1.0
  %v936 = vadd.f32 %v916, 1.0
  %v937 = vadd.f32 %v917, 1.0
  %v938 = vadd.f32 %v918, 1.0
  %v939 = vadd.f32 %v919, 1.0
  %v940 = vadd.f32 %v920, 1.0
  %v941 = vadd.f32 %v921, 1.0
  %v942 = vadd.f32 %v922, 1.0
  %v943 = vadd.f32 %v923, 1.0
  %v944 = vadd.f32 %v924, 1.0
  %v945 = vadd.f32 %v925, 1.0
  %v946 = vadd.f32 %v926, 1.0
  %v947 = vadd.f32 %v927, 1.0
  %v948 = vadd.f32 %v928, 1.0
  %v949 = vadd.f32 %v929, 1.0
  %v950 = vadd.f32 %v930, 1.0
  %v951 = vadd.f32 %v931, 1.0
  %v952 = vadd.f32 %v932, 1.0
  %v953 = vadd.f32 %v933, 1.0
  %v954 = vmul.f32 %v454, %v934
  %v955 = vmul.f32 %v455, %v935
  %v956 = vmul.f32 %v456, %v936
  %v957 = vmul.f32 %v457, %v937
  %v958 = vmul.f32 %v458, %v938
  %v959 = vmul.f32 %v459, %v939
  %v960 = vmul.f32 %v460, %v940
  %v961 = vmul.f32 %v461, %v941
  %v962 = vmul.f32 %v462, %v942
  %v963 = vmul.f32 %v463, %v943
  %v964 = vmul.f32 %v464, %v944
  %v965 = vmul.f32 %v465, %v945
  %v966 = vmul.f32 %v466, %v946
  %v967 = vmul.f32 %v467, %v947
  %v968 = vmul.f32 %v468, %v948
  %v969 = vmul.f32 %v469, %v949
  %v970 = vmul.f32 %v470, %v950
  %v971 = vmul.f32 %v471, %v951
  %v972 = vmul.f32 %v472, %v952
  %v973 = vmul.f32 %v473, %v953
  %v974 = vpack.c.bf16 %v958, %v954
  %v975 = vpack.c.bf16 %v959, %v955
  %v976 = vpack.c.bf16 %v960, %v956
  %v977 = vpack.c.bf16 %v961, %v957
  %v978 = vpack.c.bf16 %v966, %v962
  %v979 = vpack.c.bf16 %v967, %v963
  %v980 = vpack.c.bf16 %v968, %v964
  %v981 = vpack.c.bf16 %v969, %v965
  %v982 = vpack.c.bf16 %v970, %v970
  %v983 = vpack.c.bf16 %v971, %v971
  %v984 = vpack.c.bf16 %v972, %v972
  %v985 = vpack.c.bf16 %v973, %v973
  %v986 = vld [vmem:[%s5] sm:$0xf]
  %v987 = vld [vmem:[%s5 + $0x4] sm:$0xf]
  %v988 = vld [vmem:[%s5 + $0x8] sm:$0xf]
  %v989 = vld [vmem:[%s5 + $0xc] sm:$0xf]
  %v990 = vld [vmem:[%s5 + $0x10] sm:$0xf]
  %v991 = vld [vmem:[%s5 + $0x14] sm:$0xf]
  %v992 = vld [vmem:[%s5 + $0x18] sm:$0xf]
  %v993 = vld [vmem:[%s5 + $0x1c] sm:$0xf]
  %v994 = vld [vmem:[%s5 + $0x20] sm:$0xf]
  %v995 = vld [vmem:[%s5 + $0x24] sm:$0xf]
  %v996 = vld [vmem:[%s5 + $0x28] sm:$0xf]
  %v997 = vld [vmem:[%s5 + $0x2c] sm:$0xf]
  %v998 = vld [vmem:[%s5 + $0x30] sm:$0xf]
  %v999 = vld [vmem:[%s5 + $0x34] sm:$0xf]
  %v1000 = vld [vmem:[%s5 + $0x38] sm:$0xf]
  %v1001 = vld [vmem:[%s5 + $0x3c] sm:$0xf]
  %v1002 = vld [vmem:[%s5 + $0x40] sm:$0xf]
  %v1003 = vld [vmem:[%s5 + $0x44] sm:$0xf]
  %v1004 = vld [vmem:[%s5 + $0x48] sm:$0xf]
  %v1005 = vld [vmem:[%s5 + $0x4c] sm:$0xf]
  %v1006 = vld [vmem:[%s5 + $0x50] sm:$0xf]
  %v1007 = vld [vmem:[%s5 + $0x54] sm:$0xf]
  %v1008 = vld [vmem:[%s5 + $0x58] sm:$0xf]
  %v1009 = vld [vmem:[%s5 + $0x5c] sm:$0xf]
  %v1010 = vld [vmem:[%s5 + $0x60] sm:$0xf]
  %v1011 = vld [vmem:[%s5 + $0x64] sm:$0xf]
  %v1012 = vld [vmem:[%s5 + $0x68] sm:$0xf]
  %v1013 = vld [vmem:[%s5 + $0x6c] sm:$0xf]
  %v1014 = vld [vmem:[%s5 + $0x70] sm:$0xf]
  %v1015 = vld [vmem:[%s5 + $0x74] sm:$0xf]
  %v1016 = vld [vmem:[%s5 + $0x78] sm:$0xf]
  %v1017 = vld [vmem:[%s5 + $0x7c] sm:$0xf]
  %v1018 = vld [vmem:[%s5 + $0x80] sm:$0xf]
  %v1019 = vld [vmem:[%s5 + $0x84] sm:$0xf]
  %v1020 = vld [vmem:[%s5 + $0x88] sm:$0xf]
  %v1021 = vld [vmem:[%s5 + $0x8c] sm:$0xf]
  %v1022 = vld [vmem:[%s5 + $0x90] sm:$0xf]
  %v1023 = vld [vmem:[%s5 + $0x94] sm:$0xf]
  %v1024 = vld [vmem:[%s5 + $0x98] sm:$0xf]
  %v1025 = vld [vmem:[%s5 + $0x9c] sm:$0xf]
  %v1026 = vld [vmem:[%s5 + $0xa0] sm:$0xf]
  %v1027 = vld [vmem:[%s5 + $0xa4] sm:$0xf]
  %v1028 = vld [vmem:[%s5 + $0xa8] sm:$0xf]
  %v1029 = vld [vmem:[%s5 + $0xac] sm:$0xf]
  %v1030 = vld [vmem:[%s5 + $0xb0] sm:$0xf]
  %v1031 = vld [vmem:[%s5 + $0xb4] sm:$0xf]
  %v1032 = vld [vmem:[%s5 + $0xb8] sm:$0xf]
  %v1033 = vld [vmem:[%s5 + $0xbc] sm:$0xf]
  %v1034 = vld [vmem:[%s5 + $0xc0] sm:$0xf]
  %v1035 = vld [vmem:[%s5 + $0xc4] sm:$0xf]
  %v1036 = vld [vmem:[%s5 + $0xc8] sm:$0xf]
  %v1037 = vld [vmem:[%s5 + $0xcc] sm:$0xf]
  %v1038 = vld [vmem:[%s5 + $0xd0] sm:$0xf]
  %v1039 = vld [vmem:[%s5 + $0xd4] sm:$0xf]
  %v1040 = vld [vmem:[%s5 + $0xd8] sm:$0xf]
  %v1041 = vld [vmem:[%s5 + $0xdc] sm:$0xf]
  %v1042 = vld [vmem:[%s5 + $0xe0] sm:$0xf]
  %v1043 = vld [vmem:[%s5 + $0xe4] sm:$0xf]
  %v1044 = vld [vmem:[%s5 + $0xe8] sm:$0xf]
  %v1045 = vld [vmem:[%s5 + $0xec] sm:$0xf]
  %v1046 = vld [vmem:[%s5 + $0xf0] sm:$0xf]
  %v1047 = vld [vmem:[%s5 + $0xf4] sm:$0xf]
  %v1048 = vld [vmem:[%s5 + $0xf8] sm:$0xf]
  %v1049 = vld [vmem:[%s5 + $0xfc] sm:$0xf]
  %v1050 = vld [vmem:[%s6] sm:$0x1]
  %v1052 = vlaneseq
  %v1053 = vshrl.u32 %v1052, 7
  %v1054 = vsub.s32 0, %v1053
  %v1055 = vrot.slane %v1050, %v1054
  %v1121 = vunpack.c.l.b16 %v986
  %v1122 = vunpack.c.l.b16 %v987
  %v1123 = vunpack.c.l.b16 %v988
  %v1124 = vunpack.c.l.b16 %v989
  %v1125 = vunpack.c.l.b16 %v990
  %v1126 = vunpack.c.l.b16 %v991
  %v1127 = vunpack.c.l.b16 %v992
  %v1128 = vunpack.c.l.b16 %v993
  %v1129 = vunpack.c.l.b16 %v994
  %v1130 = vunpack.c.l.b16 %v995
  %v1131 = vunpack.c.l.b16 %v996
  %v1132 = vunpack.c.l.b16 %v997
  %v1133 = vunpack.c.l.b16 %v998
  %v1134 = vunpack.c.l.b16 %v999
  %v1135 = vunpack.c.l.b16 %v1000
  %v1136 = vunpack.c.l.b16 %v1001
  %v1137 = vunpack.c.l.b16 %v1002
  %v1138 = vunpack.c.l.b16 %v1003
  %v1139 = vunpack.c.l.b16 %v1004
  %v1140 = vunpack.c.l.b16 %v1005
  %v1141 = vunpack.c.l.b16 %v1006
  %v1142 = vunpack.c.l.b16 %v1007
  %v1143 = vunpack.c.l.b16 %v1008
  %v1144 = vunpack.c.l.b16 %v1009
  %v1145 = vunpack.c.l.b16 %v1010
  %v1146 = vunpack.c.l.b16 %v1011
  %v1147 = vunpack.c.l.b16 %v1012
  %v1148 = vunpack.c.l.b16 %v1013
  %v1149 = vunpack.c.l.b16 %v1014
  %v1150 = vunpack.c.l.b16 %v1015
  %v1151 = vunpack.c.l.b16 %v1016
  %v1152 = vunpack.c.l.b16 %v1017
  %v1153 = vunpack.c.l.b16 %v1018
  %v1154 = vunpack.c.l.b16 %v1019
  %v1155 = vunpack.c.l.b16 %v1020
  %v1156 = vunpack.c.l.b16 %v1021
  %v1157 = vunpack.c.l.b16 %v1022
  %v1158 = vunpack.c.l.b16 %v1023
  %v1159 = vunpack.c.l.b16 %v1024
  %v1160 = vunpack.c.l.b16 %v1025
  %v1161 = vunpack.c.l.b16 %v1026
  %v1162 = vunpack.c.l.b16 %v1027
  %v1163 = vunpack.c.l.b16 %v1028
  %v1164 = vunpack.c.l.b16 %v1029
  %v1165 = vunpack.c.l.b16 %v1030
  %v1166 = vunpack.c.l.b16 %v1031
  %v1167 = vunpack.c.l.b16 %v1032
  %v1168 = vunpack.c.l.b16 %v1033
  %v1169 = vunpack.c.l.b16 %v1034
  %v1170 = vunpack.c.l.b16 %v1035
  %v1171 = vunpack.c.l.b16 %v1036
  %v1172 = vunpack.c.l.b16 %v1037
  %v1173 = vunpack.c.l.b16 %v1038
  %v1174 = vunpack.c.l.b16 %v1039
  %v1175 = vunpack.c.l.b16 %v1040
  %v1176 = vunpack.c.l.b16 %v1041
  %v1177 = vunpack.c.l.b16 %v1042
  %v1178 = vunpack.c.l.b16 %v1043
  %v1179 = vunpack.c.l.b16 %v1044
  %v1180 = vunpack.c.l.b16 %v1045
  %v1181 = vunpack.c.l.b16 %v1046
  %v1182 = vunpack.c.l.b16 %v1047
  %v1183 = vunpack.c.l.b16 %v1048
  %v1184 = vunpack.c.l.b16 %v1049
  %v1185 = vpack.c.b16 %v1122, %v1121
  %v1186 = vpack.c.b16 %v1124, %v1123
  %v1187 = vpack.c.b16 %v1126, %v1125
  %v1188 = vpack.c.b16 %v1128, %v1127
  %v1189 = vpack.c.b16 %v1130, %v1129
  %v1190 = vpack.c.b16 %v1132, %v1131
  %v1191 = vpack.c.b16 %v1134, %v1133
  %v1192 = vpack.c.b16 %v1136, %v1135
  %v1193 = vpack.c.b16 %v1138, %v1137
  %v1194 = vpack.c.b16 %v1140, %v1139
  %v1195 = vpack.c.b16 %v1142, %v1141
  %v1196 = vpack.c.b16 %v1144, %v1143
  %v1197 = vpack.c.b16 %v1146, %v1145
  %v1198 = vpack.c.b16 %v1148, %v1147
  %v1199 = vpack.c.b16 %v1150, %v1149
  %v1200 = vpack.c.b16 %v1152, %v1151
  %v1201 = vpack.c.b16 %v1154, %v1153
  %v1202 = vpack.c.b16 %v1156, %v1155
  %v1203 = vpack.c.b16 %v1158, %v1157
  %v1204 = vpack.c.b16 %v1160, %v1159
  %v1205 = vpack.c.b16 %v1162, %v1161
  %v1206 = vpack.c.b16 %v1164, %v1163
  %v1207 = vpack.c.b16 %v1166, %v1165
  %v1208 = vpack.c.b16 %v1168, %v1167
  %v1209 = vpack.c.b16 %v1170, %v1169
  %v1210 = vpack.c.b16 %v1172, %v1171
  %v1211 = vpack.c.b16 %v1174, %v1173
  %v1212 = vpack.c.b16 %v1176, %v1175
  %v1213 = vpack.c.b16 %v1178, %v1177
  %v1214 = vpack.c.b16 %v1180, %v1179
  %v1215 = vpack.c.b16 %v1182, %v1181
  %v1216 = vpack.c.b16 %v1184, %v1183
  %1249 = vmatprep.subr.bf16.mxu0 0
  %1250 = vmatpush1.bf16.msra.mxu0 %v1192
  %1251 = vmatprep.subr.bf16.mxu0 0
  %1252 = vmatpush1.bf16.msra.mxu0 %v1191
  %1253 = vmatprep.subr.bf16.mxu0 0
  %1254 = vmatpush1.bf16.msra.mxu0 %v1190
  %1255 = vmatprep.subr.bf16.mxu0 0
  %1256 = vmatpush1.bf16.msra.mxu0 %v1189
  %1257 = vmatprep.subr.bf16.mxu0 0
  %1258 = vmatpush1.bf16.msra.mxu0 %v1188
  %1259 = vmatprep.subr.bf16.mxu0 0
  %1260 = vmatpush1.bf16.msra.mxu0 %v1187
  %1261 = vmatprep.subr.bf16.mxu0 0
  %1262 = vmatpush1.bf16.msra.mxu0 %v1186
  %1263 = vmatprep.subr.bf16.mxu0 0
  %1264 = vmatpush1.bf16.msra.mxu0 %v1185
  %1265 = vmatprep.subr.bf16.mxu0 0
  %1266 = vmatpush2.bf16.msra.mxu0 %v1200
  %1267 = vmatprep.subr.bf16.mxu0 0
  %1268 = vmatpush2.bf16.msra.mxu0 %v1199
  %1269 = vmatprep.subr.bf16.mxu0 0
  %1270 = vmatpush2.bf16.msra.mxu0 %v1198
  %1271 = vmatprep.subr.bf16.mxu0 0
  %1272 = vmatpush2.bf16.msra.mxu0 %v1197
  %1273 = vmatprep.subr.bf16.mxu0 0
  %1274 = vmatpush2.bf16.msra.mxu0 %v1196
  %1275 = vmatprep.subr.bf16.mxu0 0
  %1276 = vmatpush2.bf16.msra.mxu0 %v1195
  %1277 = vmatprep.subr.bf16.mxu0 0
  %1278 = vmatpush2.bf16.msra.mxu0 %v1194
  %1279 = vmatprep.subr.bf16.mxu0 0
  %1280 = vmatpush2.bf16.msra.mxu0 %v1193
  %1281 = vmatprep.mubr.bf16.mxu0 %v975
  %1282 = vmatmul.mubr.bf16.gmra.mxu0 %v974
  %v1283 = vpop.f32.mrf.mxu0
  %v1284 = vadd.f32 %v1055, %v1283
  %v1285 = vpop.f32.mrf.mxu0
  %v1286 = vpop.f32.mrf.mxu0
  %v1287 = vadd.f32 %v1055, %v1286
  %v1288 = vpop.f32.mrf.mxu0
  %1289 = vmatprep.mubr.bf16.mxu0 %v979
  %1290 = vmatmul.mubr.bf16.gmra.mxu0 %v978
  %v1291 = vpop.f32.mrf.mxu0
  %v1292 = vadd.f32 %v1055, %v1291
  %v1293 = vpop.f32.mrf.mxu0
  %v1294 = vpop.f32.mrf.mxu0
  %v1295 = vadd.f32 %v1055, %v1294
  %v1296 = vpop.f32.mrf.mxu0
  %1297 = vmatprep.mubr.bf16.mxu0 %v983
  %1298 = vmatmul.mubr.bf16.gmra.mxu0 %v982
  %v1299 = vpop.f32.mrf.mxu0
  %v1300 = vadd.f32 %v1055, %v1299
  %v1301 = vpop.f32.mrf.mxu0
  %v1302 = vpop.f32.mrf.mxu0
  %v1303 = vpop.f32.mrf.mxu0
  %1304 = vdwg.mxu0
  %1305 = vmatprep.subr.bf16.mxu0 0
  %1306 = vmatpush1.bf16.msra.mxu0 %v1208
  %1307 = vmatprep.subr.bf16.mxu0 0
  %1308 = vmatpush1.bf16.msra.mxu0 %v1207
  %1309 = vmatprep.subr.bf16.mxu0 0
  %1310 = vmatpush1.bf16.msra.mxu0 %v1206
  %1311 = vmatprep.subr.bf16.mxu0 0
  %1312 = vmatpush1.bf16.msra.mxu0 %v1205
  %1313 = vmatprep.subr.bf16.mxu0 0
  %1314 = vmatpush1.bf16.msra.mxu0 %v1204
  %1315 = vmatprep.subr.bf16.mxu0 0
  %1316 = vmatpush1.bf16.msra.mxu0 %v1203
  %1317 = vmatprep.subr.bf16.mxu0 0
  %1318 = vmatpush1.bf16.msra.mxu0 %v1202
  %1319 = vmatprep.subr.bf16.mxu0 0
  %1320 = vmatpush1.bf16.msra.mxu0 %v1201
  %1321 = vmatprep.subr.bf16.mxu0 0
  %1322 = vmatpush2.bf16.msra.mxu0 %v1216
  %1323 = vmatprep.subr.bf16.mxu0 0
  %1324 = vmatpush2.bf16.msra.mxu0 %v1215
  %1325 = vmatprep.subr.bf16.mxu0 0
  %1326 = vmatpush2.bf16.msra.mxu0 %v1214
  %1327 = vmatprep.subr.bf16.mxu0 0
  %1328 = vmatpush2.bf16.msra.mxu0 %v1213
  %1329 = vmatprep.subr.bf16.mxu0 0
  %1330 = vmatpush2.bf16.msra.mxu0 %v1212
  %1331 = vmatprep.subr.bf16.mxu0 0
  %1332 = vmatpush2.bf16.msra.mxu0 %v1211
  %1333 = vmatprep.subr.bf16.mxu0 0
  %1334 = vmatpush2.bf16.msra.mxu0 %v1210
  %1335 = vmatprep.subr.bf16.mxu0 0
  %1336 = vmatpush2.bf16.msra.mxu0 %v1209
  %1337 = vmatprep.mubr.bf16.mxu0 %v977
  %1338 = vmatmul.mubr.bf16.gmra.mxu0 %v976
  %v1339 = vpop.f32.mrf.mxu0
  %v1340 = vadd.f32 %v1284, %v1339
  %v1341 = vpop.f32.mrf.mxu0
  %v1342 = vpop.f32.mrf.mxu0
  %v1343 = vadd.f32 %v1287, %v1342
  %v1344 = vpop.f32.mrf.mxu0
  %1345 = vmatprep.mubr.bf16.mxu0 %v981
  %1346 = vmatmul.mubr.bf16.gmra.mxu0 %v980
  %v1347 = vpop.f32.mrf.mxu0
  %v1348 = vadd.f32 %v1292, %v1347
  %v1349 = vpop.f32.mrf.mxu0
  %v1350 = vpop.f32.mrf.mxu0
  %v1351 = vadd.f32 %v1295, %v1350
  %v1352 = vpop.f32.mrf.mxu0
  %1353 = vmatprep.mubr.bf16.mxu0 %v985
  %1354 = vmatmul.mubr.bf16.gmra.mxu0 %v984
  %v1355 = vpop.f32.mrf.mxu0
  %v1356 = vadd.f32 %v1300, %v1355
  %v1357 = vpop.f32.mrf.mxu0
  %v1358 = vpop.f32.mrf.mxu0
  %v1359 = vpop.f32.mrf.mxu0
  %1360 = vdwg.mxu0
  %v1361 = vadd.f32 %v27, %v1340
  %v1362 = vadd.f32 %v28, %v1343
  %v1363 = vadd.f32 %v29, %v1348
  %v1364 = vadd.f32 %v30, %v1351
  %v1365 = vadd.f32 %v31, %v1356
  %1366 = vst [vmem:[%s7] sm:$0xff] %v1361
  %1367 = vst [vmem:[%s7 + $0x8] sm:$0xff] %v1362
  %1368 = vst [vmem:[%s7 + $0x10] sm:$0xff] %v1363
  %1369 = vst [vmem:[%s7 + $0x18] sm:$0xff] %v1364
  %1370 = vst [vmem:[%s7 + $0x20] sm:$0x3] %v1365
  // Predicated region
  $region30: #{vit_feature_extractor.11} parent=0 // pred_check
    _
  $region31: #{vit_feature_extractor.11} parent=0 // pred_check_branch
    %1372 = sbr.rel (0) target = $region33
  $region32: #{vit_feature_extractor.11} parent=0 // pred_region
    _
  $region33: #{vit_feature_extractor.11} parent=0 // pred_fallthru
    _
  // Predicated region
  $region34: #{vit_feature_extractor.11} parent=0 // pred_check
    _
  $region35: #{vit_feature_extractor.11} parent=0 // pred_check_branch
    %1374 = sbr.rel (0) target = $region37
  $region36: #{vit_feature_extractor.11} parent=0 // pred_region
    _
  $region37: #{vit_feature_extractor.11} parent=0 // pred_fallthru
    _

// kernel: vit_feature_extractor.15
$region0: #{vit_feature_extractor.15}
  #allocation0 [shape = 'u32[]', space=smem, size = 0x4, offset = 0x4, fixed_abs, tag = 'smem constant byte address 0x4 - core index']
  #allocation1 [shape = 'u32[144,128]{1,0:T(1,128)}', space=vmem, size = 0x12000, scoped, tag = 'internal scratch']
  %s0 = inlined_call_operand.vmem [shape: f32[34,128], index: 0, kind: input, shape index: {}]
  %s1 = inlined_call_operand.vmem [shape: f32[1,128], index: 1, kind: input, shape index: {}]
  %s2 = inlined_call_operand.vmem [shape: f32[1,128], index: 2, kind: input, shape index: {}]
  %s3 = inlined_call_operand.vmem [shape: f32[34,128], index: 3, kind: output, shape index: {}]
  %s4 = sld [smem:[#allocation0]]
  $region22: #{vit_feature_extractor.15} parent=0
    _
  %s6 = ssub.s32 1, %s4
  %s7 = scalar_select 0, %s6, %s4
  // Predicated region
  $region2: #{vit_feature_extractor.15} parent=0 // pred_check
    _
  $region3: #{vit_feature_extractor.15} parent=0 // pred_check_branch
    %9 = sbr.rel (0) target = $region5
  $region4: #{vit_feature_extractor.15} parent=0 // pred_region
    _
  $region5: #{vit_feature_extractor.15} parent=0 // pred_fallthru
    _
  // Predicated region
  $region6: #{vit_feature_extractor.15} parent=0 // pred_check
    _
  $region7: #{vit_feature_extractor.15} parent=0 // pred_check_branch
    %11 = sbr.rel (0) target = $region9
  $region8: #{vit_feature_extractor.15} parent=0 // pred_region
    _
  $region9: #{vit_feature_extractor.15} parent=0 // pred_fallthru
    _
  // Predicated region
  $region10: #{vit_feature_extractor.15} parent=0 // pred_check
    _
  $region11: #{vit_feature_extractor.15} parent=0 // pred_check_branch
    %13 = sbr.rel (0) target = $region13
  $region12: #{vit_feature_extractor.15} parent=0 // pred_region
    _
  $region13: #{vit_feature_extractor.15} parent=0 // pred_fallthru
    _
  %v14 = vld [vmem:[%s0] sm:$0xff]
  %v15 = vld [vmem:[%s0 + $0x8] sm:$0xff]
  %v16 = vld [vmem:[%s0 + $0x10] sm:$0xff]
  %v17 = vld [vmem:[%s0 + $0x18] sm:$0xff]
  %v18 = vld [vmem:[%s0 + $0x20] sm:$0x3]
  %v19 = vld [vmem:[%s1] sm:$0x1]
  %v20 = vld [vmem:[%s2] sm:$0x1]
  %21 = vadd.xlane.f32.xlu0 %v14
  %v22 = vpop.xlane.xlu0 %21
  %23 = vadd.xlane.f32.xlu0 %v15
  %v24 = vpop.xlane.xlu0 %23
  %25 = vadd.xlane.f32.xlu0 %v16
  %v26 = vpop.xlane.xlu0 %25
  %27 = vadd.xlane.f32.xlu0 %v17
  %v28 = vpop.xlane.xlu0 %27
  %vm29 = vcmask 1041408
  %v30 = vsel %vm29, %v18, 0.0
  %31 = vadd.xlane.f32.xlu0 %v30
  %v32 = vpop.xlane.xlu0 %31
  %v33 = vrcp.pop 128.0
  %v34 = vmul.f32 %v22, %v33
  %v35 = vmul.f32 %v24, %v33
  %v36 = vmul.f32 %v26, %v33
  %v37 = vmul.f32 %v28, %v33
  %v38 = vmul.f32 %v32, %v33
  %v39 = vsub.f32 %v14, %v34
  %v40 = vsub.f32 %v15, %v35
  %v41 = vsub.f32 %v16, %v36
  %v42 = vsub.f32 %v17, %v37
  %v43 = vsub.f32 %v18, %v38
  %v44 = vmul.f32 %v39, %v39
  %v45 = vmul.f32 %v40, %v40
  %v46 = vmul.f32 %v41, %v41
  %v47 = vmul.f32 %v42, %v42
  %v48 = vmul.f32 %v43, %v43
  %49 = vadd.xlane.f32.xlu0 %v44
  %v50 = vpop.xlane.xlu0 %49
  %51 = vadd.xlane.f32.xlu0 %v45
  %v52 = vpop.xlane.xlu0 %51
  %53 = vadd.xlane.f32.xlu0 %v46
  %v54 = vpop.xlane.xlu0 %53
  %55 = vadd.xlane.f32.xlu0 %v47
  %v56 = vpop.xlane.xlu0 %55
  %v57 = vsel %vm29, %v48, 0.0
  %58 = vadd.xlane.f32.xlu0 %v57
  %v59 = vpop.xlane.xlu0 %58
  %v60 = vmul.f32 %v50, %v33
  %v61 = vmul.f32 %v52, %v33
  %v62 = vmul.f32 %v54, %v33
  %v63 = vmul.f32 %v56, %v33
  %v64 = vmul.f32 %v59, %v33
  %v65 = vadd.f32 %v60, 1e-06
  %v66 = vadd.f32 %v61, 1e-06
  %v67 = vadd.f32 %v62, 1e-06
  %v68 = vadd.f32 %v63, 1e-06
  %v69 = vadd.f32 %v64, 1e-06
  %v70 = vrsqrt.pop %v65
  %v71 = vrsqrt.pop %v66
  %v72 = vrsqrt.pop %v67
  %v73 = vrsqrt.pop %v68
  %v74 = vrsqrt.pop %v69
  %v75 = vmul.f32 %v39, %v70
  %v76 = vmul.f32 %v40, %v71
  %v77 = vmul.f32 %v41, %v72
  %v78 = vmul.f32 %v42, %v73
  %v79 = vmul.f32 %v43, %v74
  %v81 = vlaneseq
  %v82 = vshrl.u32 %v81, 7
  %v83 = vsub.s32 0, %v82
  %v84 = vrot.slane %v19, %v83
  %v86 = vmul.f32 %v75, %v84
  %v87 = vmul.f32 %v76, %v84
  %v88 = vmul.f32 %v77, %v84
  %v89 = vmul.f32 %v78, %v84
  %v90 = vmul.f32 %v79, %v84
  %v92 = vlaneseq
  %v93 = vshrl.u32 %v92, 7
  %v94 = vsub.s32 0, %v93
  %v95 = vrot.slane %v20, %v94
  %v97 = vadd.f32 %v86, %v95
  %v98 = vadd.f32 %v87, %v95
  %v99 = vadd.f32 %v88, %v95
  %v100 = vadd.f32 %v89, %v95
  %v101 = vadd.f32 %v90, %v95
  %102 = vst [vmem:[%s3] sm:$0xff] %v97
  %103 = vst [vmem:[%s3 + $0x8] sm:$0xff] %v98
  %104 = vst [vmem:[%s3 + $0x10] sm:$0xff] %v99
  %105 = vst [vmem:[%s3 + $0x18] sm:$0xff] %v100
  %106 = vst [vmem:[%s3 + $0x20] sm:$0x3] %v101
  // Predicated region
  $region14: #{vit_feature_extractor.15} parent=0 // pred_check
    _
  $region15: #{vit_feature_extractor.15} parent=0 // pred_check_branch
    %108 = sbr.rel (0) target = $region17
  $region16: #{vit_feature_extractor.15} parent=0 // pred_region
    _
  $region17: #{vit_feature_extractor.15} parent=0 // pred_fallthru
    _
  // Predicated region
  $region18: #{vit_feature_extractor.15} parent=0 // pred_check
    _
  $region19: #{vit_feature_extractor.15} parent=0 // pred_check_branch
    %110 = sbr.rel (0) target = $region21
  $region20: #{vit_feature_extractor.15} parent=0 // pred_region
    _
  $region21: #{vit_feature_extractor.15} parent=0 // pred_fallthru
    _

</llo_original>
